<compile_context>
chip_gen: v7x
topology: tpu7x:2x2x1
jax: 0.10.0
libtpu: 0.0.40
codegen_flags: <defaults>
</compile_context>

<pallas_src>
import functools

import jax
import jax.numpy as jnp
from jax.experimental import pallas as pl
from jax.experimental.pallas import tpu as pltpu

EPS = 1e-5  # nn.GroupNorm default eps


# ----------------------------------------------------------------------------
# Fused kernel: one batch image per grid step, everything VMEM-resident.
# ----------------------------------------------------------------------------
def _upsample_res_kernel(x_ref, g1_ref, b1_ref, w1_ref, tb1_ref,
                         g2_ref, b2_ref, w2_ref, bc2_ref, o_ref,
                         *, H, W, groups):
    # x_ref: (1, C, H*W) channel-major input image
    # g*/b*/bc2: (1, C) ; w*_ref: (9*C, C) im2col-reshaped HWIO weights
    # tb1_ref: (1, 1, C) per-image (conv1 bias + time embedding)
    # o_ref: (1, C, Hu*Wu) channel-major (== NCHW) lane-dense output
    C = x_ref.shape[1]
    Hu, Wu = 2 * H, 2 * W
    f32 = jnp.float32

    # ---- GroupNorm(num_groups=groups) + SiLU, fp32, two-pass variance -------
    def gn_silu(v, gamma, beta):                       # v: (N, C)
        N = v.shape[0]
        cg = C // groups
        inv = 1.0 / float(N * cg)

        def grp_avg(vec):                              # (1, C) channel sums -> per-channel group mean
            if cg == 1:                                # each channel is its own group
                return vec * inv
            g = jnp.sum(vec.reshape(groups, cg), axis=1, keepdims=True) * inv
            return jnp.broadcast_to(g, (groups, cg)).reshape(1, C)

        mean_c = grp_avg(jnp.sum(v, axis=0, keepdims=True))
        xc = v - mean_c
        var_c = grp_avg(jnp.sum(xc * xc, axis=0, keepdims=True))
        scale = jax.lax.rsqrt(var_c + EPS) * gamma     # combine on (1, C) first
        y = xc * scale + beta                          # single (N, C) mul + add
        return y * jax.nn.sigmoid(y)                   # SiLU (sigmoid on EUP)

    # ---- nearest x2 upsample on VMEM values ---------------------------------
    def up2(v, h_, w_):                                # (h_*w_, C) -> (2h_, 2w_, C)
        v = v.reshape(h_, w_, C)
        v = jnp.broadcast_to(v[:, :, None, :], (h_, w_, 2, C)).reshape(h_, 2 * w_, C)
        v = jnp.broadcast_to(v[:, None, :, :], (h_, 2, 2 * w_, C)).reshape(2 * h_, 2 * w_, C)
        return v

    # ---- 3x3 "same" conv as a single im2col matmul --------------------------
    def conv3x3(img, w_flat, bias):                    # img: (Hu, Wu, C); w_flat: (9*C, Cout)
        zc = jnp.zeros((Hu, 1, C), f32)
        p = jnp.concatenate([zc, img, zc], axis=1)                 # (Hu, Wu+2, C)
        zr = jnp.zeros((1, Wu + 2, C), f32)
        p = jnp.concatenate([zr, p, zr], axis=0)                   # (Hu+2, Wu+2, C)
        cols = [p[dy:dy + Hu, dx:dx + Wu, :].reshape(Hu * Wu, C)
                for dy in range(3) for dx in range(3)]
        patches = jnp.concatenate(cols, axis=-1)                   # (Hu*Wu, 9*C)
        return jnp.dot(patches, w_flat, preferred_element_type=f32) + bias

    # ---- forward pass --------------------------------------------------------
    x_rows = jnp.transpose(x_ref[...].reshape(C, H * W)).astype(f32)   # (H*W, C)

    h = gn_silu(x_rows, g1_ref[...], b1_ref[...])                      # norm1 + act1
    hu = up2(h, H, W)                                                  # h_upd (nearest x2)
    xu = up2(x_rows, H, W).reshape(Hu * Wu, C)                         # x_upd (residual branch)

    h = conv3x3(hu, w1_ref[...], tb1_ref[...].reshape(1, C))           # conv1 + (bias + time emb)
    h = gn_silu(h, g2_ref[...], b2_ref[...])                           # norm2 + act2
    # TODO(synk): Dropout -> identity (eval mode).
    out = conv3x3(h.reshape(Hu, Wu, C), w2_ref[...], bc2_ref[...]) + xu  # conv2 + shortcut

    # lane-dense channel-major store: (1, C, Hu*Wu) maps straight onto NCHW.
    o_ref[...] = jnp.transpose(out).reshape(1, C, Hu * Wu)


# ----------------------------------------------------------------------------
# Wrapper: NCHW in -> NCHW out, single pallas_call, no HBM glue ops.
# ----------------------------------------------------------------------------
@functools.partial(jax.jit, static_argnames=("groups",))
def upsample_res_forward(x_nchw, t, params, groups):
    B, C, H, W = x_nchw.shape
    Hu, Wu = 2 * H, 2 * W

    # time embedding Linear(SiLU(t)) hoisted out of the spatial kernel,
    # fused with the conv1 bias into one per-image additive term.
    ts = t.astype(jnp.float32)
    temb = jnp.dot(ts * jax.nn.sigmoid(ts), params["wt"]) + params["bt"]      # (B, C)
    temb_bias = (temb + params["bc1"]).astype(jnp.float32).reshape(B, 1, C)   # (B, 1, C)

    x_flat = x_nchw.reshape(B, C, H * W).astype(jnp.float32)   # free reshape, stays channel-major
    w1r = params["w1"].astype(jnp.float32).reshape(9 * C, C)   # HWIO (3,3,Cin,Cout) -> (9*Cin,Cout)
    w2r = params["w2"].astype(jnp.float32).reshape(9 * C, C)
    scal = lambda v: v.reshape(1, C).astype(jnp.float32)

    kernel = functools.partial(_upsample_res_kernel, H=H, W=W, groups=groups)
    out_flat = pl.pallas_call(
        kernel,
        out_shape=jax.ShapeDtypeStruct((B, C, Hu * Wu), jnp.float32),
        grid_spec=pltpu.PrefetchScalarGridSpec(
            num_scalar_prefetch=0,
            grid=(B,),
            in_specs=[
                pl.BlockSpec((1, C, H * W), lambda b: (b, 0, 0)),     # x (channel-major)
                pl.BlockSpec((1, C), lambda b: (0, 0)),               # gamma1
                pl.BlockSpec((1, C), lambda b: (0, 0)),               # beta1
                pl.BlockSpec((9 * C, C), lambda b: (0, 0)),           # w1 (im2col)
                pl.BlockSpec((1, 1, C), lambda b: (b, 0, 0)),         # conv1 bias + time emb
                pl.BlockSpec((1, C), lambda b: (0, 0)),               # gamma2
                pl.BlockSpec((1, C), lambda b: (0, 0)),               # beta2
                pl.BlockSpec((9 * C, C), lambda b: (0, 0)),           # w2 (im2col)
                pl.BlockSpec((1, C), lambda b: (0, 0)),               # conv2 bias
            ],
            out_specs=pl.BlockSpec((1, C, Hu * Wu), lambda b: (b, 0, 0)),
        ),
        compiler_params=pltpu.CompilerParams(dimension_semantics=("parallel",)),
    )(x_flat, scal(params["g1"]), scal(params["b1"]), w1r, temb_bias,
      scal(params["g2"]), scal(params["b2"]), w2r, scal(params["bc2"]))
    return out_flat.reshape(B, C, Hu, Wu)


# ----------------------------------------------------------------------------
# Pure-JAX reference for validation
# ----------------------------------------------------------------------------
def _gn_ref(x, gamma, beta, groups):
    B, H, W, C = x.shape
    cg = C // groups
    xg = x.reshape(B, H, W, groups, cg)
    mean = jnp.mean(xg, axis=(1, 2, 4), keepdims=True)
    var = jnp.mean((xg - mean) ** 2, axis=(1, 2, 4), keepdims=True)
    xn = ((xg - mean) / jnp.sqrt(var + EPS)).reshape(B, H, W, C)
    return xn * gamma + beta


def _silu(x):
    return x * jax.nn.sigmoid(x)


def _nearest_up2(x_nhwc):
    return jnp.repeat(jnp.repeat(x_nhwc, 2, axis=1), 2, axis=2)


def _conv3x3_ref(x, w, b):
    y = jax.lax.conv_general_dilated(x, w, (1, 1), ((1, 1), (1, 1)),
                                     dimension_numbers=("NHWC", "HWIO", "NHWC"))
    return y + b


def ref_forward(x_nchw, t, p, groups):
    x = jnp.transpose(x_nchw, (0, 2, 3, 1)).astype(jnp.float32)
    h = _silu(_gn_ref(x, p["g1"], p["b1"], groups))
    h = _nearest_up2(h)
    xu = _nearest_up2(x)
    h = _conv3x3_ref(h, p["w1"], p["bc1"])
    temb = jnp.dot(_silu(t), p["wt"]) + p["bt"]
    h = h + temb[:, None, None, :]
    h = _silu(_gn_ref(h, p["g2"], p["b2"], groups))
    h = _conv3x3_ref(h, p["w2"], p["bc2"])
    return jnp.transpose(h + xu, (0, 3, 1, 2))


if __name__ == "__main__":
    B, C, H, W = 2, 32, 8, 8      # n_channels = 32 so GroupNorm32 (32 groups) is valid
    T = 16                        # time_channels
    GROUPS = 32

    key = jax.random.PRNGKey(0)
    ks = jax.random.split(key, 12)

    conv_scale = 1.0 / (9 * C) ** 0.5
    lin_scale = 1.0 / T ** 0.5
    params = {
        "g1": 1.0 + 0.1 * jax.random.normal(ks[0], (C,), jnp.float32),
        "b1": 0.1 * jax.random.normal(ks[1], (C,), jnp.float32),
        "w1": conv_scale * jax.random.normal(ks[2], (3, 3, C, C), jnp.float32),   # HWIO
        "bc1": 0.1 * jax.random.normal(ks[3], (C,), jnp.float32),
        "g2": 1.0 + 0.1 * jax.random.normal(ks[4], (C,), jnp.float32),
        "b2": 0.1 * jax.random.normal(ks[5], (C,), jnp.float32),
        "w2": conv_scale * jax.random.normal(ks[6], (3, 3, C, C), jnp.float32),
        "bc2": 0.1 * jax.random.normal(ks[7], (C,), jnp.float32),
        "wt": lin_scale * jax.random.normal(ks[8], (T, C), jnp.float32),          # in x out
        "bt": 0.1 * jax.random.normal(ks[9], (C,), jnp.float32),
    }

    x = jax.random.normal(ks[10], (B, C, H, W), jnp.float32)
    t = jax.random.normal(ks[11], (B, T), jnp.float32)

    out = upsample_res_forward(x, t, params, GROUPS)
    out = jax.block_until_ready(out)
    assert out.shape == (B, C, 2 * H, 2 * W), out.shape

    ref = jax.block_until_ready(ref_forward(x, t, params, GROUPS))
    err = float(jnp.max(jnp.abs(out - ref)))
    assert err < 2e-3, f"max abs error {err}"

    print("KERNEL_OK")
</pallas_src>

<mosaic_0001>
module attributes {stable_mosaic.version = 11 : i64} {
  func.func @_upsample_res_kernel(%arg0: i32, %arg1: memref<1x32x64xf32, #tpu.memory_space<vmem>>, %arg2: memref<1x32xf32, #tpu.memory_space<vmem>>, %arg3: memref<1x32xf32, #tpu.memory_space<vmem>>, %arg4: memref<288x32xf32, #tpu.memory_space<vmem>>, %arg5: memref<1x1x32xf32, #tpu.memory_space<vmem>>, %arg6: memref<1x32xf32, #tpu.memory_space<vmem>>, %arg7: memref<1x32xf32, #tpu.memory_space<vmem>>, %arg8: memref<288x32xf32, #tpu.memory_space<vmem>>, %arg9: memref<1x32xf32, #tpu.memory_space<vmem>>, %arg10: memref<1x32x256xf32, #tpu.memory_space<vmem>>) attributes {dimension_semantics = [#tpu.dimension_semantics<parallel>], iteration_bounds = array<i64: 2>, scalar_prefetch = 0 : i64, scratch_operands = 0 : i64, tpu.core_type = #tpu.core_type<tc>, window_params = [{transform_indices = @transform_0, window_bounds = array<i64: 1, 32, 64>}, {pipeline_mode = #tpu.pipeline_mode<synchronous>, transform_indices = @transform_1, window_bounds = array<i64: 1, 32>}, {pipeline_mode = #tpu.pipeline_mode<synchronous>, transform_indices = @transform_2, window_bounds = array<i64: 1, 32>}, {pipeline_mode = #tpu.pipeline_mode<synchronous>, transform_indices = @transform_3, window_bounds = array<i64: 288, 32>}, {transform_indices = @transform_4, window_bounds = array<i64: 1, 1, 32>}, {pipeline_mode = #tpu.pipeline_mode<synchronous>, transform_indices = @transform_5, window_bounds = array<i64: 1, 32>}, {pipeline_mode = #tpu.pipeline_mode<synchronous>, transform_indices = @transform_6, window_bounds = array<i64: 1, 32>}, {pipeline_mode = #tpu.pipeline_mode<synchronous>, transform_indices = @transform_7, window_bounds = array<i64: 288, 32>}, {pipeline_mode = #tpu.pipeline_mode<synchronous>, transform_indices = @transform_8, window_bounds = array<i64: 1, 32>}, {transform_indices = @transform_9, window_bounds = array<i64: 1, 32, 256>}]} {
    %c0 = arith.constant 0 : index
    %c0_0 = arith.constant 0 : index
    %c0_1 = arith.constant 0 : index
    %0 = vector.load %arg1[%c0, %c0_0, %c0_1] : memref<1x32x64xf32, #tpu.memory_space<vmem>>, vector<1x32x64xf32>
    %1 = vector.shape_cast %0 : vector<1x32x64xf32> to vector<32x64xf32>
    %2 = tpu.transpose %1, [1, 0] : vector<32x64xf32> -> vector<64x32xf32>
    %c0_2 = arith.constant 0 : index
    %c0_3 = arith.constant 0 : index
    %3 = vector.load %arg2[%c0_2, %c0_3] : memref<1x32xf32, #tpu.memory_space<vmem>>, vector<1x32xf32>
    %c0_4 = arith.constant 0 : index
    %c0_5 = arith.constant 0 : index
    %4 = vector.load %arg3[%c0_4, %c0_5] : memref<1x32xf32, #tpu.memory_space<vmem>>, vector<1x32xf32>
    %cst = arith.constant dense<0.000000e+00> : vector<32xf32>
    %5 = vector.multi_reduction <add>, %2, %cst [0] : vector<64x32xf32> to vector<32xf32>
    %6 = vector.shape_cast %5 : vector<32xf32> to vector<1x32xf32>
    %cst_6 = arith.constant 1.562500e-02 : f32
    %7 = vector.broadcast %cst_6 : f32 to vector<1x32xf32>
    %8 = arith.mulf %6, %7 : vector<1x32xf32>
    %9 = vector.broadcast %8 : vector<1x32xf32> to vector<64x32xf32>
    %10 = arith.subf %2, %9 : vector<64x32xf32>
    %11 = arith.mulf %10, %10 : vector<64x32xf32>
    %cst_7 = arith.constant dense<0.000000e+00> : vector<32xf32>
    %12 = vector.multi_reduction <add>, %11, %cst_7 [0] : vector<64x32xf32> to vector<32xf32>
    %13 = vector.shape_cast %12 : vector<32xf32> to vector<1x32xf32>
    %cst_8 = arith.constant 1.562500e-02 : f32
    %14 = vector.broadcast %cst_8 : f32 to vector<1x32xf32>
    %15 = arith.mulf %13, %14 : vector<1x32xf32>
    %cst_9 = arith.constant 9.99999974E-6 : f32
    %16 = vector.broadcast %cst_9 : f32 to vector<1x32xf32>
    %17 = arith.addf %15, %16 : vector<1x32xf32>
    %18 = math.rsqrt %17 : vector<1x32xf32>
    %19 = arith.mulf %18, %3 : vector<1x32xf32>
    %20 = vector.broadcast %19 : vector<1x32xf32> to vector<64x32xf32>
    %21 = arith.mulf %10, %20 : vector<64x32xf32>
    %22 = vector.broadcast %4 : vector<1x32xf32> to vector<64x32xf32>
    %23 = arith.addf %21, %22 : vector<64x32xf32>
    %24 = arith.negf %23 : vector<64x32xf32>
    %25 = math.exp %24 : vector<64x32xf32>
    %cst_10 = arith.constant 1.000000e+00 : f32
    %26 = vector.broadcast %cst_10 : f32 to vector<64x32xf32>
    %27 = arith.addf %26, %25 : vector<64x32xf32>
    %28 = arith.divf %26, %27 : vector<64x32xf32>
    %29 = arith.mulf %23, %28 : vector<64x32xf32>
    %30 = vector.shape_cast %29 : vector<64x32xf32> to vector<8x8x32xf32>
    %31 = vector.shape_cast %30 : vector<8x8x32xf32> to vector<8x8x1x32xf32>
    %32 = vector.shape_cast %31 : vector<8x8x1x32xf32> to vector<8x8x1x32xf32>
    %33 = vector.broadcast %32 : vector<8x8x1x32xf32> to vector<8x8x2x32xf32>
    %34 = vector.shape_cast %33 : vector<8x8x2x32xf32> to vector<8x16x32xf32>
    %35 = vector.shape_cast %34 : vector<8x16x32xf32> to vector<8x1x16x32xf32>
    %36 = vector.shape_cast %35 : vector<8x1x16x32xf32> to vector<8x1x16x32xf32>
    %37 = vector.broadcast %36 : vector<8x1x16x32xf32> to vector<8x2x16x32xf32>
    %38 = vector.shape_cast %37 : vector<8x2x16x32xf32> to vector<16x16x32xf32>
    %39 = vector.shape_cast %2 : vector<64x32xf32> to vector<8x8x32xf32>
    %40 = vector.shape_cast %39 : vector<8x8x32xf32> to vector<8x8x1x32xf32>
    %41 = vector.shape_cast %40 : vector<8x8x1x32xf32> to vector<8x8x1x32xf32>
    %42 = vector.broadcast %41 : vector<8x8x1x32xf32> to vector<8x8x2x32xf32>
    %43 = vector.shape_cast %42 : vector<8x8x2x32xf32> to vector<8x16x32xf32>
    %44 = vector.shape_cast %43 : vector<8x16x32xf32> to vector<8x1x16x32xf32>
    %45 = vector.shape_cast %44 : vector<8x1x16x32xf32> to vector<8x1x16x32xf32>
    %46 = vector.broadcast %45 : vector<8x1x16x32xf32> to vector<8x2x16x32xf32>
    %47 = vector.shape_cast %46 : vector<8x2x16x32xf32> to vector<16x16x32xf32>
    %48 = vector.shape_cast %47 : vector<16x16x32xf32> to vector<256x32xf32>
    %c0_11 = arith.constant 0 : index
    %c0_12 = arith.constant 0 : index
    %49 = vector.load %arg4[%c0_11, %c0_12] : memref<288x32xf32, #tpu.memory_space<vmem>>, vector<288x32xf32>
    %c0_13 = arith.constant 0 : index
    %c0_14 = arith.constant 0 : index
    %c0_15 = arith.constant 0 : index
    %50 = vector.load %arg5[%c0_13, %c0_14, %c0_15] : memref<1x1x32xf32, #tpu.memory_space<vmem>>, vector<1x1x32xf32>
    %51 = vector.shape_cast %50 : vector<1x1x32xf32> to vector<1x32xf32>
    %cst_16 = arith.constant 0.000000e+00 : f32
    %52 = vector.broadcast %cst_16 : f32 to vector<16x1x32xf32>
    %53 = tpu.concatenate %52, %38, %52 in 1 : vector<16x1x32xf32>, vector<16x16x32xf32>, vector<16x1x32xf32> -> vector<16x18x32xf32>
    %cst_17 = arith.constant 0.000000e+00 : f32
    %54 = vector.broadcast %cst_17 : f32 to vector<1x18x32xf32>
    %55 = tpu.concatenate %54, %53, %54 in 0 : vector<1x18x32xf32>, vector<16x18x32xf32>, vector<1x18x32xf32> -> vector<18x18x32xf32>
    %56 = vector.extract_strided_slice %55 {offsets = [0, 0, 0], sizes = [16, 16, 32], strides = [1, 1, 1]} : vector<18x18x32xf32> to vector<16x16x32xf32>
    %57 = vector.shape_cast %56 : vector<16x16x32xf32> to vector<256x32xf32>
    %58 = vector.extract_strided_slice %55 {offsets = [0, 1, 0], sizes = [16, 16, 32], strides = [1, 1, 1]} : vector<18x18x32xf32> to vector<16x16x32xf32>
    %59 = vector.shape_cast %58 : vector<16x16x32xf32> to vector<256x32xf32>
    %60 = vector.extract_strided_slice %55 {offsets = [0, 2, 0], sizes = [16, 16, 32], strides = [1, 1, 1]} : vector<18x18x32xf32> to vector<16x16x32xf32>
    %61 = vector.shape_cast %60 : vector<16x16x32xf32> to vector<256x32xf32>
    %62 = vector.extract_strided_slice %55 {offsets = [1, 0, 0], sizes = [16, 16, 32], strides = [1, 1, 1]} : vector<18x18x32xf32> to vector<16x16x32xf32>
    %63 = vector.shape_cast %62 : vector<16x16x32xf32> to vector<256x32xf32>
    %64 = vector.extract_strided_slice %55 {offsets = [1, 1, 0], sizes = [16, 16, 32], strides = [1, 1, 1]} : vector<18x18x32xf32> to vector<16x16x32xf32>
    %65 = vector.shape_cast %64 : vector<16x16x32xf32> to vector<256x32xf32>
    %66 = vector.extract_strided_slice %55 {offsets = [1, 2, 0], sizes = [16, 16, 32], strides = [1, 1, 1]} : vector<18x18x32xf32> to vector<16x16x32xf32>
    %67 = vector.shape_cast %66 : vector<16x16x32xf32> to vector<256x32xf32>
    %68 = vector.extract_strided_slice %55 {offsets = [2, 0, 0], sizes = [16, 16, 32], strides = [1, 1, 1]} : vector<18x18x32xf32> to vector<16x16x32xf32>
    %69 = vector.shape_cast %68 : vector<16x16x32xf32> to vector<256x32xf32>
    %70 = vector.extract_strided_slice %55 {offsets = [2, 1, 0], sizes = [16, 16, 32], strides = [1, 1, 1]} : vector<18x18x32xf32> to vector<16x16x32xf32>
    %71 = vector.shape_cast %70 : vector<16x16x32xf32> to vector<256x32xf32>
    %72 = vector.extract_strided_slice %55 {offsets = [2, 2, 0], sizes = [16, 16, 32], strides = [1, 1, 1]} : vector<18x18x32xf32> to vector<16x16x32xf32>
    %73 = vector.shape_cast %72 : vector<16x16x32xf32> to vector<256x32xf32>
    %74 = tpu.concatenate %57, %59, %61, %63, %65, %67, %69, %71, %73 in 1 : vector<256x32xf32>, vector<256x32xf32>, vector<256x32xf32>, vector<256x32xf32>, vector<256x32xf32>, vector<256x32xf32>, vector<256x32xf32>, vector<256x32xf32>, vector<256x32xf32> -> vector<256x288xf32>
    %cst_18 = arith.constant dense<0.000000e+00> : vector<256x32xf32>
    %75 = tpu.matmul %74, %49, %cst_18 {dimension_numbers = #tpu.dot_dimension_numbers<[1], [0], [0], [1], [0, 0, 1, 1], [], []>} : vector<256x288xf32>, vector<288x32xf32>, vector<256x32xf32> -> vector<256x32xf32>
    %76 = vector.broadcast %51 : vector<1x32xf32> to vector<256x32xf32>
    %77 = arith.addf %75, %76 : vector<256x32xf32>
    %c0_19 = arith.constant 0 : index
    %c0_20 = arith.constant 0 : index
    %78 = vector.load %arg6[%c0_19, %c0_20] : memref<1x32xf32, #tpu.memory_space<vmem>>, vector<1x32xf32>
    %c0_21 = arith.constant 0 : index
    %c0_22 = arith.constant 0 : index
    %79 = vector.load %arg7[%c0_21, %c0_22] : memref<1x32xf32, #tpu.memory_space<vmem>>, vector<1x32xf32>
    %cst_23 = arith.constant dense<0.000000e+00> : vector<32xf32>
    %80 = vector.multi_reduction <add>, %77, %cst_23 [0] : vector<256x32xf32> to vector<32xf32>
    %81 = vector.shape_cast %80 : vector<32xf32> to vector<1x32xf32>
    %cst_24 = arith.constant 3.906250e-03 : f32
    %82 = vector.broadcast %cst_24 : f32 to vector<1x32xf32>
    %83 = arith.mulf %81, %82 : vector<1x32xf32>
    %84 = vector.broadcast %83 : vector<1x32xf32> to vector<256x32xf32>
    %85 = arith.subf %77, %84 : vector<256x32xf32>
    %86 = arith.mulf %85, %85 : vector<256x32xf32>
    %cst_25 = arith.constant dense<0.000000e+00> : vector<32xf32>
    %87 = vector.multi_reduction <add>, %86, %cst_25 [0] : vector<256x32xf32> to vector<32xf32>
    %88 = vector.shape_cast %87 : vector<32xf32> to vector<1x32xf32>
    %cst_26 = arith.constant 3.906250e-03 : f32
    %89 = vector.broadcast %cst_26 : f32 to vector<1x32xf32>
    %90 = arith.mulf %88, %89 : vector<1x32xf32>
    %cst_27 = arith.constant 9.99999974E-6 : f32
    %91 = vector.broadcast %cst_27 : f32 to vector<1x32xf32>
    %92 = arith.addf %90, %91 : vector<1x32xf32>
    %93 = math.rsqrt %92 : vector<1x32xf32>
    %94 = arith.mulf %93, %78 : vector<1x32xf32>
    %95 = vector.broadcast %94 : vector<1x32xf32> to vector<256x32xf32>
    %96 = arith.mulf %85, %95 : vector<256x32xf32>
    %97 = vector.broadcast %79 : vector<1x32xf32> to vector<256x32xf32>
    %98 = arith.addf %96, %97 : vector<256x32xf32>
    %99 = arith.negf %98 : vector<256x32xf32>
    %100 = math.exp %99 : vector<256x32xf32>
    %cst_28 = arith.constant 1.000000e+00 : f32
    %101 = vector.broadcast %cst_28 : f32 to vector<256x32xf32>
    %102 = arith.addf %101, %100 : vector<256x32xf32>
    %103 = arith.divf %101, %102 : vector<256x32xf32>
    %104 = arith.mulf %98, %103 : vector<256x32xf32>
    %105 = vector.shape_cast %104 : vector<256x32xf32> to vector<16x16x32xf32>
    %c0_29 = arith.constant 0 : index
    %c0_30 = arith.constant 0 : index
    %106 = vector.load %arg8[%c0_29, %c0_30] : memref<288x32xf32, #tpu.memory_space<vmem>>, vector<288x32xf32>
    %c0_31 = arith.constant 0 : index
    %c0_32 = arith.constant 0 : index
    %107 = vector.load %arg9[%c0_31, %c0_32] : memref<1x32xf32, #tpu.memory_space<vmem>>, vector<1x32xf32>
    %cst_33 = arith.constant 0.000000e+00 : f32
    %108 = vector.broadcast %cst_33 : f32 to vector<16x1x32xf32>
    %109 = tpu.concatenate %108, %105, %108 in 1 : vector<16x1x32xf32>, vector<16x16x32xf32>, vector<16x1x32xf32> -> vector<16x18x32xf32>
    %cst_34 = arith.constant 0.000000e+00 : f32
    %110 = vector.broadcast %cst_34 : f32 to vector<1x18x32xf32>
    %111 = tpu.concatenate %110, %109, %110 in 0 : vector<1x18x32xf32>, vector<16x18x32xf32>, vector<1x18x32xf32> -> vector<18x18x32xf32>
    %112 = vector.extract_strided_slice %111 {offsets = [0, 0, 0], sizes = [16, 16, 32], strides = [1, 1, 1]} : vector<18x18x32xf32> to vector<16x16x32xf32>
    %113 = vector.shape_cast %112 : vector<16x16x32xf32> to vector<256x32xf32>
    %114 = vector.extract_strided_slice %111 {offsets = [0, 1, 0], sizes = [16, 16, 32], strides = [1, 1, 1]} : vector<18x18x32xf32> to vector<16x16x32xf32>
    %115 = vector.shape_cast %114 : vector<16x16x32xf32> to vector<256x32xf32>
    %116 = vector.extract_strided_slice %111 {offsets = [0, 2, 0], sizes = [16, 16, 32], strides = [1, 1, 1]} : vector<18x18x32xf32> to vector<16x16x32xf32>
    %117 = vector.shape_cast %116 : vector<16x16x32xf32> to vector<256x32xf32>
    %118 = vector.extract_strided_slice %111 {offsets = [1, 0, 0], sizes = [16, 16, 32], strides = [1, 1, 1]} : vector<18x18x32xf32> to vector<16x16x32xf32>
    %119 = vector.shape_cast %118 : vector<16x16x32xf32> to vector<256x32xf32>
    %120 = vector.extract_strided_slice %111 {offsets = [1, 1, 0], sizes = [16, 16, 32], strides = [1, 1, 1]} : vector<18x18x32xf32> to vector<16x16x32xf32>
    %121 = vector.shape_cast %120 : vector<16x16x32xf32> to vector<256x32xf32>
    %122 = vector.extract_strided_slice %111 {offsets = [1, 2, 0], sizes = [16, 16, 32], strides = [1, 1, 1]} : vector<18x18x32xf32> to vector<16x16x32xf32>
    %123 = vector.shape_cast %122 : vector<16x16x32xf32> to vector<256x32xf32>
    %124 = vector.extract_strided_slice %111 {offsets = [2, 0, 0], sizes = [16, 16, 32], strides = [1, 1, 1]} : vector<18x18x32xf32> to vector<16x16x32xf32>
    %125 = vector.shape_cast %124 : vector<16x16x32xf32> to vector<256x32xf32>
    %126 = vector.extract_strided_slice %111 {offsets = [2, 1, 0], sizes = [16, 16, 32], strides = [1, 1, 1]} : vector<18x18x32xf32> to vector<16x16x32xf32>
    %127 = vector.shape_cast %126 : vector<16x16x32xf32> to vector<256x32xf32>
    %128 = vector.extract_strided_slice %111 {offsets = [2, 2, 0], sizes = [16, 16, 32], strides = [1, 1, 1]} : vector<18x18x32xf32> to vector<16x16x32xf32>
    %129 = vector.shape_cast %128 : vector<16x16x32xf32> to vector<256x32xf32>
    %130 = tpu.concatenate %113, %115, %117, %119, %121, %123, %125, %127, %129 in 1 : vector<256x32xf32>, vector<256x32xf32>, vector<256x32xf32>, vector<256x32xf32>, vector<256x32xf32>, vector<256x32xf32>, vector<256x32xf32>, vector<256x32xf32>, vector<256x32xf32> -> vector<256x288xf32>
    %cst_35 = arith.constant dense<0.000000e+00> : vector<256x32xf32>
    %131 = tpu.matmul %130, %106, %cst_35 {dimension_numbers = #tpu.dot_dimension_numbers<[1], [0], [0], [1], [0, 0, 1, 1], [], []>} : vector<256x288xf32>, vector<288x32xf32>, vector<256x32xf32> -> vector<256x32xf32>
    %132 = vector.broadcast %107 : vector<1x32xf32> to vector<256x32xf32>
    %133 = arith.addf %131, %132 : vector<256x32xf32>
    %134 = arith.addf %133, %48 : vector<256x32xf32>
    %135 = tpu.transpose %134, [1, 0] : vector<256x32xf32> -> vector<32x256xf32>
    %136 = vector.shape_cast %135 : vector<32x256xf32> to vector<1x32x256xf32>
    %c0_36 = arith.constant 0 : index
    %c0_37 = arith.constant 0 : index
    %c0_38 = arith.constant 0 : index
    %137 = vector.load %arg10[%c0_36, %c0_37, %c0_38] : memref<1x32x256xf32, #tpu.memory_space<vmem>>, vector<1x32x256xf32>
    tpu.vector_store %arg10[%c0_36, %c0_37, %c0_38], %136 {strides = array<i32>} : memref<1x32x256xf32, #tpu.memory_space<vmem>>, vector<1x32x256xf32>,
    return
  }
  func.func @transform_0(%arg0: i32) -> (i32, i32, i32) {
    %c0_i32 = arith.constant 0 : i32
    %c0_i32_0 = arith.constant 0 : i32
    %c0_i32_1 = arith.constant 0 : i32
    return %arg0, %c0_i32, %c0_i32_0 : i32, i32, i32
  }
  func.func @transform_1(%arg0: i32) -> (i32, i32) {
    %c0_i32 = arith.constant 0 : i32
    %c0_i32_0 = arith.constant 0 : i32
    %c0_i32_1 = arith.constant 0 : i32
    return %c0_i32, %c0_i32_0 : i32, i32
  }
  func.func @transform_2(%arg0: i32) -> (i32, i32) {
    %c0_i32 = arith.constant 0 : i32
    %c0_i32_0 = arith.constant 0 : i32
    %c0_i32_1 = arith.constant 0 : i32
    return %c0_i32, %c0_i32_0 : i32, i32
  }
  func.func @transform_3(%arg0: i32) -> (i32, i32) {
    %c0_i32 = arith.constant 0 : i32
    %c0_i32_0 = arith.constant 0 : i32
    %c0_i32_1 = arith.constant 0 : i32
    return %c0_i32, %c0_i32_0 : i32, i32
  }
  func.func @transform_4(%arg0: i32) -> (i32, i32, i32) {
    %c0_i32 = arith.constant 0 : i32
    %c0_i32_0 = arith.constant 0 : i32
    %c0_i32_1 = arith.constant 0 : i32
    return %arg0, %c0_i32, %c0_i32_0 : i32, i32, i32
  }
  func.func @transform_5(%arg0: i32) -> (i32, i32) {
    %c0_i32 = arith.constant 0 : i32
    %c0_i32_0 = arith.constant 0 : i32
    %c0_i32_1 = arith.constant 0 : i32
    return %c0_i32, %c0_i32_0 : i32, i32
  }
  func.func @transform_6(%arg0: i32) -> (i32, i32) {
    %c0_i32 = arith.constant 0 : i32
    %c0_i32_0 = arith.constant 0 : i32
    %c0_i32_1 = arith.constant 0 : i32
    return %c0_i32, %c0_i32_0 : i32, i32
  }
  func.func @transform_7(%arg0: i32) -> (i32, i32) {
    %c0_i32 = arith.constant 0 : i32
    %c0_i32_0 = arith.constant 0 : i32
    %c0_i32_1 = arith.constant 0 : i32
    return %c0_i32, %c0_i32_0 : i32, i32
  }
  func.func @transform_8(%arg0: i32) -> (i32, i32) {
    %c0_i32 = arith.constant 0 : i32
    %c0_i32_0 = arith.constant 0 : i32
    %c0_i32_1 = arith.constant 0 : i32
    return %c0_i32, %c0_i32_0 : i32, i32
  }
  func.func @transform_9(%arg0: i32) -> (i32, i32, i32) {
    %c0_i32 = arith.constant 0 : i32
    %c0_i32_0 = arith.constant 0 : i32
    %c0_i32_1 = arith.constant 0 : i32
    return %arg0, %c0_i32, %c0_i32_0 : i32, i32, i32
  }
}

</mosaic_0001>

<llo_original>
// kernel: upsample_res_forward.1
$region0: #{upsample_res_forward.1}
  #allocation0 [shape = 'u32[]', space=smem, size = 0x4, offset = 0x4, fixed_abs, tag = 'smem constant byte address 0x4 - core index']
  #allocation1 [shape = 'u32[144,128]{1,0:T(1,128)}', space=vmem, size = 0x12000, scoped, tag = 'internal scratch']
  %s0 = inlined_call_operand.vmem [shape: f32[2,32,64], index: 0, kind: input, shape index: {}]
  %s1 = inlined_call_operand.vmem [shape: f32[1,32], index: 1, kind: input, shape index: {}]
  %s2 = inlined_call_operand.vmem [shape: f32[1,32], index: 2, kind: input, shape index: {}]
  %s3 = inlined_call_operand.vmem [shape: f32[288,32], index: 3, kind: input, shape index: {}]
  %s4 = inlined_call_operand.vmem [shape: f32[2,1,32], index: 4, kind: input, shape index: {}]
  %s5 = inlined_call_operand.vmem [shape: f32[1,32], index: 5, kind: input, shape index: {}]
  %s6 = inlined_call_operand.vmem [shape: f32[1,32], index: 6, kind: input, shape index: {}]
  %s7 = inlined_call_operand.hbm [shape: f32[288,32], index: 7, kind: input, shape index: {}]
  %s8 = inlined_call_operand.vmem [shape: f32[1,32], index: 8, kind: input, shape index: {}]
  %s9 = inlined_call_operand.vmem [shape: f32[2,32,256], index: 9, kind: output, shape index: {}]
  %s10 = sld [smem:[#allocation0]]
  $region73: #{upsample_res_forward.1} parent=0
    _
  %s12 = ssub.s32 1, %s10
  %s13 = scalar_select 0, %s12, %s10
  $region1: #{upsample_res_forward.1} parent=0
    #allocation2 [shape = 'u8[147456]{0}', space=vmem, size = 0x24000, scoped, tag = 'input window, operand 7, single buffered']
    #allocation3 [shape = 's32[2]{0}', space=sflag, size = 0x8, scoped, tag = 'scoped memory for upsample_res_forward.1']
    %14 = vsyncpa [#allocation3], 0
    loop: start=0, step=1, limit=4
    $region2: #{upsample_res_forward.1} parent=1 // loop_pre_header
      _
    $region3: #{upsample_res_forward.1} parent=1 // loop_header
      %s16 = sphi 0, %s20
      %p17 = scmp.ge.s32.totalorder %s16, 4
      %s26 = sphi 0, %s28
      %s29 = sphi 0, %s26
      %s30 = sphi 0, %s29
      %s46 = sphi 0, %s30
      %s50 = sphi 0, %s50
      %s52 = sphi 0, %s50
      %s53 = sphi 0, %s52
      %s67 = sphi 0, %s53
      %s71 = sphi 0, %s71
      %s73 = sphi 0, %s71
      %s74 = sphi 0, %s73
      %s88 = sphi 0, %s74
      %s92 = sphi 0, %s92
      %s94 = sphi 0, %s92
      %s95 = sphi 0, %s94
      %s109 = sphi 0, %s95
      %s115 = sphi 0, %s117
      %s118 = sphi 0, %s115
      %s119 = sphi 0, %s118
      %s135 = sphi 0, %s119
      %s139 = sphi 0, %s139
      %s141 = sphi 0, %s139
      %s142 = sphi 0, %s141
      %s156 = sphi 0, %s142
      %s160 = sphi 0, %s160
      %s162 = sphi 0, %s160
      %s163 = sphi 0, %s162
      %s177 = sphi 0, %s163
      %s181 = sphi 0, %s181
      %s183 = sphi 0, %s181
      %s184 = sphi 0, %s183
      %s198 = sphi 0, %s184
      %s202 = sphi 0, %s202
      %s204 = sphi 0, %s202
      %s205 = sphi 0, %s204
      %s219 = sphi 0, %s205
      %s225 = sphi 0, %s227
      %s228 = sphi 0, %s225
      %s229 = sphi 0, %s228
      %s245 = sphi 0, %s229
    $region4: #{upsample_res_forward.1} parent=1 // loop_header_branch
      %19 = sbr.rel (%p17) target = $region8
    $region5: #{upsample_res_forward.1} parent=1 // loop_body
      %s21 = ssub.s32 %s16, 1
      %s22 = ssub.s32 %s16, 2
      %s23 = sadd.s32 %s16, 1
      %s24 = ssub.s32 %s16, %s23
      %p25 = scmp.eq.s32.totalorder %s24, 0
      %s27 = sadd.s32 %s26, 1
      %s28 = scalar_select %p25, %s26, %s27
      %p31 = pneg %p25
      %p32 = scmp.eq.s32.totalorder %s16, 1
      %p33 = por %p31, %p32
      %p34 = scmp.ne.s32.totalorder %s26, %s29
      %p35 = scmp.eq.s32.totalorder %s16, 0
      %p36 = por %p34, %p35
      %p37 = scmp.ne.s32.totalorder %s26, %s29
      %p38 = scmp.eq.s32.totalorder %s21, 1
      %p39 = por %p37, %p38
      %p40 = scmp.ne.s32.totalorder %s29, %s30
      %p41 = scmp.eq.s32.totalorder %s21, 0
      %p42 = por %p40, %p41
      %p43 = scmp.ne.s32.totalorder %s29, %s30
      %p44 = scmp.eq.s32.totalorder %s22, 1
      %p45 = por %p43, %p44
      %p47 = scmp.ne.s32.totalorder %s30, %s46
      %p48 = scmp.eq.s32.totalorder %s22, 0
      %p49 = por %p47, %p48
      %s51 = sadd.s32 %s50, 1
      %p54 = scmp.eq.s32.totalorder %s16, 1
      %p55 = scmp.ne.s32.totalorder %s50, %s52
      %p56 = scmp.eq.s32.totalorder %s16, 0
      %p57 = por %p55, %p56
      %p58 = scmp.ne.s32.totalorder %s50, %s52
      %p59 = scmp.eq.s32.totalorder %s21, 1
      %p60 = por %p58, %p59
      %p61 = scmp.ne.s32.totalorder %s52, %s53
      %p62 = scmp.eq.s32.totalorder %s21, 0
      %p63 = por %p61, %p62
      %p64 = scmp.ne.s32.totalorder %s52, %s53
      %p65 = scmp.eq.s32.totalorder %s22, 1
      %p66 = por %p64, %p65
      %p68 = scmp.ne.s32.totalorder %s53, %s67
      %p69 = scmp.eq.s32.totalorder %s22, 0
      %p70 = por %p68, %p69
      %s72 = sadd.s32 %s71, 1
      %p75 = scmp.eq.s32.totalorder %s16, 1
      %p76 = scmp.ne.s32.totalorder %s71, %s73
      %p77 = scmp.eq.s32.totalorder %s16, 0
      %p78 = por %p76, %p77
      %p79 = scmp.ne.s32.totalorder %s71, %s73
      %p80 = scmp.eq.s32.totalorder %s21, 1
      %p81 = por %p79, %p80
      %p82 = scmp.ne.s32.totalorder %s73, %s74
      %p83 = scmp.eq.s32.totalorder %s21, 0
      %p84 = por %p82, %p83
      %p85 = scmp.ne.s32.totalorder %s73, %s74
      %p86 = scmp.eq.s32.totalorder %s22, 1
      %p87 = por %p85, %p86
      %p89 = scmp.ne.s32.totalorder %s74, %s88
      %p90 = scmp.eq.s32.totalorder %s22, 0
      %p91 = por %p89, %p90
      %s93 = sadd.s32 %s92, 1
      %p96 = scmp.eq.s32.totalorder %s16, 1
      %p97 = scmp.ne.s32.totalorder %s92, %s94
      %p98 = scmp.eq.s32.totalorder %s16, 0
      %p99 = por %p97, %p98
      %p100 = scmp.ne.s32.totalorder %s92, %s94
      %p101 = scmp.eq.s32.totalorder %s21, 1
      %p102 = por %p100, %p101
      %p103 = scmp.ne.s32.totalorder %s94, %s95
      %p104 = scmp.eq.s32.totalorder %s21, 0
      %p105 = por %p103, %p104
      %p106 = scmp.ne.s32.totalorder %s94, %s95
      %p107 = scmp.eq.s32.totalorder %s22, 1
      %p108 = por %p106, %p107
      %p110 = scmp.ne.s32.totalorder %s95, %s109
      %p111 = scmp.eq.s32.totalorder %s22, 0
      %p112 = por %p110, %p111
      %s113 = ssub.s32 %s16, %s23
      %p114 = scmp.eq.s32.totalorder %s113, 0
      %s116 = sadd.s32 %s115, 1
      %s117 = scalar_select %p114, %s115, %s116
      %p120 = pneg %p114
      %p121 = scmp.eq.s32.totalorder %s16, 1
      %p122 = por %p120, %p121
      %p123 = scmp.ne.s32.totalorder %s115, %s118
      %p124 = scmp.eq.s32.totalorder %s16, 0
      %p125 = por %p123, %p124
      %p126 = scmp.ne.s32.totalorder %s115, %s118
      %p127 = scmp.eq.s32.totalorder %s21, 1
      %p128 = por %p126, %p127
      %p129 = scmp.ne.s32.totalorder %s118, %s119
      %p130 = scmp.eq.s32.totalorder %s21, 0
      %p131 = por %p129, %p130
      %p132 = scmp.ne.s32.totalorder %s118, %s119
      %p133 = scmp.eq.s32.totalorder %s22, 1
      %p134 = por %p132, %p133
      %p136 = scmp.ne.s32.totalorder %s119, %s135
      %p137 = scmp.eq.s32.totalorder %s22, 0
      %p138 = por %p136, %p137
      %s140 = sadd.s32 %s139, 1
      %p143 = scmp.eq.s32.totalorder %s16, 1
      %p144 = scmp.ne.s32.totalorder %s139, %s141
      %p145 = scmp.eq.s32.totalorder %s16, 0
      %p146 = por %p144, %p145
      %p147 = scmp.ne.s32.totalorder %s139, %s141
      %p148 = scmp.eq.s32.totalorder %s21, 1
      %p149 = por %p147, %p148
      %p150 = scmp.ne.s32.totalorder %s141, %s142
      %p151 = scmp.eq.s32.totalorder %s21, 0
      %p152 = por %p150, %p151
      %p153 = scmp.ne.s32.totalorder %s141, %s142
      %p154 = scmp.eq.s32.totalorder %s22, 1
      %p155 = por %p153, %p154
      %p157 = scmp.ne.s32.totalorder %s142, %s156
      %p158 = scmp.eq.s32.totalorder %s22, 0
      %p159 = por %p157, %p158
      %s161 = sadd.s32 %s160, 1
      %p164 = scmp.eq.s32.totalorder %s16, 1
      %p165 = scmp.ne.s32.totalorder %s160, %s162
      %p166 = scmp.eq.s32.totalorder %s16, 0
      %p167 = por %p165, %p166
      %p168 = scmp.ne.s32.totalorder %s160, %s162
      %p169 = scmp.eq.s32.totalorder %s21, 1
      %p170 = por %p168, %p169
      %p171 = scmp.ne.s32.totalorder %s162, %s163
      %p172 = scmp.eq.s32.totalorder %s21, 0
      %p173 = por %p171, %p172
      %p174 = scmp.ne.s32.totalorder %s162, %s163
      %p175 = scmp.eq.s32.totalorder %s22, 1
      %p176 = por %p174, %p175
      %p178 = scmp.ne.s32.totalorder %s163, %s177
      %p179 = scmp.eq.s32.totalorder %s22, 0
      %p180 = por %p178, %p179
      %s182 = sadd.s32 %s181, 1
      %p185 = scmp.eq.s32.totalorder %s16, 1
      %p186 = scmp.ne.s32.totalorder %s181, %s183
      %p187 = scmp.eq.s32.totalorder %s16, 0
      %p188 = por %p186, %p187
      %p189 = scmp.ne.s32.totalorder %s181, %s183
      %p190 = scmp.eq.s32.totalorder %s21, 1
      %p191 = por %p189, %p190
      %p192 = scmp.ne.s32.totalorder %s183, %s184
      %p193 = scmp.eq.s32.totalorder %s21, 0
      %p194 = por %p192, %p193
      %p195 = scmp.ne.s32.totalorder %s183, %s184
      %p196 = scmp.eq.s32.totalorder %s22, 1
      %p197 = por %p195, %p196
      %p199 = scmp.ne.s32.totalorder %s184, %s198
      %p200 = scmp.eq.s32.totalorder %s22, 0
      %p201 = por %p199, %p200
      %s203 = sadd.s32 %s202, 1
      %p206 = scmp.eq.s32.totalorder %s16, 1
      %p207 = scmp.ne.s32.totalorder %s202, %s204
      %p208 = scmp.eq.s32.totalorder %s16, 0
      %p209 = por %p207, %p208
      %p210 = scmp.ne.s32.totalorder %s202, %s204
      %p211 = scmp.eq.s32.totalorder %s21, 1
      %p212 = por %p210, %p211
      %p213 = scmp.ne.s32.totalorder %s204, %s205
      %p214 = scmp.eq.s32.totalorder %s21, 0
      %p215 = por %p213, %p214
      %p216 = scmp.ne.s32.totalorder %s204, %s205
      %p217 = scmp.eq.s32.totalorder %s22, 1
      %p218 = por %p216, %p217
      %p220 = scmp.ne.s32.totalorder %s205, %s219
      %p221 = scmp.eq.s32.totalorder %s22, 0
      %p222 = por %p220, %p221
      %s223 = ssub.s32 %s16, %s23
      %p224 = scmp.eq.s32.totalorder %s223, 0
      %s226 = sadd.s32 %s225, 1
      %s227 = scalar_select %p224, %s225, %s226
      %p230 = pneg %p224
      %p231 = scmp.eq.s32.totalorder %s16, 1
      %p232 = por %p230, %p231
      %p233 = scmp.ne.s32.totalorder %s225, %s228
      %p234 = scmp.eq.s32.totalorder %s16, 0
      %p235 = por %p233, %p234
      %p236 = scmp.ne.s32.totalorder %s225, %s228
      %p237 = scmp.eq.s32.totalorder %s21, 1
      %p238 = por %p236, %p237
      %p239 = scmp.ne.s32.totalorder %s228, %s229
      %p240 = scmp.eq.s32.totalorder %s21, 0
      %p241 = por %p239, %p240
      %p242 = scmp.ne.s32.totalorder %s228, %s229
      %p243 = scmp.eq.s32.totalorder %s22, 1
      %p244 = por %p242, %p243
      %p246 = scmp.ne.s32.totalorder %s229, %s245
      %p247 = scmp.eq.s32.totalorder %s22, 0
      %p248 = por %p246, %p247
      %p249 = scmp.le.s32.totalorder 1, %s16
      %p250 = scmp.lt.s32.totalorder %s16, 3
      %p251 = pnand %p249, %p250
      %p252 = pneg %p251
      // Predicated region
      $region9: #{upsample_res_forward.1} parent=5 // pred_check
        _
      $region10: #{upsample_res_forward.1} parent=5 // pred_check_branch
        %254 = sbr.rel (%p251) target = $region12
      $region11: #{upsample_res_forward.1} parent=5 // pred_region
        %s255 = ssub.s32 %s16, 1
        // Predicated region
        $region13: #{upsample_res_forward.1} parent=11 // pred_check
          %p256 = pneg %p63
        $region14: #{upsample_res_forward.1} parent=11 // pred_check_branch
          %258 = sbr.rel (%p256) target = $region16
        $region15: #{upsample_res_forward.1} parent=11 // pred_region
          _
        $region16: #{upsample_res_forward.1} parent=11 // pred_fallthru
          _
        // Predicated region
        $region17: #{upsample_res_forward.1} parent=11 // pred_check
          %p259 = pneg %p84
        $region18: #{upsample_res_forward.1} parent=11 // pred_check_branch
          %261 = sbr.rel (%p259) target = $region20
        $region19: #{upsample_res_forward.1} parent=11 // pred_region
          _
        $region20: #{upsample_res_forward.1} parent=11 // pred_fallthru
          _
        // Predicated region
        $region21: #{upsample_res_forward.1} parent=11 // pred_check
          %p262 = pneg %p105
        $region22: #{upsample_res_forward.1} parent=11 // pred_check_branch
          %264 = sbr.rel (%p262) target = $region24
        $region23: #{upsample_res_forward.1} parent=11 // pred_region
          _
        $region24: #{upsample_res_forward.1} parent=11 // pred_fallthru
          _
        // Predicated region
        $region25: #{upsample_res_forward.1} parent=11 // pred_check
          %p265 = pneg %p152
        $region26: #{upsample_res_forward.1} parent=11 // pred_check_branch
          %267 = sbr.rel (%p265) target = $region28
        $region27: #{upsample_res_forward.1} parent=11 // pred_region
          _
        $region28: #{upsample_res_forward.1} parent=11 // pred_fallthru
          _
        // Predicated region
        $region29: #{upsample_res_forward.1} parent=11 // pred_check
          %p268 = pneg %p173
        $region30: #{upsample_res_forward.1} parent=11 // pred_check_branch
          %270 = sbr.rel (%p268) target = $region32
        $region31: #{upsample_res_forward.1} parent=11 // pred_region
          _
        $region32: #{upsample_res_forward.1} parent=11 // pred_fallthru
          _
        // Predicated region
        $region33: #{upsample_res_forward.1} parent=11 // pred_check
          %p271 = pneg %p194
        $region34: #{upsample_res_forward.1} parent=11 // pred_check_branch
          %273 = sbr.rel (%p271) target = $region36
        $region35: #{upsample_res_forward.1} parent=11 // pred_region
          %s275 = ssub.s32 4608, 4608
          %276 = vsyncadd [#allocation3], %s275
          %s277 = sshll.u32 [#allocation2], 4
          %s278 = int_to_ptr.vmem [resolvable:$true] %s277
          %283 = dma.hbm_to_vmem [thread:$0]  %s7, 4608, %s278, [#allocation3], 128, 128, 8
        $region36: #{upsample_res_forward.1} parent=11 // pred_fallthru
          _
        // Predicated region
        $region37: #{upsample_res_forward.1} parent=11 // pred_check
          %p284 = pneg %p215
        $region38: #{upsample_res_forward.1} parent=11 // pred_check_branch
          %286 = sbr.rel (%p284) target = $region40
        $region39: #{upsample_res_forward.1} parent=11 // pred_region
          _
        $region40: #{upsample_res_forward.1} parent=11 // pred_fallthru
          _
      $region12: #{upsample_res_forward.1} parent=5 // pred_fallthru
        _
      %p287 = scmp.lt.s32.totalorder %s16, 2
      // Predicated region
      $region41: #{upsample_res_forward.1} parent=5 // pred_check
        %p288 = pneg %p287
      $region42: #{upsample_res_forward.1} parent=5 // pred_check_branch
        %290 = sbr.rel (%p288) target = $region44
      $region43: #{upsample_res_forward.1} parent=5 // pred_region
        // Predicated region
        $region45: #{upsample_res_forward.1} parent=43 // pred_check
          %p291 = pneg %p36
        $region46: #{upsample_res_forward.1} parent=43 // pred_check_branch
          %293 = sbr.rel (%p291) target = $region48
        $region47: #{upsample_res_forward.1} parent=43 // pred_region
          %p294 = scmp.lt.s32.totalorder %s16, 1
          %s295 = scalar_select %p294, %s16, 1
          %s296 = smul.addr %s295, 4
          %s297 = smul.addr %s296, 8
          %s298 = scalar_lea.vmem %s0, %s297
        $region48: #{upsample_res_forward.1} parent=43 // pred_fallthru
          _
        // Predicated region
        $region49: #{upsample_res_forward.1} parent=43 // pred_check
          %p299 = pneg %p125
        $region50: #{upsample_res_forward.1} parent=43 // pred_check_branch
          %301 = sbr.rel (%p299) target = $region52
        $region51: #{upsample_res_forward.1} parent=43 // pred_region
          %p302 = scmp.lt.s32.totalorder %s16, 1
          %s303 = scalar_select %p302, %s16, 1
          %s304 = scalar_lea.vmem %s4, %s303
        $region52: #{upsample_res_forward.1} parent=43 // pred_fallthru
          _
      $region44: #{upsample_res_forward.1} parent=5 // pred_fallthru
        _
      %p305 = scmp.le.s32.totalorder 1, %s16
      %p306 = scmp.lt.s32.totalorder %s16, 3
      %p307 = pnand %p305, %p306
      %p308 = pneg %p307
      // Predicated region
      $region53: #{upsample_res_forward.1} parent=5 // pred_check
        _
      $region54: #{upsample_res_forward.1} parent=5 // pred_check_branch
        %310 = sbr.rel (%p307) target = $region56
      $region55: #{upsample_res_forward.1} parent=5 // pred_region
        %s311 = ssub.s32 %s16, 1
        // Predicated region
        $region57: #{upsample_res_forward.1} parent=55 // pred_check
          %p312 = pneg %p194
        $region58: #{upsample_res_forward.1} parent=55 // pred_check_branch
          %314 = sbr.rel (%p312) target = $region60
        $region59: #{upsample_res_forward.1} parent=55 // pred_region
          %315 = dma.done [#allocation3], 4608
        $region60: #{upsample_res_forward.1} parent=55 // pred_fallthru
          _
        %p316 = scmp.lt.s32.totalorder %s21, 1
        %s317 = scalar_select %p316, %s21, 1
        %s318 = smul.addr %s317, 4
        %s319 = smul.addr %s318, 8
        %s320 = scalar_lea.vmem %s0, %s319
        %p321 = pneg %p42
        %p322 = pneg %p39
        %p323 = pneg %p63
        %p324 = pneg %p60
        %p325 = pneg %p84
        %p326 = pneg %p81
        %p327 = pneg %p105
        %p328 = pneg %p102
        %p329 = scmp.lt.s32.totalorder %s21, 1
        %s330 = scalar_select %p329, %s21, 1
        %s331 = scalar_lea.vmem %s4, %s330
        %p332 = pneg %p131
        %p333 = pneg %p128
        %p334 = pneg %p152
        %p335 = pneg %p149
        %p336 = pneg %p173
        %p337 = pneg %p170
        %p338 = pneg %p194
        %p339 = pneg %p191
        %p340 = pneg %p215
        %p341 = pneg %p212
        %p342 = pneg %p241
        %p343 = pneg %p238
        %p344 = scmp.lt.s32.totalorder %s21, 1
        %s345 = scalar_select %p344, %s21, 1
        %s346 = smul.addr %s345, 8
        %s347 = smul.addr %s346, 8
        %s348 = scalar_lea.vmem %s9, %s347
        %p349 = scmp.lt.s32.totalorder %s21, 1
        %s350 = scalar_select %p349, %s21, 1
        %s351 = smul.addr %s350, 4
        %s352 = smul.addr %s351, 8
        %s353 = scalar_lea.vmem %s0, %s352
        %p354 = scmp.lt.s32.totalorder %s21, 1
        %s355 = scalar_select %p354, %s21, 1
        %s356 = scalar_lea.vmem %s4, %s355
        %p357 = scmp.lt.s32.totalorder %s21, 1
        %s358 = scalar_select %p357, %s21, 1
        %s359 = smul.addr %s358, 8
        %s360 = smul.addr %s359, 8
        %s361 = scalar_lea.vmem %s9, %s360
        %v362 = vld [vmem:[%s353] sm:$0xff]
        %v363 = vld [vmem:[%s353 + $0x8] sm:$0xff]
        %v364 = vld [vmem:[%s353 + $0x10] sm:$0xff]
        %v365 = vld [vmem:[%s353 + $0x18] sm:$0xff]
        %366 = vxpose.xlu0.b32.start [1/16] %v362, 128
        %367 = vxpose.xlu0.b32.cont [2/16] %v363, 128
        %368 = vxpose.xlu0.b32.cont [3/16] %v364, 128
        %369 = vxpose.xlu0.b32.cont [4/16] %v365, 128
        %370 = vxpose.xlu0.b32.cont [5/16] 0.0, 128
        %371 = vxpose.xlu0.b32.cont [6/16] 0.0, 128
        %372 = vxpose.xlu0.b32.cont [7/16] 0.0, 128
        %373 = vxpose.xlu0.b32.cont [8/16] 0.0, 128
        %374 = vxpose.xlu0.b32.cont [9/16] 0.0, 128
        %375 = vxpose.xlu0.b32.cont [10/16] 0.0, 128
        %376 = vxpose.xlu0.b32.cont [11/16] 0.0, 128
        %377 = vxpose.xlu0.b32.cont [12/16] 0.0, 128
        %378 = vxpose.xlu0.b32.cont [13/16] 0.0, 128
        %379 = vxpose.xlu0.b32.cont [14/16] 0.0, 128
        %380 = vxpose.xlu0.b32.cont [15/16] 0.0, 128
        %381 = vxpose.xlu0.b32.end [16/16] 0.0, 128
        %v382 = vpop.trf.xlu0
        %v383 = vpop.trf.xlu0
        %v384 = vpop.trf.xlu0
        %v385 = vpop.trf.xlu0
        %v386 = vpop.trf.xlu0
        %v387 = vpop.trf.xlu0
        %v388 = vpop.trf.xlu0
        %v389 = vpop.trf.xlu0
        %v390 = vpop.trf.xlu0
        %v391 = vpop.trf.xlu0
        %v392 = vpop.trf.xlu0
        %v393 = vpop.trf.xlu0
        %v394 = vpop.trf.xlu0
        %v395 = vpop.trf.xlu0
        %v396 = vpop.trf.xlu0
        %v397 = vpop.trf.xlu0
        %v398 = vld [vmem:[%s1] sm:$0x1]
        %v399 = vld [vmem:[%s2] sm:$0x1]
        %vm400 = vcmask 261120
        %v401 = vsel %vm400, %v382, 0.0
        %v402 = vsel %vm400, %v383, 0.0
        %v403 = vadd.f32 %v401, %v402
        %v404 = vsel %vm400, %v384, 0.0
        %v405 = vadd.f32 %v403, %v404
        %v406 = vsel %vm400, %v385, 0.0
        %v407 = vadd.f32 %v405, %v406
        %v408 = vsel %vm400, %v386, 0.0
        %v409 = vadd.f32 %v407, %v408
        %v410 = vsel %vm400, %v387, 0.0
        %v411 = vadd.f32 %v409, %v410
        %v412 = vsel %vm400, %v388, 0.0
        %v413 = vadd.f32 %v411, %v412
        %v414 = vsel %vm400, %v389, 0.0
        %v415 = vadd.f32 %v413, %v414
        %v416 = vrot.slane %v415, 4
        %v417 = vadd.f32 %v415, %v416
        %v418 = vrot.slane %v417, 2
        %v419 = vadd.f32 %v417, %v418
        %v420 = vrot.slane %v419, 1
        %v421 = vadd.f32 %v419, %v420
        %v422 = vmul.f32 %v421, 0.015625
        %v423 = vsub.f32 %v382, %v422
        %v424 = vsub.f32 %v383, %v422
        %v425 = vsub.f32 %v384, %v422
        %v426 = vsub.f32 %v385, %v422
        %v427 = vsub.f32 %v386, %v422
        %v428 = vsub.f32 %v387, %v422
        %v429 = vsub.f32 %v388, %v422
        %v430 = vsub.f32 %v389, %v422
        %v431 = vmul.f32 %v423, %v423
        %v432 = vmul.f32 %v424, %v424
        %v433 = vmul.f32 %v425, %v425
        %v434 = vmul.f32 %v426, %v426
        %v435 = vmul.f32 %v427, %v427
        %v436 = vmul.f32 %v428, %v428
        %v437 = vmul.f32 %v429, %v429
        %v438 = vmul.f32 %v430, %v430
        %v439 = vsel %vm400, %v431, 0.0
        %v440 = vsel %vm400, %v432, 0.0
        %v441 = vadd.f32 %v439, %v440
        %v442 = vsel %vm400, %v433, 0.0
        %v443 = vadd.f32 %v441, %v442
        %v444 = vsel %vm400, %v434, 0.0
        %v445 = vadd.f32 %v443, %v444
        %v446 = vsel %vm400, %v435, 0.0
        %v447 = vadd.f32 %v445, %v446
        %v448 = vsel %vm400, %v436, 0.0
        %v449 = vadd.f32 %v447, %v448
        %v450 = vsel %vm400, %v437, 0.0
        %v451 = vadd.f32 %v449, %v450
        %v452 = vsel %vm400, %v438, 0.0
        %v453 = vadd.f32 %v451, %v452
        %v454 = vrot.slane %v453, 4
        %v455 = vadd.f32 %v453, %v454
        %v456 = vrot.slane %v455, 2
        %v457 = vadd.f32 %v455, %v456
        %v458 = vrot.slane %v457, 1
        %v459 = vadd.f32 %v457, %v458
        %v460 = vmul.f32 %v459, 0.015625
        %v461 = vadd.f32 %v460, 1e-05
        %v462 = vrsqrt.pop %v461
        %v463 = vmul.f32 %v462, %v398
        %v464 = vlaneseq
        %v465 = vshrl.u32 %v464, 7
        %v466 = vsub.s32 0, %v465
        %v467 = vrot.slane %v463, %v466
        %v468 = vmul.f32 %v423, %v467
        %v469 = vmul.f32 %v424, %v467
        %v470 = vmul.f32 %v425, %v467
        %v471 = vmul.f32 %v426, %v467
        %v472 = vmul.f32 %v427, %v467
        %v473 = vmul.f32 %v428, %v467
        %v474 = vmul.f32 %v429, %v467
        %v475 = vmul.f32 %v430, %v467
        %v477 = vlaneseq
        %v478 = vshrl.u32 %v477, 7
        %v479 = vsub.s32 0, %v478
        %v480 = vrot.slane %v399, %v479
        %v482 = vadd.f32 %v468, %v480
        %v483 = vadd.f32 %v469, %v480
        %v484 = vadd.f32 %v470, %v480
        %v485 = vadd.f32 %v471, %v480
        %v486 = vadd.f32 %v472, %v480
        %v487 = vadd.f32 %v473, %v480
        %v488 = vadd.f32 %v474, %v480
        %v489 = vadd.f32 %v475, %v480
        %v490 = vxor.u32 %v482, 2147483648
        %v491 = vxor.u32 %v483, 2147483648
        %v492 = vxor.u32 %v484, 2147483648
        %v493 = vxor.u32 %v485, 2147483648
        %v494 = vxor.u32 %v486, 2147483648
        %v495 = vxor.u32 %v487, 2147483648
        %v496 = vxor.u32 %v488, 2147483648
        %v497 = vxor.u32 %v489, 2147483648
        %v498 = vmul.f32 %v490, 1.442695
        %v499 = vpow.pop %v498
        %v500 = vmul.f32 %v491, 1.442695
        %v501 = vpow.pop %v500
        %v502 = vmul.f32 %v492, 1.442695
        %v503 = vpow.pop %v502
        %v504 = vmul.f32 %v493, 1.442695
        %v505 = vpow.pop %v504
        %v506 = vmul.f32 %v494, 1.442695
        %v507 = vpow.pop %v506
        %v508 = vmul.f32 %v495, 1.442695
        %v509 = vpow.pop %v508
        %v510 = vmul.f32 %v496, 1.442695
        %v511 = vpow.pop %v510
        %v512 = vmul.f32 %v497, 1.442695
        %v513 = vpow.pop %v512
        %v514 = vadd.f32 %v499, 1.0
        %v515 = vadd.f32 %v501, 1.0
        %v516 = vadd.f32 %v503, 1.0
        %v517 = vadd.f32 %v505, 1.0
        %v518 = vadd.f32 %v507, 1.0
        %v519 = vadd.f32 %v509, 1.0
        %v520 = vadd.f32 %v511, 1.0
        %v521 = vadd.f32 %v513, 1.0
        %v522 = vrcp.pop %v514
        %v523 = vmul.f32 1.0, %v522
        %v524 = vrcp.pop %v515
        %v525 = vmul.f32 1.0, %v524
        %v526 = vrcp.pop %v516
        %v527 = vmul.f32 1.0, %v526
        %v528 = vrcp.pop %v517
        %v529 = vmul.f32 1.0, %v528
        %v530 = vrcp.pop %v518
        %v531 = vmul.f32 1.0, %v530
        %v532 = vrcp.pop %v519
        %v533 = vmul.f32 1.0, %v532
        %v534 = vrcp.pop %v520
        %v535 = vmul.f32 1.0, %v534
        %v536 = vrcp.pop %v521
        %v537 = vmul.f32 1.0, %v536
        %v538 = vmul.f32 %v482, %v523
        %v539 = vmul.f32 %v483, %v525
        %v540 = vmul.f32 %v484, %v527
        %v541 = vmul.f32 %v485, %v529
        %v542 = vmul.f32 %v486, %v531
        %v543 = vmul.f32 %v487, %v533
        %v544 = vmul.f32 %v488, %v535
        %v545 = vmul.f32 %v489, %v537
        %v554 = vcombine.high %v538, %v538
        %v556 = vunpack.c.l.s4 1966171168
        %v557 = vunpack.c.0.s8 %v556
        %v558 = vlaneseq
        %v559 = vshrl.u32 %v558, 7
        %v560 = vsub.s32 %v557, %v559
        %v561 = vrot.slane %v538, %v560
        %v563 = vunpack.c.l.s4 1966171168
        %v564 = vunpack.c.0.s8 %v563
        %v565 = vlaneseq
        %v566 = vshrl.u32 %v565, 7
        %v567 = vsub.s32 %v564, %v566
        %v568 = vrot.slane %v554, %v567
        %v569 = vcombine.high %v561, %v561
        %v570 = vcombine.high %v568, %v568
        %v572 = vunpack.c.l.s4 1966171168
        %v573 = vunpack.c.0.s8 %v572
        %v574 = vlaneseq
        %v575 = vshrl.u32 %v574, 7
        %v576 = vsub.s32 %v573, %v575
        %v577 = vrot.slane %v561, %v576
        %v579 = vunpack.c.l.s4 1966171168
        %v580 = vunpack.c.0.s8 %v579
        %v581 = vlaneseq
        %v582 = vshrl.u32 %v581, 7
        %v583 = vsub.s32 %v580, %v582
        %v584 = vrot.slane %v568, %v583
        %v586 = vunpack.c.l.s4 1966171168
        %v587 = vunpack.c.0.s8 %v586
        %v588 = vlaneseq
        %v589 = vshrl.u32 %v588, 7
        %v590 = vsub.s32 %v587, %v589
        %v591 = vrot.slane %v569, %v590
        %v593 = vunpack.c.l.s4 1966171168
        %v594 = vunpack.c.0.s8 %v593
        %v595 = vlaneseq
        %v596 = vshrl.u32 %v595, 7
        %v597 = vsub.s32 %v594, %v596
        %v598 = vrot.slane %v570, %v597
        %v599 = vcombine.high %v577, %v577
        %v600 = vcombine.high %v584, %v584
        %v601 = vcombine.high %v591, %v591
        %v602 = vcombine.high %v598, %v598
        %v603 = vcombine.high %v539, %v539
        %v605 = vunpack.c.l.s4 1966171168
        %v606 = vunpack.c.0.s8 %v605
        %v607 = vlaneseq
        %v608 = vshrl.u32 %v607, 7
        %v609 = vsub.s32 %v606, %v608
        %v610 = vrot.slane %v539, %v609
        %v612 = vunpack.c.l.s4 1966171168
        %v613 = vunpack.c.0.s8 %v612
        %v614 = vlaneseq
        %v615 = vshrl.u32 %v614, 7
        %v616 = vsub.s32 %v613, %v615
        %v617 = vrot.slane %v603, %v616
        %v618 = vcombine.high %v610, %v610
        %v619 = vcombine.high %v617, %v617
        %v621 = vunpack.c.l.s4 1966171168
        %v622 = vunpack.c.0.s8 %v621
        %v623 = vlaneseq
        %v624 = vshrl.u32 %v623, 7
        %v625 = vsub.s32 %v622, %v624
        %v626 = vrot.slane %v610, %v625
        %v628 = vunpack.c.l.s4 1966171168
        %v629 = vunpack.c.0.s8 %v628
        %v630 = vlaneseq
        %v631 = vshrl.u32 %v630, 7
        %v632 = vsub.s32 %v629, %v631
        %v633 = vrot.slane %v617, %v632
        %v635 = vunpack.c.l.s4 1966171168
        %v636 = vunpack.c.0.s8 %v635
        %v637 = vlaneseq
        %v638 = vshrl.u32 %v637, 7
        %v639 = vsub.s32 %v636, %v638
        %v640 = vrot.slane %v618, %v639
        %v642 = vunpack.c.l.s4 1966171168
        %v643 = vunpack.c.0.s8 %v642
        %v644 = vlaneseq
        %v645 = vshrl.u32 %v644, 7
        %v646 = vsub.s32 %v643, %v645
        %v647 = vrot.slane %v619, %v646
        %v648 = vcombine.high %v626, %v626
        %v649 = vcombine.high %v633, %v633
        %v650 = vcombine.high %v640, %v640
        %v651 = vcombine.high %v647, %v647
        %v652 = vcombine.high %v540, %v540
        %v654 = vunpack.c.l.s4 1966171168
        %v655 = vunpack.c.0.s8 %v654
        %v656 = vlaneseq
        %v657 = vshrl.u32 %v656, 7
        %v658 = vsub.s32 %v655, %v657
        %v659 = vrot.slane %v540, %v658
        %v661 = vunpack.c.l.s4 1966171168
        %v662 = vunpack.c.0.s8 %v661
        %v663 = vlaneseq
        %v664 = vshrl.u32 %v663, 7
        %v665 = vsub.s32 %v662, %v664
        %v666 = vrot.slane %v652, %v665
        %v667 = vcombine.high %v659, %v659
        %v668 = vcombine.high %v666, %v666
        %v670 = vunpack.c.l.s4 1966171168
        %v671 = vunpack.c.0.s8 %v670
        %v672 = vlaneseq
        %v673 = vshrl.u32 %v672, 7
        %v674 = vsub.s32 %v671, %v673
        %v675 = vrot.slane %v659, %v674
        %v677 = vunpack.c.l.s4 1966171168
        %v678 = vunpack.c.0.s8 %v677
        %v679 = vlaneseq
        %v680 = vshrl.u32 %v679, 7
        %v681 = vsub.s32 %v678, %v680
        %v682 = vrot.slane %v666, %v681
        %v684 = vunpack.c.l.s4 1966171168
        %v685 = vunpack.c.0.s8 %v684
        %v686 = vlaneseq
        %v687 = vshrl.u32 %v686, 7
        %v688 = vsub.s32 %v685, %v687
        %v689 = vrot.slane %v667, %v688
        %v691 = vunpack.c.l.s4 1966171168
        %v692 = vunpack.c.0.s8 %v691
        %v693 = vlaneseq
        %v694 = vshrl.u32 %v693, 7
        %v695 = vsub.s32 %v692, %v694
        %v696 = vrot.slane %v668, %v695
        %v697 = vcombine.high %v675, %v675
        %v698 = vcombine.high %v682, %v682
        %v699 = vcombine.high %v689, %v689
        %v700 = vcombine.high %v696, %v696
        %v701 = vcombine.high %v541, %v541
        %v703 = vunpack.c.l.s4 1966171168
        %v704 = vunpack.c.0.s8 %v703
        %v705 = vlaneseq
        %v706 = vshrl.u32 %v705, 7
        %v707 = vsub.s32 %v704, %v706
        %v708 = vrot.slane %v541, %v707
        %v710 = vunpack.c.l.s4 1966171168
        %v711 = vunpack.c.0.s8 %v710
        %v712 = vlaneseq
        %v713 = vshrl.u32 %v712, 7
        %v714 = vsub.s32 %v711, %v713
        %v715 = vrot.slane %v701, %v714
        %v716 = vcombine.high %v708, %v708
        %v717 = vcombine.high %v715, %v715
        %v719 = vunpack.c.l.s4 1966171168
        %v720 = vunpack.c.0.s8 %v719
        %v721 = vlaneseq
        %v722 = vshrl.u32 %v721, 7
        %v723 = vsub.s32 %v720, %v722
        %v724 = vrot.slane %v708, %v723
        %v726 = vunpack.c.l.s4 1966171168
        %v727 = vunpack.c.0.s8 %v726
        %v728 = vlaneseq
        %v729 = vshrl.u32 %v728, 7
        %v730 = vsub.s32 %v727, %v729
        %v731 = vrot.slane %v715, %v730
        %v733 = vunpack.c.l.s4 1966171168
        %v734 = vunpack.c.0.s8 %v733
        %v735 = vlaneseq
        %v736 = vshrl.u32 %v735, 7
        %v737 = vsub.s32 %v734, %v736
        %v738 = vrot.slane %v716, %v737
        %v740 = vunpack.c.l.s4 1966171168
        %v741 = vunpack.c.0.s8 %v740
        %v742 = vlaneseq
        %v743 = vshrl.u32 %v742, 7
        %v744 = vsub.s32 %v741, %v743
        %v745 = vrot.slane %v717, %v744
        %v746 = vcombine.high %v724, %v724
        %v747 = vcombine.high %v731, %v731
        %v748 = vcombine.high %v738, %v738
        %v749 = vcombine.high %v745, %v745
        %v750 = vcombine.high %v542, %v542
        %v752 = vunpack.c.l.s4 1966171168
        %v753 = vunpack.c.0.s8 %v752
        %v754 = vlaneseq
        %v755 = vshrl.u32 %v754, 7
        %v756 = vsub.s32 %v753, %v755
        %v757 = vrot.slane %v542, %v756
        %v759 = vunpack.c.l.s4 1966171168
        %v760 = vunpack.c.0.s8 %v759
        %v761 = vlaneseq
        %v762 = vshrl.u32 %v761, 7
        %v763 = vsub.s32 %v760, %v762
        %v764 = vrot.slane %v750, %v763
        %v765 = vcombine.high %v757, %v757
        %v766 = vcombine.high %v764, %v764
        %v768 = vunpack.c.l.s4 1966171168
        %v769 = vunpack.c.0.s8 %v768
        %v770 = vlaneseq
        %v771 = vshrl.u32 %v770, 7
        %v772 = vsub.s32 %v769, %v771
        %v773 = vrot.slane %v757, %v772
        %v775 = vunpack.c.l.s4 1966171168
        %v776 = vunpack.c.0.s8 %v775
        %v777 = vlaneseq
        %v778 = vshrl.u32 %v777, 7
        %v779 = vsub.s32 %v776, %v778
        %v780 = vrot.slane %v764, %v779
        %v782 = vunpack.c.l.s4 1966171168
        %v783 = vunpack.c.0.s8 %v782
        %v784 = vlaneseq
        %v785 = vshrl.u32 %v784, 7
        %v786 = vsub.s32 %v783, %v785
        %v787 = vrot.slane %v765, %v786
        %v789 = vunpack.c.l.s4 1966171168
        %v790 = vunpack.c.0.s8 %v789
        %v791 = vlaneseq
        %v792 = vshrl.u32 %v791, 7
        %v793 = vsub.s32 %v790, %v792
        %v794 = vrot.slane %v766, %v793
        %v795 = vcombine.high %v773, %v773
        %v796 = vcombine.high %v780, %v780
        %v797 = vcombine.high %v787, %v787
        %v798 = vcombine.high %v794, %v794
        %v799 = vcombine.high %v543, %v543
        %v801 = vunpack.c.l.s4 1966171168
        %v802 = vunpack.c.0.s8 %v801
        %v803 = vlaneseq
        %v804 = vshrl.u32 %v803, 7
        %v805 = vsub.s32 %v802, %v804
        %v806 = vrot.slane %v543, %v805
        %v808 = vunpack.c.l.s4 1966171168
        %v809 = vunpack.c.0.s8 %v808
        %v810 = vlaneseq
        %v811 = vshrl.u32 %v810, 7
        %v812 = vsub.s32 %v809, %v811
        %v813 = vrot.slane %v799, %v812
        %v814 = vcombine.high %v806, %v806
        %v815 = vcombine.high %v813, %v813
        %v817 = vunpack.c.l.s4 1966171168
        %v818 = vunpack.c.0.s8 %v817
        %v819 = vlaneseq
        %v820 = vshrl.u32 %v819, 7
        %v821 = vsub.s32 %v818, %v820
        %v822 = vrot.slane %v806, %v821
        %v824 = vunpack.c.l.s4 1966171168
        %v825 = vunpack.c.0.s8 %v824
        %v826 = vlaneseq
        %v827 = vshrl.u32 %v826, 7
        %v828 = vsub.s32 %v825, %v827
        %v829 = vrot.slane %v813, %v828
        %v831 = vunpack.c.l.s4 1966171168
        %v832 = vunpack.c.0.s8 %v831
        %v833 = vlaneseq
        %v834 = vshrl.u32 %v833, 7
        %v835 = vsub.s32 %v832, %v834
        %v836 = vrot.slane %v814, %v835
        %v838 = vunpack.c.l.s4 1966171168
        %v839 = vunpack.c.0.s8 %v838
        %v840 = vlaneseq
        %v841 = vshrl.u32 %v840, 7
        %v842 = vsub.s32 %v839, %v841
        %v843 = vrot.slane %v815, %v842
        %v844 = vcombine.high %v822, %v822
        %v845 = vcombine.high %v829, %v829
        %v846 = vcombine.high %v836, %v836
        %v847 = vcombine.high %v843, %v843
        %v848 = vcombine.high %v544, %v544
        %v850 = vunpack.c.l.s4 1966171168
        %v851 = vunpack.c.0.s8 %v850
        %v852 = vlaneseq
        %v853 = vshrl.u32 %v852, 7
        %v854 = vsub.s32 %v851, %v853
        %v855 = vrot.slane %v544, %v854
        %v857 = vunpack.c.l.s4 1966171168
        %v858 = vunpack.c.0.s8 %v857
        %v859 = vlaneseq
        %v860 = vshrl.u32 %v859, 7
        %v861 = vsub.s32 %v858, %v860
        %v862 = vrot.slane %v848, %v861
        %v863 = vcombine.high %v855, %v855
        %v864 = vcombine.high %v862, %v862
        %v866 = vunpack.c.l.s4 1966171168
        %v867 = vunpack.c.0.s8 %v866
        %v868 = vlaneseq
        %v869 = vshrl.u32 %v868, 7
        %v870 = vsub.s32 %v867, %v869
        %v871 = vrot.slane %v855, %v870
        %v873 = vunpack.c.l.s4 1966171168
        %v874 = vunpack.c.0.s8 %v873
        %v875 = vlaneseq
        %v876 = vshrl.u32 %v875, 7
        %v877 = vsub.s32 %v874, %v876
        %v878 = vrot.slane %v862, %v877
        %v880 = vunpack.c.l.s4 1966171168
        %v881 = vunpack.c.0.s8 %v880
        %v882 = vlaneseq
        %v883 = vshrl.u32 %v882, 7
        %v884 = vsub.s32 %v881, %v883
        %v885 = vrot.slane %v863, %v884
        %v887 = vunpack.c.l.s4 1966171168
        %v888 = vunpack.c.0.s8 %v887
        %v889 = vlaneseq
        %v890 = vshrl.u32 %v889, 7
        %v891 = vsub.s32 %v888, %v890
        %v892 = vrot.slane %v864, %v891
        %v893 = vcombine.high %v871, %v871
        %v894 = vcombine.high %v878, %v878
        %v895 = vcombine.high %v885, %v885
        %v896 = vcombine.high %v892, %v892
        %v897 = vcombine.high %v545, %v545
        %v899 = vunpack.c.l.s4 1966171168
        %v900 = vunpack.c.0.s8 %v899
        %v901 = vlaneseq
        %v902 = vshrl.u32 %v901, 7
        %v903 = vsub.s32 %v900, %v902
        %v904 = vrot.slane %v545, %v903
        %v906 = vunpack.c.l.s4 1966171168
        %v907 = vunpack.c.0.s8 %v906
        %v908 = vlaneseq
        %v909 = vshrl.u32 %v908, 7
        %v910 = vsub.s32 %v907, %v909
        %v911 = vrot.slane %v897, %v910
        %v912 = vcombine.high %v904, %v904
        %v913 = vcombine.high %v911, %v911
        %v915 = vunpack.c.l.s4 1966171168
        %v916 = vunpack.c.0.s8 %v915
        %v917 = vlaneseq
        %v918 = vshrl.u32 %v917, 7
        %v919 = vsub.s32 %v916, %v918
        %v920 = vrot.slane %v904, %v919
        %v922 = vunpack.c.l.s4 1966171168
        %v923 = vunpack.c.0.s8 %v922
        %v924 = vlaneseq
        %v925 = vshrl.u32 %v924, 7
        %v926 = vsub.s32 %v923, %v925
        %v927 = vrot.slane %v911, %v926
        %v929 = vunpack.c.l.s4 1966171168
        %v930 = vunpack.c.0.s8 %v929
        %v931 = vlaneseq
        %v932 = vshrl.u32 %v931, 7
        %v933 = vsub.s32 %v930, %v932
        %v934 = vrot.slane %v912, %v933
        %v936 = vunpack.c.l.s4 1966171168
        %v937 = vunpack.c.0.s8 %v936
        %v938 = vlaneseq
        %v939 = vshrl.u32 %v938, 7
        %v940 = vsub.s32 %v937, %v939
        %v941 = vrot.slane %v913, %v940
        %v942 = vcombine.high %v920, %v920
        %v943 = vcombine.high %v927, %v927
        %v944 = vcombine.high %v934, %v934
        %v945 = vcombine.high %v941, %v941
        %v946 = vlaneseq
        %v947 = vshrl.u32 %v946, 7
        %v948 = vsub.s32 0, %v947
        %v949 = vrot.slane %v577, %v948
        %v950 = vlaneseq
        %v951 = vshrl.u32 %v950, 7
        %v952 = vsub.s32 0, %v951
        %v953 = vrot.slane %v591, %v952
        %v954 = vlaneseq
        %v955 = vshrl.u32 %v954, 7
        %v956 = vsub.s32 0, %v955
        %v957 = vrot.slane %v599, %v956
        %v958 = vlaneseq
        %v959 = vshrl.u32 %v958, 7
        %v960 = vsub.s32 0, %v959
        %v961 = vrot.slane %v601, %v960
        %v962 = vlaneseq
        %v963 = vshrl.u32 %v962, 7
        %v964 = vsub.s32 0, %v963
        %v965 = vrot.slane %v584, %v964
        %v966 = vlaneseq
        %v967 = vshrl.u32 %v966, 7
        %v968 = vsub.s32 0, %v967
        %v969 = vrot.slane %v598, %v968
        %v970 = vlaneseq
        %v971 = vshrl.u32 %v970, 7
        %v972 = vsub.s32 0, %v971
        %v973 = vrot.slane %v600, %v972
        %v974 = vlaneseq
        %v975 = vshrl.u32 %v974, 7
        %v976 = vsub.s32 0, %v975
        %v977 = vrot.slane %v602, %v976
        %v978 = vlaneseq
        %v979 = vshrl.u32 %v978, 7
        %v980 = vsub.s32 0, %v979
        %v981 = vrot.slane %v626, %v980
        %v982 = vlaneseq
        %v983 = vshrl.u32 %v982, 7
        %v984 = vsub.s32 0, %v983
        %v985 = vrot.slane %v640, %v984
        %v986 = vlaneseq
        %v987 = vshrl.u32 %v986, 7
        %v988 = vsub.s32 0, %v987
        %v989 = vrot.slane %v648, %v988
        %v990 = vlaneseq
        %v991 = vshrl.u32 %v990, 7
        %v992 = vsub.s32 0, %v991
        %v993 = vrot.slane %v650, %v992
        %v994 = vlaneseq
        %v995 = vshrl.u32 %v994, 7
        %v996 = vsub.s32 0, %v995
        %v997 = vrot.slane %v633, %v996
        %v998 = vlaneseq
        %v999 = vshrl.u32 %v998, 7
        %v1000 = vsub.s32 0, %v999
        %v1001 = vrot.slane %v647, %v1000
        %v1002 = vlaneseq
        %v1003 = vshrl.u32 %v1002, 7
        %v1004 = vsub.s32 0, %v1003
        %v1005 = vrot.slane %v649, %v1004
        %v1006 = vlaneseq
        %v1007 = vshrl.u32 %v1006, 7
        %v1008 = vsub.s32 0, %v1007
        %v1009 = vrot.slane %v651, %v1008
        %v1010 = vlaneseq
        %v1011 = vshrl.u32 %v1010, 7
        %v1012 = vsub.s32 0, %v1011
        %v1013 = vrot.slane %v675, %v1012
        %v1014 = vlaneseq
        %v1015 = vshrl.u32 %v1014, 7
        %v1016 = vsub.s32 0, %v1015
        %v1017 = vrot.slane %v689, %v1016
        %v1018 = vlaneseq
        %v1019 = vshrl.u32 %v1018, 7
        %v1020 = vsub.s32 0, %v1019
        %v1021 = vrot.slane %v697, %v1020
        %v1022 = vlaneseq
        %v1023 = vshrl.u32 %v1022, 7
        %v1024 = vsub.s32 0, %v1023
        %v1025 = vrot.slane %v699, %v1024
        %v1026 = vlaneseq
        %v1027 = vshrl.u32 %v1026, 7
        %v1028 = vsub.s32 0, %v1027
        %v1029 = vrot.slane %v682, %v1028
        %v1030 = vlaneseq
        %v1031 = vshrl.u32 %v1030, 7
        %v1032 = vsub.s32 0, %v1031
        %v1033 = vrot.slane %v696, %v1032
        %v1034 = vlaneseq
        %v1035 = vshrl.u32 %v1034, 7
        %v1036 = vsub.s32 0, %v1035
        %v1037 = vrot.slane %v698, %v1036
        %v1038 = vlaneseq
        %v1039 = vshrl.u32 %v1038, 7
        %v1040 = vsub.s32 0, %v1039
        %v1041 = vrot.slane %v700, %v1040
        %v1042 = vlaneseq
        %v1043 = vshrl.u32 %v1042, 7
        %v1044 = vsub.s32 0, %v1043
        %v1045 = vrot.slane %v724, %v1044
        %v1046 = vlaneseq
        %v1047 = vshrl.u32 %v1046, 7
        %v1048 = vsub.s32 0, %v1047
        %v1049 = vrot.slane %v738, %v1048
        %v1050 = vlaneseq
        %v1051 = vshrl.u32 %v1050, 7
        %v1052 = vsub.s32 0, %v1051
        %v1053 = vrot.slane %v746, %v1052
        %v1054 = vlaneseq
        %v1055 = vshrl.u32 %v1054, 7
        %v1056 = vsub.s32 0, %v1055
        %v1057 = vrot.slane %v748, %v1056
        %v1058 = vlaneseq
        %v1059 = vshrl.u32 %v1058, 7
        %v1060 = vsub.s32 0, %v1059
        %v1061 = vrot.slane %v731, %v1060
        %v1062 = vlaneseq
        %v1063 = vshrl.u32 %v1062, 7
        %v1064 = vsub.s32 0, %v1063
        %v1065 = vrot.slane %v745, %v1064
        %v1066 = vlaneseq
        %v1067 = vshrl.u32 %v1066, 7
        %v1068 = vsub.s32 0, %v1067
        %v1069 = vrot.slane %v747, %v1068
        %v1070 = vlaneseq
        %v1071 = vshrl.u32 %v1070, 7
        %v1072 = vsub.s32 0, %v1071
        %v1073 = vrot.slane %v749, %v1072
        %v1074 = vlaneseq
        %v1075 = vshrl.u32 %v1074, 7
        %v1076 = vsub.s32 0, %v1075
        %v1077 = vrot.slane %v773, %v1076
        %v1078 = vlaneseq
        %v1079 = vshrl.u32 %v1078, 7
        %v1080 = vsub.s32 0, %v1079
        %v1081 = vrot.slane %v787, %v1080
        %v1082 = vlaneseq
        %v1083 = vshrl.u32 %v1082, 7
        %v1084 = vsub.s32 0, %v1083
        %v1085 = vrot.slane %v795, %v1084
        %v1086 = vlaneseq
        %v1087 = vshrl.u32 %v1086, 7
        %v1088 = vsub.s32 0, %v1087
        %v1089 = vrot.slane %v797, %v1088
        %v1090 = vlaneseq
        %v1091 = vshrl.u32 %v1090, 7
        %v1092 = vsub.s32 0, %v1091
        %v1093 = vrot.slane %v780, %v1092
        %v1094 = vlaneseq
        %v1095 = vshrl.u32 %v1094, 7
        %v1096 = vsub.s32 0, %v1095
        %v1097 = vrot.slane %v794, %v1096
        %v1098 = vlaneseq
        %v1099 = vshrl.u32 %v1098, 7
        %v1100 = vsub.s32 0, %v1099
        %v1101 = vrot.slane %v796, %v1100
        %v1102 = vlaneseq
        %v1103 = vshrl.u32 %v1102, 7
        %v1104 = vsub.s32 0, %v1103
        %v1105 = vrot.slane %v798, %v1104
        %v1106 = vlaneseq
        %v1107 = vshrl.u32 %v1106, 7
        %v1108 = vsub.s32 0, %v1107
        %v1109 = vrot.slane %v822, %v1108
        %v1110 = vlaneseq
        %v1111 = vshrl.u32 %v1110, 7
        %v1112 = vsub.s32 0, %v1111
        %v1113 = vrot.slane %v836, %v1112
        %v1114 = vlaneseq
        %v1115 = vshrl.u32 %v1114, 7
        %v1116 = vsub.s32 0, %v1115
        %v1117 = vrot.slane %v844, %v1116
        %v1118 = vlaneseq
        %v1119 = vshrl.u32 %v1118, 7
        %v1120 = vsub.s32 0, %v1119
        %v1121 = vrot.slane %v846, %v1120
        %v1122 = vlaneseq
        %v1123 = vshrl.u32 %v1122, 7
        %v1124 = vsub.s32 0, %v1123
        %v1125 = vrot.slane %v829, %v1124
        %v1126 = vlaneseq
        %v1127 = vshrl.u32 %v1126, 7
        %v1128 = vsub.s32 0, %v1127
        %v1129 = vrot.slane %v843, %v1128
        %v1130 = vlaneseq
        %v1131 = vshrl.u32 %v1130, 7
        %v1132 = vsub.s32 0, %v1131
        %v1133 = vrot.slane %v845, %v1132
        %v1134 = vlaneseq
        %v1135 = vshrl.u32 %v1134, 7
        %v1136 = vsub.s32 0, %v1135
        %v1137 = vrot.slane %v847, %v1136
        %v1138 = vlaneseq
        %v1139 = vshrl.u32 %v1138, 7
        %v1140 = vsub.s32 0, %v1139
        %v1141 = vrot.slane %v871, %v1140
        %v1142 = vlaneseq
        %v1143 = vshrl.u32 %v1142, 7
        %v1144 = vsub.s32 0, %v1143
        %v1145 = vrot.slane %v885, %v1144
        %v1146 = vlaneseq
        %v1147 = vshrl.u32 %v1146, 7
        %v1148 = vsub.s32 0, %v1147
        %v1149 = vrot.slane %v893, %v1148
        %v1150 = vlaneseq
        %v1151 = vshrl.u32 %v1150, 7
        %v1152 = vsub.s32 0, %v1151
        %v1153 = vrot.slane %v895, %v1152
        %v1154 = vlaneseq
        %v1155 = vshrl.u32 %v1154, 7
        %v1156 = vsub.s32 0, %v1155
        %v1157 = vrot.slane %v878, %v1156
        %v1158 = vlaneseq
        %v1159 = vshrl.u32 %v1158, 7
        %v1160 = vsub.s32 0, %v1159
        %v1161 = vrot.slane %v892, %v1160
        %v1162 = vlaneseq
        %v1163 = vshrl.u32 %v1162, 7
        %v1164 = vsub.s32 0, %v1163
        %v1165 = vrot.slane %v894, %v1164
        %v1166 = vlaneseq
        %v1167 = vshrl.u32 %v1166, 7
        %v1168 = vsub.s32 0, %v1167
        %v1169 = vrot.slane %v896, %v1168
        %v1170 = vlaneseq
        %v1171 = vshrl.u32 %v1170, 7
        %v1172 = vsub.s32 0, %v1171
        %v1173 = vrot.slane %v920, %v1172
        %v1174 = vlaneseq
        %v1175 = vshrl.u32 %v1174, 7
        %v1176 = vsub.s32 0, %v1175
        %v1177 = vrot.slane %v934, %v1176
        %v1178 = vlaneseq
        %v1179 = vshrl.u32 %v1178, 7
        %v1180 = vsub.s32 0, %v1179
        %v1181 = vrot.slane %v942, %v1180
        %v1182 = vlaneseq
        %v1183 = vshrl.u32 %v1182, 7
        %v1184 = vsub.s32 0, %v1183
        %v1185 = vrot.slane %v944, %v1184
        %v1186 = vlaneseq
        %v1187 = vshrl.u32 %v1186, 7
        %v1188 = vsub.s32 0, %v1187
        %v1189 = vrot.slane %v927, %v1188
        %v1190 = vlaneseq
        %v1191 = vshrl.u32 %v1190, 7
        %v1192 = vsub.s32 0, %v1191
        %v1193 = vrot.slane %v941, %v1192
        %v1194 = vlaneseq
        %v1195 = vshrl.u32 %v1194, 7
        %v1196 = vsub.s32 0, %v1195
        %v1197 = vrot.slane %v943, %v1196
        %v1198 = vlaneseq
        %v1199 = vshrl.u32 %v1198, 7
        %v1200 = vsub.s32 0, %v1199
        %v1201 = vrot.slane %v945, %v1200
        %v1210 = vcombine.high %v382, %v382
        %v1212 = vunpack.c.l.s4 1966171168
        %v1213 = vunpack.c.0.s8 %v1212
        %v1214 = vlaneseq
        %v1215 = vshrl.u32 %v1214, 7
        %v1216 = vsub.s32 %v1213, %v1215
        %v1217 = vrot.slane %v382, %v1216
        %v1219 = vunpack.c.l.s4 1966171168
        %v1220 = vunpack.c.0.s8 %v1219
        %v1221 = vlaneseq
        %v1222 = vshrl.u32 %v1221, 7
        %v1223 = vsub.s32 %v1220, %v1222
        %v1224 = vrot.slane %v1210, %v1223
        %v1225 = vcombine.high %v1217, %v1217
        %v1226 = vcombine.high %v1224, %v1224
        %v1228 = vunpack.c.l.s4 1966171168
        %v1229 = vunpack.c.0.s8 %v1228
        %v1230 = vlaneseq
        %v1231 = vshrl.u32 %v1230, 7
        %v1232 = vsub.s32 %v1229, %v1231
        %v1233 = vrot.slane %v1217, %v1232
        %v1235 = vunpack.c.l.s4 1966171168
        %v1236 = vunpack.c.0.s8 %v1235
        %v1237 = vlaneseq
        %v1238 = vshrl.u32 %v1237, 7
        %v1239 = vsub.s32 %v1236, %v1238
        %v1240 = vrot.slane %v1224, %v1239
        %v1242 = vunpack.c.l.s4 1966171168
        %v1243 = vunpack.c.0.s8 %v1242
        %v1244 = vlaneseq
        %v1245 = vshrl.u32 %v1244, 7
        %v1246 = vsub.s32 %v1243, %v1245
        %v1247 = vrot.slane %v1225, %v1246
        %v1249 = vunpack.c.l.s4 1966171168
        %v1250 = vunpack.c.0.s8 %v1249
        %v1251 = vlaneseq
        %v1252 = vshrl.u32 %v1251, 7
        %v1253 = vsub.s32 %v1250, %v1252
        %v1254 = vrot.slane %v1226, %v1253
        %v1255 = vcombine.high %v1233, %v1233
        %v1256 = vcombine.high %v1240, %v1240
        %v1257 = vcombine.high %v1247, %v1247
        %v1258 = vcombine.high %v1254, %v1254
        %v1259 = vcombine.high %v383, %v383
        %v1261 = vunpack.c.l.s4 1966171168
        %v1262 = vunpack.c.0.s8 %v1261
        %v1263 = vlaneseq
        %v1264 = vshrl.u32 %v1263, 7
        %v1265 = vsub.s32 %v1262, %v1264
        %v1266 = vrot.slane %v383, %v1265
        %v1268 = vunpack.c.l.s4 1966171168
        %v1269 = vunpack.c.0.s8 %v1268
        %v1270 = vlaneseq
        %v1271 = vshrl.u32 %v1270, 7
        %v1272 = vsub.s32 %v1269, %v1271
        %v1273 = vrot.slane %v1259, %v1272
        %v1274 = vcombine.high %v1266, %v1266
        %v1275 = vcombine.high %v1273, %v1273
        %v1277 = vunpack.c.l.s4 1966171168
        %v1278 = vunpack.c.0.s8 %v1277
        %v1279 = vlaneseq
        %v1280 = vshrl.u32 %v1279, 7
        %v1281 = vsub.s32 %v1278, %v1280
        %v1282 = vrot.slane %v1266, %v1281
        %v1284 = vunpack.c.l.s4 1966171168
        %v1285 = vunpack.c.0.s8 %v1284
        %v1286 = vlaneseq
        %v1287 = vshrl.u32 %v1286, 7
        %v1288 = vsub.s32 %v1285, %v1287
        %v1289 = vrot.slane %v1273, %v1288
        %v1291 = vunpack.c.l.s4 1966171168
        %v1292 = vunpack.c.0.s8 %v1291
        %v1293 = vlaneseq
        %v1294 = vshrl.u32 %v1293, 7
        %v1295 = vsub.s32 %v1292, %v1294
        %v1296 = vrot.slane %v1274, %v1295
        %v1298 = vunpack.c.l.s4 1966171168
        %v1299 = vunpack.c.0.s8 %v1298
        %v1300 = vlaneseq
        %v1301 = vshrl.u32 %v1300, 7
        %v1302 = vsub.s32 %v1299, %v1301
        %v1303 = vrot.slane %v1275, %v1302
        %v1304 = vcombine.high %v1282, %v1282
        %v1305 = vcombine.high %v1289, %v1289
        %v1306 = vcombine.high %v1296, %v1296
        %v1307 = vcombine.high %v1303, %v1303
        %v1308 = vcombine.high %v384, %v384
        %v1310 = vunpack.c.l.s4 1966171168
        %v1311 = vunpack.c.0.s8 %v1310
        %v1312 = vlaneseq
        %v1313 = vshrl.u32 %v1312, 7
        %v1314 = vsub.s32 %v1311, %v1313
        %v1315 = vrot.slane %v384, %v1314
        %v1317 = vunpack.c.l.s4 1966171168
        %v1318 = vunpack.c.0.s8 %v1317
        %v1319 = vlaneseq
        %v1320 = vshrl.u32 %v1319, 7
        %v1321 = vsub.s32 %v1318, %v1320
        %v1322 = vrot.slane %v1308, %v1321
        %v1323 = vcombine.high %v1315, %v1315
        %v1324 = vcombine.high %v1322, %v1322
        %v1326 = vunpack.c.l.s4 1966171168
        %v1327 = vunpack.c.0.s8 %v1326
        %v1328 = vlaneseq
        %v1329 = vshrl.u32 %v1328, 7
        %v1330 = vsub.s32 %v1327, %v1329
        %v1331 = vrot.slane %v1315, %v1330
        %v1333 = vunpack.c.l.s4 1966171168
        %v1334 = vunpack.c.0.s8 %v1333
        %v1335 = vlaneseq
        %v1336 = vshrl.u32 %v1335, 7
        %v1337 = vsub.s32 %v1334, %v1336
        %v1338 = vrot.slane %v1322, %v1337
        %v1340 = vunpack.c.l.s4 1966171168
        %v1341 = vunpack.c.0.s8 %v1340
        %v1342 = vlaneseq
        %v1343 = vshrl.u32 %v1342, 7
        %v1344 = vsub.s32 %v1341, %v1343
        %v1345 = vrot.slane %v1323, %v1344
        %v1347 = vunpack.c.l.s4 1966171168
        %v1348 = vunpack.c.0.s8 %v1347
        %v1349 = vlaneseq
        %v1350 = vshrl.u32 %v1349, 7
        %v1351 = vsub.s32 %v1348, %v1350
        %v1352 = vrot.slane %v1324, %v1351
        %v1353 = vcombine.high %v1331, %v1331
        %v1354 = vcombine.high %v1338, %v1338
        %v1355 = vcombine.high %v1345, %v1345
        %v1356 = vcombine.high %v1352, %v1352
        %v1357 = vcombine.high %v385, %v385
        %v1359 = vunpack.c.l.s4 1966171168
        %v1360 = vunpack.c.0.s8 %v1359
        %v1361 = vlaneseq
        %v1362 = vshrl.u32 %v1361, 7
        %v1363 = vsub.s32 %v1360, %v1362
        %v1364 = vrot.slane %v385, %v1363
        %v1366 = vunpack.c.l.s4 1966171168
        %v1367 = vunpack.c.0.s8 %v1366
        %v1368 = vlaneseq
        %v1369 = vshrl.u32 %v1368, 7
        %v1370 = vsub.s32 %v1367, %v1369
        %v1371 = vrot.slane %v1357, %v1370
        %v1372 = vcombine.high %v1364, %v1364
        %v1373 = vcombine.high %v1371, %v1371
        %v1375 = vunpack.c.l.s4 1966171168
        %v1376 = vunpack.c.0.s8 %v1375
        %v1377 = vlaneseq
        %v1378 = vshrl.u32 %v1377, 7
        %v1379 = vsub.s32 %v1376, %v1378
        %v1380 = vrot.slane %v1364, %v1379
        %v1382 = vunpack.c.l.s4 1966171168
        %v1383 = vunpack.c.0.s8 %v1382
        %v1384 = vlaneseq
        %v1385 = vshrl.u32 %v1384, 7
        %v1386 = vsub.s32 %v1383, %v1385
        %v1387 = vrot.slane %v1371, %v1386
        %v1389 = vunpack.c.l.s4 1966171168
        %v1390 = vunpack.c.0.s8 %v1389
        %v1391 = vlaneseq
        %v1392 = vshrl.u32 %v1391, 7
        %v1393 = vsub.s32 %v1390, %v1392
        %v1394 = vrot.slane %v1372, %v1393
        %v1396 = vunpack.c.l.s4 1966171168
        %v1397 = vunpack.c.0.s8 %v1396
        %v1398 = vlaneseq
        %v1399 = vshrl.u32 %v1398, 7
        %v1400 = vsub.s32 %v1397, %v1399
        %v1401 = vrot.slane %v1373, %v1400
        %v1402 = vcombine.high %v1380, %v1380
        %v1403 = vcombine.high %v1387, %v1387
        %v1404 = vcombine.high %v1394, %v1394
        %v1405 = vcombine.high %v1401, %v1401
        %v1406 = vcombine.high %v386, %v386
        %v1408 = vunpack.c.l.s4 1966171168
        %v1409 = vunpack.c.0.s8 %v1408
        %v1410 = vlaneseq
        %v1411 = vshrl.u32 %v1410, 7
        %v1412 = vsub.s32 %v1409, %v1411
        %v1413 = vrot.slane %v386, %v1412
        %v1415 = vunpack.c.l.s4 1966171168
        %v1416 = vunpack.c.0.s8 %v1415
        %v1417 = vlaneseq
        %v1418 = vshrl.u32 %v1417, 7
        %v1419 = vsub.s32 %v1416, %v1418
        %v1420 = vrot.slane %v1406, %v1419
        %v1421 = vcombine.high %v1413, %v1413
        %v1422 = vcombine.high %v1420, %v1420
        %v1424 = vunpack.c.l.s4 1966171168
        %v1425 = vunpack.c.0.s8 %v1424
        %v1426 = vlaneseq
        %v1427 = vshrl.u32 %v1426, 7
        %v1428 = vsub.s32 %v1425, %v1427
        %v1429 = vrot.slane %v1413, %v1428
        %v1431 = vunpack.c.l.s4 1966171168
        %v1432 = vunpack.c.0.s8 %v1431
        %v1433 = vlaneseq
        %v1434 = vshrl.u32 %v1433, 7
        %v1435 = vsub.s32 %v1432, %v1434
        %v1436 = vrot.slane %v1420, %v1435
        %v1438 = vunpack.c.l.s4 1966171168
        %v1439 = vunpack.c.0.s8 %v1438
        %v1440 = vlaneseq
        %v1441 = vshrl.u32 %v1440, 7
        %v1442 = vsub.s32 %v1439, %v1441
        %v1443 = vrot.slane %v1421, %v1442
        %v1445 = vunpack.c.l.s4 1966171168
        %v1446 = vunpack.c.0.s8 %v1445
        %v1447 = vlaneseq
        %v1448 = vshrl.u32 %v1447, 7
        %v1449 = vsub.s32 %v1446, %v1448
        %v1450 = vrot.slane %v1422, %v1449
        %v1451 = vcombine.high %v1429, %v1429
        %v1452 = vcombine.high %v1436, %v1436
        %v1453 = vcombine.high %v1443, %v1443
        %v1454 = vcombine.high %v1450, %v1450
        %v1455 = vcombine.high %v387, %v387
        %v1457 = vunpack.c.l.s4 1966171168
        %v1458 = vunpack.c.0.s8 %v1457
        %v1459 = vlaneseq
        %v1460 = vshrl.u32 %v1459, 7
        %v1461 = vsub.s32 %v1458, %v1460
        %v1462 = vrot.slane %v387, %v1461
        %v1464 = vunpack.c.l.s4 1966171168
        %v1465 = vunpack.c.0.s8 %v1464
        %v1466 = vlaneseq
        %v1467 = vshrl.u32 %v1466, 7
        %v1468 = vsub.s32 %v1465, %v1467
        %v1469 = vrot.slane %v1455, %v1468
        %v1470 = vcombine.high %v1462, %v1462
        %v1471 = vcombine.high %v1469, %v1469
        %v1473 = vunpack.c.l.s4 1966171168
        %v1474 = vunpack.c.0.s8 %v1473
        %v1475 = vlaneseq
        %v1476 = vshrl.u32 %v1475, 7
        %v1477 = vsub.s32 %v1474, %v1476
        %v1478 = vrot.slane %v1462, %v1477
        %v1480 = vunpack.c.l.s4 1966171168
        %v1481 = vunpack.c.0.s8 %v1480
        %v1482 = vlaneseq
        %v1483 = vshrl.u32 %v1482, 7
        %v1484 = vsub.s32 %v1481, %v1483
        %v1485 = vrot.slane %v1469, %v1484
        %v1487 = vunpack.c.l.s4 1966171168
        %v1488 = vunpack.c.0.s8 %v1487
        %v1489 = vlaneseq
        %v1490 = vshrl.u32 %v1489, 7
        %v1491 = vsub.s32 %v1488, %v1490
        %v1492 = vrot.slane %v1470, %v1491
        %v1494 = vunpack.c.l.s4 1966171168
        %v1495 = vunpack.c.0.s8 %v1494
        %v1496 = vlaneseq
        %v1497 = vshrl.u32 %v1496, 7
        %v1498 = vsub.s32 %v1495, %v1497
        %v1499 = vrot.slane %v1471, %v1498
        %v1500 = vcombine.high %v1478, %v1478
        %v1501 = vcombine.high %v1485, %v1485
        %v1502 = vcombine.high %v1492, %v1492
        %v1503 = vcombine.high %v1499, %v1499
        %v1504 = vcombine.high %v388, %v388
        %v1506 = vunpack.c.l.s4 1966171168
        %v1507 = vunpack.c.0.s8 %v1506
        %v1508 = vlaneseq
        %v1509 = vshrl.u32 %v1508, 7
        %v1510 = vsub.s32 %v1507, %v1509
        %v1511 = vrot.slane %v388, %v1510
        %v1513 = vunpack.c.l.s4 1966171168
        %v1514 = vunpack.c.0.s8 %v1513
        %v1515 = vlaneseq
        %v1516 = vshrl.u32 %v1515, 7
        %v1517 = vsub.s32 %v1514, %v1516
        %v1518 = vrot.slane %v1504, %v1517
        %v1519 = vcombine.high %v1511, %v1511
        %v1520 = vcombine.high %v1518, %v1518
        %v1522 = vunpack.c.l.s4 1966171168
        %v1523 = vunpack.c.0.s8 %v1522
        %v1524 = vlaneseq
        %v1525 = vshrl.u32 %v1524, 7
        %v1526 = vsub.s32 %v1523, %v1525
        %v1527 = vrot.slane %v1511, %v1526
        %v1529 = vunpack.c.l.s4 1966171168
        %v1530 = vunpack.c.0.s8 %v1529
        %v1531 = vlaneseq
        %v1532 = vshrl.u32 %v1531, 7
        %v1533 = vsub.s32 %v1530, %v1532
        %v1534 = vrot.slane %v1518, %v1533
        %v1536 = vunpack.c.l.s4 1966171168
        %v1537 = vunpack.c.0.s8 %v1536
        %v1538 = vlaneseq
        %v1539 = vshrl.u32 %v1538, 7
        %v1540 = vsub.s32 %v1537, %v1539
        %v1541 = vrot.slane %v1519, %v1540
        %v1543 = vunpack.c.l.s4 1966171168
        %v1544 = vunpack.c.0.s8 %v1543
        %v1545 = vlaneseq
        %v1546 = vshrl.u32 %v1545, 7
        %v1547 = vsub.s32 %v1544, %v1546
        %v1548 = vrot.slane %v1520, %v1547
        %v1549 = vcombine.high %v1527, %v1527
        %v1550 = vcombine.high %v1534, %v1534
        %v1551 = vcombine.high %v1541, %v1541
        %v1552 = vcombine.high %v1548, %v1548
        %v1553 = vcombine.high %v389, %v389
        %v1555 = vunpack.c.l.s4 1966171168
        %v1556 = vunpack.c.0.s8 %v1555
        %v1557 = vlaneseq
        %v1558 = vshrl.u32 %v1557, 7
        %v1559 = vsub.s32 %v1556, %v1558
        %v1560 = vrot.slane %v389, %v1559
        %v1562 = vunpack.c.l.s4 1966171168
        %v1563 = vunpack.c.0.s8 %v1562
        %v1564 = vlaneseq
        %v1565 = vshrl.u32 %v1564, 7
        %v1566 = vsub.s32 %v1563, %v1565
        %v1567 = vrot.slane %v1553, %v1566
        %v1568 = vcombine.high %v1560, %v1560
        %v1569 = vcombine.high %v1567, %v1567
        %v1571 = vunpack.c.l.s4 1966171168
        %v1572 = vunpack.c.0.s8 %v1571
        %v1573 = vlaneseq
        %v1574 = vshrl.u32 %v1573, 7
        %v1575 = vsub.s32 %v1572, %v1574
        %v1576 = vrot.slane %v1560, %v1575
        %v1578 = vunpack.c.l.s4 1966171168
        %v1579 = vunpack.c.0.s8 %v1578
        %v1580 = vlaneseq
        %v1581 = vshrl.u32 %v1580, 7
        %v1582 = vsub.s32 %v1579, %v1581
        %v1583 = vrot.slane %v1567, %v1582
        %v1585 = vunpack.c.l.s4 1966171168
        %v1586 = vunpack.c.0.s8 %v1585
        %v1587 = vlaneseq
        %v1588 = vshrl.u32 %v1587, 7
        %v1589 = vsub.s32 %v1586, %v1588
        %v1590 = vrot.slane %v1568, %v1589
        %v1592 = vunpack.c.l.s4 1966171168
        %v1593 = vunpack.c.0.s8 %v1592
        %v1594 = vlaneseq
        %v1595 = vshrl.u32 %v1594, 7
        %v1596 = vsub.s32 %v1593, %v1595
        %v1597 = vrot.slane %v1569, %v1596
        %v1598 = vcombine.high %v1576, %v1576
        %v1599 = vcombine.high %v1583, %v1583
        %v1600 = vcombine.high %v1590, %v1590
        %v1601 = vcombine.high %v1597, %v1597
        %v1602 = vlaneseq
        %v1603 = vshrl.u32 %v1602, 7
        %v1604 = vsub.s32 0, %v1603
        %v1605 = vrot.slane %v1233, %v1604
        %v1606 = vlaneseq
        %v1607 = vshrl.u32 %v1606, 7
        %v1608 = vsub.s32 0, %v1607
        %v1609 = vrot.slane %v1247, %v1608
        %v1610 = vlaneseq
        %v1611 = vshrl.u32 %v1610, 7
        %v1612 = vsub.s32 0, %v1611
        %v1613 = vrot.slane %v1255, %v1612
        %v1614 = vlaneseq
        %v1615 = vshrl.u32 %v1614, 7
        %v1616 = vsub.s32 0, %v1615
        %v1617 = vrot.slane %v1257, %v1616
        %v1618 = vlaneseq
        %v1619 = vshrl.u32 %v1618, 7
        %v1620 = vsub.s32 0, %v1619
        %v1621 = vrot.slane %v1240, %v1620
        %v1622 = vlaneseq
        %v1623 = vshrl.u32 %v1622, 7
        %v1624 = vsub.s32 0, %v1623
        %v1625 = vrot.slane %v1254, %v1624
        %v1626 = vlaneseq
        %v1627 = vshrl.u32 %v1626, 7
        %v1628 = vsub.s32 0, %v1627
        %v1629 = vrot.slane %v1256, %v1628
        %v1630 = vlaneseq
        %v1631 = vshrl.u32 %v1630, 7
        %v1632 = vsub.s32 0, %v1631
        %v1633 = vrot.slane %v1258, %v1632
        %v1634 = vlaneseq
        %v1635 = vshrl.u32 %v1634, 7
        %v1636 = vsub.s32 0, %v1635
        %v1637 = vrot.slane %v1282, %v1636
        %v1638 = vlaneseq
        %v1639 = vshrl.u32 %v1638, 7
        %v1640 = vsub.s32 0, %v1639
        %v1641 = vrot.slane %v1296, %v1640
        %v1642 = vlaneseq
        %v1643 = vshrl.u32 %v1642, 7
        %v1644 = vsub.s32 0, %v1643
        %v1645 = vrot.slane %v1304, %v1644
        %v1646 = vlaneseq
        %v1647 = vshrl.u32 %v1646, 7
        %v1648 = vsub.s32 0, %v1647
        %v1649 = vrot.slane %v1306, %v1648
        %v1650 = vlaneseq
        %v1651 = vshrl.u32 %v1650, 7
        %v1652 = vsub.s32 0, %v1651
        %v1653 = vrot.slane %v1289, %v1652
        %v1654 = vlaneseq
        %v1655 = vshrl.u32 %v1654, 7
        %v1656 = vsub.s32 0, %v1655
        %v1657 = vrot.slane %v1303, %v1656
        %v1658 = vlaneseq
        %v1659 = vshrl.u32 %v1658, 7
        %v1660 = vsub.s32 0, %v1659
        %v1661 = vrot.slane %v1305, %v1660
        %v1662 = vlaneseq
        %v1663 = vshrl.u32 %v1662, 7
        %v1664 = vsub.s32 0, %v1663
        %v1665 = vrot.slane %v1307, %v1664
        %v1666 = vlaneseq
        %v1667 = vshrl.u32 %v1666, 7
        %v1668 = vsub.s32 0, %v1667
        %v1669 = vrot.slane %v1331, %v1668
        %v1670 = vlaneseq
        %v1671 = vshrl.u32 %v1670, 7
        %v1672 = vsub.s32 0, %v1671
        %v1673 = vrot.slane %v1345, %v1672
        %v1674 = vlaneseq
        %v1675 = vshrl.u32 %v1674, 7
        %v1676 = vsub.s32 0, %v1675
        %v1677 = vrot.slane %v1353, %v1676
        %v1678 = vlaneseq
        %v1679 = vshrl.u32 %v1678, 7
        %v1680 = vsub.s32 0, %v1679
        %v1681 = vrot.slane %v1355, %v1680
        %v1682 = vlaneseq
        %v1683 = vshrl.u32 %v1682, 7
        %v1684 = vsub.s32 0, %v1683
        %v1685 = vrot.slane %v1338, %v1684
        %v1686 = vlaneseq
        %v1687 = vshrl.u32 %v1686, 7
        %v1688 = vsub.s32 0, %v1687
        %v1689 = vrot.slane %v1352, %v1688
        %v1690 = vlaneseq
        %v1691 = vshrl.u32 %v1690, 7
        %v1692 = vsub.s32 0, %v1691
        %v1693 = vrot.slane %v1354, %v1692
        %v1694 = vlaneseq
        %v1695 = vshrl.u32 %v1694, 7
        %v1696 = vsub.s32 0, %v1695
        %v1697 = vrot.slane %v1356, %v1696
        %v1698 = vlaneseq
        %v1699 = vshrl.u32 %v1698, 7
        %v1700 = vsub.s32 0, %v1699
        %v1701 = vrot.slane %v1380, %v1700
        %v1702 = vlaneseq
        %v1703 = vshrl.u32 %v1702, 7
        %v1704 = vsub.s32 0, %v1703
        %v1705 = vrot.slane %v1394, %v1704
        %v1706 = vlaneseq
        %v1707 = vshrl.u32 %v1706, 7
        %v1708 = vsub.s32 0, %v1707
        %v1709 = vrot.slane %v1402, %v1708
        %v1710 = vlaneseq
        %v1711 = vshrl.u32 %v1710, 7
        %v1712 = vsub.s32 0, %v1711
        %v1713 = vrot.slane %v1404, %v1712
        %v1714 = vlaneseq
        %v1715 = vshrl.u32 %v1714, 7
        %v1716 = vsub.s32 0, %v1715
        %v1717 = vrot.slane %v1387, %v1716
        %v1718 = vlaneseq
        %v1719 = vshrl.u32 %v1718, 7
        %v1720 = vsub.s32 0, %v1719
        %v1721 = vrot.slane %v1401, %v1720
        %v1722 = vlaneseq
        %v1723 = vshrl.u32 %v1722, 7
        %v1724 = vsub.s32 0, %v1723
        %v1725 = vrot.slane %v1403, %v1724
        %v1726 = vlaneseq
        %v1727 = vshrl.u32 %v1726, 7
        %v1728 = vsub.s32 0, %v1727
        %v1729 = vrot.slane %v1405, %v1728
        %v1730 = vlaneseq
        %v1731 = vshrl.u32 %v1730, 7
        %v1732 = vsub.s32 0, %v1731
        %v1733 = vrot.slane %v1429, %v1732
        %v1734 = vlaneseq
        %v1735 = vshrl.u32 %v1734, 7
        %v1736 = vsub.s32 0, %v1735
        %v1737 = vrot.slane %v1443, %v1736
        %v1738 = vlaneseq
        %v1739 = vshrl.u32 %v1738, 7
        %v1740 = vsub.s32 0, %v1739
        %v1741 = vrot.slane %v1451, %v1740
        %v1742 = vlaneseq
        %v1743 = vshrl.u32 %v1742, 7
        %v1744 = vsub.s32 0, %v1743
        %v1745 = vrot.slane %v1453, %v1744
        %v1746 = vlaneseq
        %v1747 = vshrl.u32 %v1746, 7
        %v1748 = vsub.s32 0, %v1747
        %v1749 = vrot.slane %v1436, %v1748
        %v1750 = vlaneseq
        %v1751 = vshrl.u32 %v1750, 7
        %v1752 = vsub.s32 0, %v1751
        %v1753 = vrot.slane %v1450, %v1752
        %v1754 = vlaneseq
        %v1755 = vshrl.u32 %v1754, 7
        %v1756 = vsub.s32 0, %v1755
        %v1757 = vrot.slane %v1452, %v1756
        %v1758 = vlaneseq
        %v1759 = vshrl.u32 %v1758, 7
        %v1760 = vsub.s32 0, %v1759
        %v1761 = vrot.slane %v1454, %v1760
        %v1762 = vlaneseq
        %v1763 = vshrl.u32 %v1762, 7
        %v1764 = vsub.s32 0, %v1763
        %v1765 = vrot.slane %v1478, %v1764
        %v1766 = vlaneseq
        %v1767 = vshrl.u32 %v1766, 7
        %v1768 = vsub.s32 0, %v1767
        %v1769 = vrot.slane %v1492, %v1768
        %v1770 = vlaneseq
        %v1771 = vshrl.u32 %v1770, 7
        %v1772 = vsub.s32 0, %v1771
        %v1773 = vrot.slane %v1500, %v1772
        %v1774 = vlaneseq
        %v1775 = vshrl.u32 %v1774, 7
        %v1776 = vsub.s32 0, %v1775
        %v1777 = vrot.slane %v1502, %v1776
        %v1778 = vlaneseq
        %v1779 = vshrl.u32 %v1778, 7
        %v1780 = vsub.s32 0, %v1779
        %v1781 = vrot.slane %v1485, %v1780
        %v1782 = vlaneseq
        %v1783 = vshrl.u32 %v1782, 7
        %v1784 = vsub.s32 0, %v1783
        %v1785 = vrot.slane %v1499, %v1784
        %v1786 = vlaneseq
        %v1787 = vshrl.u32 %v1786, 7
        %v1788 = vsub.s32 0, %v1787
        %v1789 = vrot.slane %v1501, %v1788
        %v1790 = vlaneseq
        %v1791 = vshrl.u32 %v1790, 7
        %v1792 = vsub.s32 0, %v1791
        %v1793 = vrot.slane %v1503, %v1792
        %v1794 = vlaneseq
        %v1795 = vshrl.u32 %v1794, 7
        %v1796 = vsub.s32 0, %v1795
        %v1797 = vrot.slane %v1527, %v1796
        %v1798 = vlaneseq
        %v1799 = vshrl.u32 %v1798, 7
        %v1800 = vsub.s32 0, %v1799
        %v1801 = vrot.slane %v1541, %v1800
        %v1802 = vlaneseq
        %v1803 = vshrl.u32 %v1802, 7
        %v1804 = vsub.s32 0, %v1803
        %v1805 = vrot.slane %v1549, %v1804
        %v1806 = vlaneseq
        %v1807 = vshrl.u32 %v1806, 7
        %v1808 = vsub.s32 0, %v1807
        %v1809 = vrot.slane %v1551, %v1808
        %v1810 = vlaneseq
        %v1811 = vshrl.u32 %v1810, 7
        %v1812 = vsub.s32 0, %v1811
        %v1813 = vrot.slane %v1534, %v1812
        %v1814 = vlaneseq
        %v1815 = vshrl.u32 %v1814, 7
        %v1816 = vsub.s32 0, %v1815
        %v1817 = vrot.slane %v1548, %v1816
        %v1818 = vlaneseq
        %v1819 = vshrl.u32 %v1818, 7
        %v1820 = vsub.s32 0, %v1819
        %v1821 = vrot.slane %v1550, %v1820
        %v1822 = vlaneseq
        %v1823 = vshrl.u32 %v1822, 7
        %v1824 = vsub.s32 0, %v1823
        %v1825 = vrot.slane %v1552, %v1824
        %v1826 = vlaneseq
        %v1827 = vshrl.u32 %v1826, 7
        %v1828 = vsub.s32 0, %v1827
        %v1829 = vrot.slane %v1576, %v1828
        %v1830 = vlaneseq
        %v1831 = vshrl.u32 %v1830, 7
        %v1832 = vsub.s32 0, %v1831
        %v1833 = vrot.slane %v1590, %v1832
        %v1834 = vlaneseq
        %v1835 = vshrl.u32 %v1834, 7
        %v1836 = vsub.s32 0, %v1835
        %v1837 = vrot.slane %v1598, %v1836
        %v1838 = vlaneseq
        %v1839 = vshrl.u32 %v1838, 7
        %v1840 = vsub.s32 0, %v1839
        %v1841 = vrot.slane %v1600, %v1840
        %v1842 = vlaneseq
        %v1843 = vshrl.u32 %v1842, 7
        %v1844 = vsub.s32 0, %v1843
        %v1845 = vrot.slane %v1583, %v1844
        %v1846 = vlaneseq
        %v1847 = vshrl.u32 %v1846, 7
        %v1848 = vsub.s32 0, %v1847
        %v1849 = vrot.slane %v1597, %v1848
        %v1850 = vlaneseq
        %v1851 = vshrl.u32 %v1850, 7
        %v1852 = vsub.s32 0, %v1851
        %v1853 = vrot.slane %v1599, %v1852
        %v1854 = vlaneseq
        %v1855 = vshrl.u32 %v1854, 7
        %v1856 = vsub.s32 0, %v1855
        %v1857 = vrot.slane %v1601, %v1856
        %v1858 = vld [vmem:[%s3] sm:$0xff]
        %v1859 = vld [vmem:[%s3 + $0x8] sm:$0xff]
        %v1860 = vld [vmem:[%s3 + $0x10] sm:$0xff]
        %v1861 = vld [vmem:[%s3 + $0x18] sm:$0xff]
        %v1862 = vld [vmem:[%s3 + $0x20] sm:$0xff]
        %v1863 = vld [vmem:[%s3 + $0x28] sm:$0xff]
        %v1864 = vld [vmem:[%s3 + $0x30] sm:$0xff]
        %v1865 = vld [vmem:[%s3 + $0x38] sm:$0xff]
        %v1866 = vld [vmem:[%s3 + $0x40] sm:$0xff]
        %v1867 = vld [vmem:[%s3 + $0x48] sm:$0xff]
        %v1868 = vld [vmem:[%s3 + $0x50] sm:$0xff]
        %v1869 = vld [vmem:[%s3 + $0x58] sm:$0xff]
        %v1870 = vld [vmem:[%s3 + $0x60] sm:$0xff]
        %v1871 = vld [vmem:[%s3 + $0x68] sm:$0xff]
        %v1872 = vld [vmem:[%s3 + $0x70] sm:$0xff]
        %v1873 = vld [vmem:[%s3 + $0x78] sm:$0xff]
        %v1874 = vld [vmem:[%s3 + $0x80] sm:$0xff]
        %v1875 = vld [vmem:[%s3 + $0x88] sm:$0xff]
        %v1876 = vld [vmem:[%s3 + $0x90] sm:$0xff]
        %v1877 = vld [vmem:[%s3 + $0x98] sm:$0xff]
        %v1878 = vld [vmem:[%s3 + $0xa0] sm:$0xff]
        %v1879 = vld [vmem:[%s3 + $0xa8] sm:$0xff]
        %v1880 = vld [vmem:[%s3 + $0xb0] sm:$0xff]
        %v1881 = vld [vmem:[%s3 + $0xb8] sm:$0xff]
        %v1882 = vld [vmem:[%s3 + $0xc0] sm:$0xff]
        %v1883 = vld [vmem:[%s3 + $0xc8] sm:$0xff]
        %v1884 = vld [vmem:[%s3 + $0xd0] sm:$0xff]
        %v1885 = vld [vmem:[%s3 + $0xd8] sm:$0xff]
        %v1886 = vld [vmem:[%s3 + $0xe0] sm:$0xff]
        %v1887 = vld [vmem:[%s3 + $0xe8] sm:$0xff]
        %v1888 = vld [vmem:[%s3 + $0xf0] sm:$0xff]
        %v1889 = vld [vmem:[%s3 + $0xf8] sm:$0xff]
        %v1890 = vld [vmem:[%s3 + $0x100] sm:$0xff]
        %v1891 = vld [vmem:[%s3 + $0x108] sm:$0xff]
        %v1892 = vld [vmem:[%s3 + $0x110] sm:$0xff]
        %v1893 = vld [vmem:[%s3 + $0x118] sm:$0xff]
        %v1894 = vld [vmem:[%s356] sm:$0x1]
        %v1895 = vcombine.low %v949, %v953
        %v1896 = vcombine.low %v957, %v961
        %v1898 = vunpack.c.l.s4 1983009808
        %v1899 = vunpack.c.0.s8 %v1898
        %v1900 = vlaneseq
        %v1901 = vshrl.u32 %v1900, 7
        %v1902 = vsub.s32 %v1899, %v1901
        %v1903 = vrot.slane %v1895, %v1902
        %v1905 = vunpack.c.l.s4 1983009808
        %v1906 = vunpack.c.0.s8 %v1905
        %v1907 = vlaneseq
        %v1908 = vshrl.u32 %v1907, 7
        %v1909 = vsub.s32 %v1906, %v1908
        %v1910 = vrot.slane %v1896, %v1909
        %v1911 = vcombine.low %v1903, %v1910
        %v1912 = vcombine.low %v965, %v969
        %v1913 = vcombine.low %v973, %v977
        %v1915 = vunpack.c.l.s4 1983009808
        %v1916 = vunpack.c.0.s8 %v1915
        %v1917 = vlaneseq
        %v1918 = vshrl.u32 %v1917, 7
        %v1919 = vsub.s32 %v1916, %v1918
        %v1920 = vrot.slane %v1912, %v1919
        %v1922 = vunpack.c.l.s4 1983009808
        %v1923 = vunpack.c.0.s8 %v1922
        %v1924 = vlaneseq
        %v1925 = vshrl.u32 %v1924, 7
        %v1926 = vsub.s32 %v1923, %v1925
        %v1927 = vrot.slane %v1913, %v1926
        %v1928 = vcombine.low %v1920, %v1927
        %v1929 = vcombine.low %v981, %v985
        %v1930 = vcombine.low %v989, %v993
        %v1932 = vunpack.c.l.s4 1983009808
        %v1933 = vunpack.c.0.s8 %v1932
        %v1934 = vlaneseq
        %v1935 = vshrl.u32 %v1934, 7
        %v1936 = vsub.s32 %v1933, %v1935
        %v1937 = vrot.slane %v1929, %v1936
        %v1939 = vunpack.c.l.s4 1983009808
        %v1940 = vunpack.c.0.s8 %v1939
        %v1941 = vlaneseq
        %v1942 = vshrl.u32 %v1941, 7
        %v1943 = vsub.s32 %v1940, %v1942
        %v1944 = vrot.slane %v1930, %v1943
        %v1945 = vcombine.low %v1937, %v1944
        %v1946 = vcombine.low %v997, %v1001
        %v1947 = vcombine.low %v1005, %v1009
        %v1949 = vunpack.c.l.s4 1983009808
        %v1950 = vunpack.c.0.s8 %v1949
        %v1951 = vlaneseq
        %v1952 = vshrl.u32 %v1951, 7
        %v1953 = vsub.s32 %v1950, %v1952
        %v1954 = vrot.slane %v1946, %v1953
        %v1956 = vunpack.c.l.s4 1983009808
        %v1957 = vunpack.c.0.s8 %v1956
        %v1958 = vlaneseq
        %v1959 = vshrl.u32 %v1958, 7
        %v1960 = vsub.s32 %v1957, %v1959
        %v1961 = vrot.slane %v1947, %v1960
        %v1962 = vcombine.low %v1954, %v1961
        %v1963 = vcombine.low %v1013, %v1017
        %v1964 = vcombine.low %v1021, %v1025
        %v1966 = vunpack.c.l.s4 1983009808
        %v1967 = vunpack.c.0.s8 %v1966
        %v1968 = vlaneseq
        %v1969 = vshrl.u32 %v1968, 7
        %v1970 = vsub.s32 %v1967, %v1969
        %v1971 = vrot.slane %v1963, %v1970
        %v1973 = vunpack.c.l.s4 1983009808
        %v1974 = vunpack.c.0.s8 %v1973
        %v1975 = vlaneseq
        %v1976 = vshrl.u32 %v1975, 7
        %v1977 = vsub.s32 %v1974, %v1976
        %v1978 = vrot.slane %v1964, %v1977
        %v1979 = vcombine.low %v1971, %v1978
        %v1980 = vcombine.low %v1029, %v1033
        %v1981 = vcombine.low %v1037, %v1041
        %v1983 = vunpack.c.l.s4 1983009808
        %v1984 = vunpack.c.0.s8 %v1983
        %v1985 = vlaneseq
        %v1986 = vshrl.u32 %v1985, 7
        %v1987 = vsub.s32 %v1984, %v1986
        %v1988 = vrot.slane %v1980, %v1987
        %v1990 = vunpack.c.l.s4 1983009808
        %v1991 = vunpack.c.0.s8 %v1990
        %v1992 = vlaneseq
        %v1993 = vshrl.u32 %v1992, 7
        %v1994 = vsub.s32 %v1991, %v1993
        %v1995 = vrot.slane %v1981, %v1994
        %v1996 = vcombine.low %v1988, %v1995
        %v1997 = vcombine.low %v1045, %v1049
        %v1998 = vcombine.low %v1053, %v1057
        %v2000 = vunpack.c.l.s4 1983009808
        %v2001 = vunpack.c.0.s8 %v2000
        %v2002 = vlaneseq
        %v2003 = vshrl.u32 %v2002, 7
        %v2004 = vsub.s32 %v2001, %v2003
        %v2005 = vrot.slane %v1997, %v2004
        %v2007 = vunpack.c.l.s4 1983009808
        %v2008 = vunpack.c.0.s8 %v2007
        %v2009 = vlaneseq
        %v2010 = vshrl.u32 %v2009, 7
        %v2011 = vsub.s32 %v2008, %v2010
        %v2012 = vrot.slane %v1998, %v2011
        %v2013 = vcombine.low %v2005, %v2012
        %v2014 = vcombine.low %v1061, %v1065
        %v2015 = vcombine.low %v1069, %v1073
        %v2017 = vunpack.c.l.s4 1983009808
        %v2018 = vunpack.c.0.s8 %v2017
        %v2019 = vlaneseq
        %v2020 = vshrl.u32 %v2019, 7
        %v2021 = vsub.s32 %v2018, %v2020
        %v2022 = vrot.slane %v2014, %v2021
        %v2024 = vunpack.c.l.s4 1983009808
        %v2025 = vunpack.c.0.s8 %v2024
        %v2026 = vlaneseq
        %v2027 = vshrl.u32 %v2026, 7
        %v2028 = vsub.s32 %v2025, %v2027
        %v2029 = vrot.slane %v2015, %v2028
        %v2030 = vcombine.low %v2022, %v2029
        %v2031 = vcombine.low %v1077, %v1081
        %v2032 = vcombine.low %v1085, %v1089
        %v2034 = vunpack.c.l.s4 1983009808
        %v2035 = vunpack.c.0.s8 %v2034
        %v2036 = vlaneseq
        %v2037 = vshrl.u32 %v2036, 7
        %v2038 = vsub.s32 %v2035, %v2037
        %v2039 = vrot.slane %v2031, %v2038
        %v2041 = vunpack.c.l.s4 1983009808
        %v2042 = vunpack.c.0.s8 %v2041
        %v2043 = vlaneseq
        %v2044 = vshrl.u32 %v2043, 7
        %v2045 = vsub.s32 %v2042, %v2044
        %v2046 = vrot.slane %v2032, %v2045
        %v2047 = vcombine.low %v2039, %v2046
        %v2048 = vcombine.low %v1093, %v1097
        %v2049 = vcombine.low %v1101, %v1105
        %v2051 = vunpack.c.l.s4 1983009808
        %v2052 = vunpack.c.0.s8 %v2051
        %v2053 = vlaneseq
        %v2054 = vshrl.u32 %v2053, 7
        %v2055 = vsub.s32 %v2052, %v2054
        %v2056 = vrot.slane %v2048, %v2055
        %v2058 = vunpack.c.l.s4 1983009808
        %v2059 = vunpack.c.0.s8 %v2058
        %v2060 = vlaneseq
        %v2061 = vshrl.u32 %v2060, 7
        %v2062 = vsub.s32 %v2059, %v2061
        %v2063 = vrot.slane %v2049, %v2062
        %v2064 = vcombine.low %v2056, %v2063
        %v2065 = vcombine.low %v1109, %v1113
        %v2066 = vcombine.low %v1117, %v1121
        %v2068 = vunpack.c.l.s4 1983009808
        %v2069 = vunpack.c.0.s8 %v2068
        %v2070 = vlaneseq
        %v2071 = vshrl.u32 %v2070, 7
        %v2072 = vsub.s32 %v2069, %v2071
        %v2073 = vrot.slane %v2065, %v2072
        %v2075 = vunpack.c.l.s4 1983009808
        %v2076 = vunpack.c.0.s8 %v2075
        %v2077 = vlaneseq
        %v2078 = vshrl.u32 %v2077, 7
        %v2079 = vsub.s32 %v2076, %v2078
        %v2080 = vrot.slane %v2066, %v2079
        %v2081 = vcombine.low %v2073, %v2080
        %v2082 = vcombine.low %v1125, %v1129
        %v2083 = vcombine.low %v1133, %v1137
        %v2085 = vunpack.c.l.s4 1983009808
        %v2086 = vunpack.c.0.s8 %v2085
        %v2087 = vlaneseq
        %v2088 = vshrl.u32 %v2087, 7
        %v2089 = vsub.s32 %v2086, %v2088
        %v2090 = vrot.slane %v2082, %v2089
        %v2092 = vunpack.c.l.s4 1983009808
        %v2093 = vunpack.c.0.s8 %v2092
        %v2094 = vlaneseq
        %v2095 = vshrl.u32 %v2094, 7
        %v2096 = vsub.s32 %v2093, %v2095
        %v2097 = vrot.slane %v2083, %v2096
        %v2098 = vcombine.low %v2090, %v2097
        %v2099 = vcombine.low %v1141, %v1145
        %v2100 = vcombine.low %v1149, %v1153
        %v2102 = vunpack.c.l.s4 1983009808
        %v2103 = vunpack.c.0.s8 %v2102
        %v2104 = vlaneseq
        %v2105 = vshrl.u32 %v2104, 7
        %v2106 = vsub.s32 %v2103, %v2105
        %v2107 = vrot.slane %v2099, %v2106
        %v2109 = vunpack.c.l.s4 1983009808
        %v2110 = vunpack.c.0.s8 %v2109
        %v2111 = vlaneseq
        %v2112 = vshrl.u32 %v2111, 7
        %v2113 = vsub.s32 %v2110, %v2112
        %v2114 = vrot.slane %v2100, %v2113
        %v2115 = vcombine.low %v2107, %v2114
        %v2116 = vcombine.low %v1157, %v1161
        %v2117 = vcombine.low %v1165, %v1169
        %v2119 = vunpack.c.l.s4 1983009808
        %v2120 = vunpack.c.0.s8 %v2119
        %v2121 = vlaneseq
        %v2122 = vshrl.u32 %v2121, 7
        %v2123 = vsub.s32 %v2120, %v2122
        %v2124 = vrot.slane %v2116, %v2123
        %v2126 = vunpack.c.l.s4 1983009808
        %v2127 = vunpack.c.0.s8 %v2126
        %v2128 = vlaneseq
        %v2129 = vshrl.u32 %v2128, 7
        %v2130 = vsub.s32 %v2127, %v2129
        %v2131 = vrot.slane %v2117, %v2130
        %v2132 = vcombine.low %v2124, %v2131
        %v2133 = vcombine.low %v1173, %v1177
        %v2134 = vcombine.low %v1181, %v1185
        %v2136 = vunpack.c.l.s4 1983009808
        %v2137 = vunpack.c.0.s8 %v2136
        %v2138 = vlaneseq
        %v2139 = vshrl.u32 %v2138, 7
        %v2140 = vsub.s32 %v2137, %v2139
        %v2141 = vrot.slane %v2133, %v2140
        %v2143 = vunpack.c.l.s4 1983009808
        %v2144 = vunpack.c.0.s8 %v2143
        %v2145 = vlaneseq
        %v2146 = vshrl.u32 %v2145, 7
        %v2147 = vsub.s32 %v2144, %v2146
        %v2148 = vrot.slane %v2134, %v2147
        %v2149 = vcombine.low %v2141, %v2148
        %v2150 = vcombine.low %v1189, %v1193
        %v2151 = vcombine.low %v1197, %v1201
        %v2153 = vunpack.c.l.s4 1983009808
        %v2154 = vunpack.c.0.s8 %v2153
        %v2155 = vlaneseq
        %v2156 = vshrl.u32 %v2155, 7
        %v2157 = vsub.s32 %v2154, %v2156
        %v2158 = vrot.slane %v2150, %v2157
        %v2160 = vunpack.c.l.s4 1983009808
        %v2161 = vunpack.c.0.s8 %v2160
        %v2162 = vlaneseq
        %v2163 = vshrl.u32 %v2162, 7
        %v2164 = vsub.s32 %v2161, %v2163
        %v2165 = vrot.slane %v2151, %v2164
        %v2166 = vcombine.low %v2158, %v2165
        %vm2167 = vcmask 1040384
        %v2168 = vrot.slane %v1911, 7
        %v2169 = vrot.slane %v1928, 7
        %v2170 = vsel %vm2167, %v2168, %v2169
        %v2171 = vrot.slane %v1945, 7
        %v2172 = vrot.slane %v1962, 7
        %v2173 = vsel %vm2167, %v2171, %v2172
        %v2174 = vrot.slane %v1979, 7
        %v2175 = vrot.slane %v1996, 7
        %v2176 = vsel %vm2167, %v2174, %v2175
        %v2177 = vrot.slane %v2013, 7
        %v2178 = vrot.slane %v2030, 7
        %v2179 = vsel %vm2167, %v2177, %v2178
        %v2180 = vrot.slane %v2047, 7
        %v2181 = vrot.slane %v2064, 7
        %v2182 = vsel %vm2167, %v2180, %v2181
        %v2183 = vrot.slane %v2081, 7
        %v2184 = vrot.slane %v2098, 7
        %v2185 = vsel %vm2167, %v2183, %v2184
        %v2186 = vrot.slane %v2115, 7
        %v2187 = vrot.slane %v2132, 7
        %v2188 = vsel %vm2167, %v2186, %v2187
        %v2189 = vrot.slane %v2149, 7
        %v2190 = vrot.slane %v2166, 7
        %v2191 = vsel %vm2167, %v2189, %v2190
        %v2216 = vsel %vm2167, 0.0, %v2168
        %v2217 = vsel %vm2167, 0.0, %v2171
        %v2218 = vsel %vm2167, 0.0, %v2174
        %v2219 = vsel %vm2167, 0.0, %v2177
        %v2220 = vsel %vm2167, 0.0, %v2180
        %v2221 = vsel %vm2167, 0.0, %v2183
        %v2222 = vsel %vm2167, 0.0, %v2186
        %v2223 = vsel %vm2167, 0.0, %v2189
        %v2224 = vsel %vm2167, %v2169, 0.0
        %v2225 = vsel %vm2167, %v2172, 0.0
        %v2226 = vsel %vm2167, %v2175, 0.0
        %v2227 = vsel %vm2167, %v2178, 0.0
        %v2228 = vsel %vm2167, %v2181, 0.0
        %v2229 = vsel %vm2167, %v2184, 0.0
        %v2230 = vsel %vm2167, %v2187, 0.0
        %v2231 = vsel %vm2167, %v2190, 0.0
        %vm2249 = vcmask 1046528
        %v2250 = vrot.slane 0.0, 1
        %v2251 = vsel %vm2249, %v2250, %v2250
        %v2252 = vrot.slane %v2216, 1
        %v2253 = vrot.slane %v2170, 1
        %v2254 = vsel %vm2249, %v2252, %v2253
        %v2255 = vrot.slane %v2224, 1
        %v2256 = vsel %vm2249, %v2253, %v2255
        %v2257 = vrot.slane %v2217, 1
        %v2258 = vrot.slane %v2173, 1
        %v2259 = vsel %vm2249, %v2257, %v2258
        %v2260 = vrot.slane %v2225, 1
        %v2261 = vsel %vm2249, %v2258, %v2260
        %v2262 = vrot.slane %v2218, 1
        %v2263 = vrot.slane %v2176, 1
        %v2264 = vsel %vm2249, %v2262, %v2263
        %v2265 = vrot.slane %v2226, 1
        %v2266 = vsel %vm2249, %v2263, %v2265
        %v2267 = vrot.slane %v2219, 1
        %v2268 = vrot.slane %v2179, 1
        %v2269 = vsel %vm2249, %v2267, %v2268
        %v2270 = vrot.slane %v2227, 1
        %v2271 = vsel %vm2249, %v2268, %v2270
        %v2272 = vrot.slane %v2220, 1
        %v2273 = vrot.slane %v2182, 1
        %v2274 = vsel %vm2249, %v2272, %v2273
        %v2275 = vrot.slane %v2228, 1
        %v2276 = vsel %vm2249, %v2273, %v2275
        %v2277 = vrot.slane %v2221, 1
        %v2278 = vrot.slane %v2185, 1
        %v2279 = vsel %vm2249, %v2277, %v2278
        %v2280 = vrot.slane %v2229, 1
        %v2281 = vsel %vm2249, %v2278, %v2280
        %v2282 = vrot.slane %v2222, 1
        %v2283 = vrot.slane %v2188, 1
        %v2284 = vsel %vm2249, %v2282, %v2283
        %v2285 = vrot.slane %v2230, 1
        %v2286 = vsel %vm2249, %v2283, %v2285
        %v2287 = vrot.slane %v2223, 1
        %v2288 = vrot.slane %v2191, 1
        %v2289 = vsel %vm2249, %v2287, %v2288
        %v2290 = vrot.slane %v2231, 1
        %v2291 = vsel %vm2249, %v2288, %v2290
        %vm2292 = vcmask 1045504
        %v2293 = vrot.slane 0.0, 2
        %v2294 = vsel %vm2292, %v2293, %v2293
        %v2295 = vrot.slane %v2216, 2
        %v2296 = vrot.slane %v2170, 2
        %v2297 = vsel %vm2292, %v2295, %v2296
        %v2298 = vrot.slane %v2224, 2
        %v2299 = vsel %vm2292, %v2296, %v2298
        %v2300 = vrot.slane %v2217, 2
        %v2301 = vrot.slane %v2173, 2
        %v2302 = vsel %vm2292, %v2300, %v2301
        %v2303 = vrot.slane %v2225, 2
        %v2304 = vsel %vm2292, %v2301, %v2303
        %v2305 = vrot.slane %v2218, 2
        %v2306 = vrot.slane %v2176, 2
        %v2307 = vsel %vm2292, %v2305, %v2306
        %v2308 = vrot.slane %v2226, 2
        %v2309 = vsel %vm2292, %v2306, %v2308
        %v2310 = vrot.slane %v2219, 2
        %v2311 = vrot.slane %v2179, 2
        %v2312 = vsel %vm2292, %v2310, %v2311
        %v2313 = vrot.slane %v2227, 2
        %v2314 = vsel %vm2292, %v2311, %v2313
        %v2315 = vrot.slane %v2220, 2
        %v2316 = vrot.slane %v2182, 2
        %v2317 = vsel %vm2292, %v2315, %v2316
        %v2318 = vrot.slane %v2228, 2
        %v2319 = vsel %vm2292, %v2316, %v2318
        %v2320 = vrot.slane %v2221, 2
        %v2321 = vrot.slane %v2185, 2
        %v2322 = vsel %vm2292, %v2320, %v2321
        %v2323 = vrot.slane %v2229, 2
        %v2324 = vsel %vm2292, %v2321, %v2323
        %v2325 = vrot.slane %v2222, 2
        %v2326 = vrot.slane %v2188, 2
        %v2327 = vsel %vm2292, %v2325, %v2326
        %v2328 = vrot.slane %v2230, 2
        %v2329 = vsel %vm2292, %v2326, %v2328
        %v2330 = vrot.slane %v2223, 2
        %v2331 = vrot.slane %v2191, 2
        %v2332 = vsel %vm2292, %v2330, %v2331
        %v2333 = vrot.slane %v2231, 2
        %v2334 = vsel %vm2292, %v2331, %v2333
        %2351 = vrot.lane.b32.xlu0 %v2251, 32
        %v2352 = vpop.permute.xlu0 %2351
        %2353 = vrot.lane.b32.xlu0 %v2254, 32
        %v2354 = vpop.permute.xlu0 %2353
        %2355 = vrot.lane.b32.xlu0 %v2256, 32
        %v2356 = vpop.permute.xlu0 %2355
        %2357 = vrot.lane.b32.xlu0 %v2259, 32
        %v2358 = vpop.permute.xlu0 %2357
        %2359 = vrot.lane.b32.xlu0 %v2261, 32
        %v2360 = vpop.permute.xlu0 %2359
        %2361 = vrot.lane.b32.xlu0 %v2264, 32
        %v2362 = vpop.permute.xlu0 %2361
        %2363 = vrot.lane.b32.xlu0 %v2266, 32
        %v2364 = vpop.permute.xlu0 %2363
        %2365 = vrot.lane.b32.xlu0 %v2269, 32
        %v2366 = vpop.permute.xlu0 %2365
        %2367 = vrot.lane.b32.xlu0 %v2271, 32
        %v2368 = vpop.permute.xlu0 %2367
        %2369 = vrot.lane.b32.xlu0 %v2274, 32
        %v2370 = vpop.permute.xlu0 %2369
        %2371 = vrot.lane.b32.xlu0 %v2276, 32
        %v2372 = vpop.permute.xlu0 %2371
        %2373 = vrot.lane.b32.xlu0 %v2279, 32
        %v2374 = vpop.permute.xlu0 %2373
        %2375 = vrot.lane.b32.xlu0 %v2281, 32
        %v2376 = vpop.permute.xlu0 %2375
        %2377 = vrot.lane.b32.xlu0 %v2284, 32
        %v2378 = vpop.permute.xlu0 %2377
        %2379 = vrot.lane.b32.xlu0 %v2286, 32
        %v2380 = vpop.permute.xlu0 %2379
        %2381 = vrot.lane.b32.xlu0 %v2289, 32
        %v2382 = vpop.permute.xlu0 %2381
        %2383 = vrot.lane.b32.xlu0 %v2291, 32
        %v2384 = vpop.permute.xlu0 %2383
        %2402 = vrot.lane.b32.xlu0 %v2294, 64
        %v2403 = vpop.permute.xlu0 %2402
        %2404 = vrot.lane.b32.xlu0 %v2297, 64
        %v2405 = vpop.permute.xlu0 %2404
        %2406 = vrot.lane.b32.xlu0 %v2299, 64
        %v2407 = vpop.permute.xlu0 %2406
        %2408 = vrot.lane.b32.xlu0 %v2302, 64
        %v2409 = vpop.permute.xlu0 %2408
        %2410 = vrot.lane.b32.xlu0 %v2304, 64
        %v2411 = vpop.permute.xlu0 %2410
        %2412 = vrot.lane.b32.xlu0 %v2307, 64
        %v2413 = vpop.permute.xlu0 %2412
        %2414 = vrot.lane.b32.xlu0 %v2309, 64
        %v2415 = vpop.permute.xlu0 %2414
        %2416 = vrot.lane.b32.xlu0 %v2312, 64
        %v2417 = vpop.permute.xlu0 %2416
        %2418 = vrot.lane.b32.xlu0 %v2314, 64
        %v2419 = vpop.permute.xlu0 %2418
        %2420 = vrot.lane.b32.xlu0 %v2317, 64
        %v2421 = vpop.permute.xlu0 %2420
        %2422 = vrot.lane.b32.xlu0 %v2319, 64
        %v2423 = vpop.permute.xlu0 %2422
        %2424 = vrot.lane.b32.xlu0 %v2322, 64
        %v2425 = vpop.permute.xlu0 %2424
        %2426 = vrot.lane.b32.xlu0 %v2324, 64
        %v2427 = vpop.permute.xlu0 %2426
        %2428 = vrot.lane.b32.xlu0 %v2327, 64
        %v2429 = vpop.permute.xlu0 %2428
        %2430 = vrot.lane.b32.xlu0 %v2329, 64
        %v2431 = vpop.permute.xlu0 %2430
        %2432 = vrot.lane.b32.xlu0 %v2332, 64
        %v2433 = vpop.permute.xlu0 %2432
        %2434 = vrot.lane.b32.xlu0 %v2334, 64
        %v2435 = vpop.permute.xlu0 %2434
        %2453 = vrot.lane.b32.xlu0 %v2216, 96
        %v2454 = vpop.permute.xlu0 %2453
        %2455 = vrot.lane.b32.xlu0 %v2170, 96
        %v2456 = vpop.permute.xlu0 %2455
        %2457 = vrot.lane.b32.xlu0 %v2217, 96
        %v2458 = vpop.permute.xlu0 %2457
        %2459 = vrot.lane.b32.xlu0 %v2173, 96
        %v2460 = vpop.permute.xlu0 %2459
        %2461 = vrot.lane.b32.xlu0 %v2218, 96
        %v2462 = vpop.permute.xlu0 %2461
        %2463 = vrot.lane.b32.xlu0 %v2176, 96
        %v2464 = vpop.permute.xlu0 %2463
        %2465 = vrot.lane.b32.xlu0 %v2219, 96
        %v2466 = vpop.permute.xlu0 %2465
        %2467 = vrot.lane.b32.xlu0 %v2179, 96
        %v2468 = vpop.permute.xlu0 %2467
        %2469 = vrot.lane.b32.xlu0 %v2220, 96
        %v2470 = vpop.permute.xlu0 %2469
        %2471 = vrot.lane.b32.xlu0 %v2182, 96
        %v2472 = vpop.permute.xlu0 %2471
        %2473 = vrot.lane.b32.xlu0 %v2221, 96
        %v2474 = vpop.permute.xlu0 %2473
        %2475 = vrot.lane.b32.xlu0 %v2185, 96
        %v2476 = vpop.permute.xlu0 %2475
        %2477 = vrot.lane.b32.xlu0 %v2222, 96
        %v2478 = vpop.permute.xlu0 %2477
        %2479 = vrot.lane.b32.xlu0 %v2188, 96
        %v2480 = vpop.permute.xlu0 %2479
        %2481 = vrot.lane.b32.xlu0 %v2223, 96
        %v2482 = vpop.permute.xlu0 %2481
        %2483 = vrot.lane.b32.xlu0 %v2191, 96
        %v2484 = vpop.permute.xlu0 %2483
        %2501 = vrot.lane.b32.xlu0 %v2297, 32
        %v2502 = vpop.permute.xlu0 %2501
        %2503 = vrot.lane.b32.xlu0 %v2299, 32
        %v2504 = vpop.permute.xlu0 %2503
        %2505 = vrot.lane.b32.xlu0 %v2302, 32
        %v2506 = vpop.permute.xlu0 %2505
        %2507 = vrot.lane.b32.xlu0 %v2304, 32
        %v2508 = vpop.permute.xlu0 %2507
        %2509 = vrot.lane.b32.xlu0 %v2307, 32
        %v2510 = vpop.permute.xlu0 %2509
        %2511 = vrot.lane.b32.xlu0 %v2309, 32
        %v2512 = vpop.permute.xlu0 %2511
        %2513 = vrot.lane.b32.xlu0 %v2312, 32
        %v2514 = vpop.permute.xlu0 %2513
        %2515 = vrot.lane.b32.xlu0 %v2314, 32
        %v2516 = vpop.permute.xlu0 %2515
        %2517 = vrot.lane.b32.xlu0 %v2317, 32
        %v2518 = vpop.permute.xlu0 %2517
        %2519 = vrot.lane.b32.xlu0 %v2319, 32
        %v2520 = vpop.permute.xlu0 %2519
        %2521 = vrot.lane.b32.xlu0 %v2322, 32
        %v2522 = vpop.permute.xlu0 %2521
        %2523 = vrot.lane.b32.xlu0 %v2324, 32
        %v2524 = vpop.permute.xlu0 %2523
        %2525 = vrot.lane.b32.xlu0 %v2327, 32
        %v2526 = vpop.permute.xlu0 %2525
        %2527 = vrot.lane.b32.xlu0 %v2329, 32
        %v2528 = vpop.permute.xlu0 %2527
        %2529 = vrot.lane.b32.xlu0 %v2332, 32
        %v2530 = vpop.permute.xlu0 %2529
        %2531 = vrot.lane.b32.xlu0 %v2334, 32
        %v2532 = vpop.permute.xlu0 %2531
        %2549 = vrot.lane.b32.xlu0 %v2216, 64
        %v2550 = vpop.permute.xlu0 %2549
        %2551 = vrot.lane.b32.xlu0 %v2170, 64
        %v2552 = vpop.permute.xlu0 %2551
        %2553 = vrot.lane.b32.xlu0 %v2217, 64
        %v2554 = vpop.permute.xlu0 %2553
        %2555 = vrot.lane.b32.xlu0 %v2173, 64
        %v2556 = vpop.permute.xlu0 %2555
        %2557 = vrot.lane.b32.xlu0 %v2218, 64
        %v2558 = vpop.permute.xlu0 %2557
        %2559 = vrot.lane.b32.xlu0 %v2176, 64
        %v2560 = vpop.permute.xlu0 %2559
        %2561 = vrot.lane.b32.xlu0 %v2219, 64
        %v2562 = vpop.permute.xlu0 %2561
        %2563 = vrot.lane.b32.xlu0 %v2179, 64
        %v2564 = vpop.permute.xlu0 %2563
        %2565 = vrot.lane.b32.xlu0 %v2220, 64
        %v2566 = vpop.permute.xlu0 %2565
        %2567 = vrot.lane.b32.xlu0 %v2182, 64
        %v2568 = vpop.permute.xlu0 %2567
        %2569 = vrot.lane.b32.xlu0 %v2221, 64
        %v2570 = vpop.permute.xlu0 %2569
        %2571 = vrot.lane.b32.xlu0 %v2185, 64
        %v2572 = vpop.permute.xlu0 %2571
        %2573 = vrot.lane.b32.xlu0 %v2222, 64
        %v2574 = vpop.permute.xlu0 %2573
        %2575 = vrot.lane.b32.xlu0 %v2188, 64
        %v2576 = vpop.permute.xlu0 %2575
        %2577 = vrot.lane.b32.xlu0 %v2223, 64
        %v2578 = vpop.permute.xlu0 %2577
        %2579 = vrot.lane.b32.xlu0 %v2191, 64
        %v2580 = vpop.permute.xlu0 %2579
        %2581 = vrot.lane.b32.xlu0 0.0, 64
        %v2582 = vpop.permute.xlu0 %2581
        %2600 = vrot.lane.b32.xlu0 %v2254, 96
        %v2601 = vpop.permute.xlu0 %2600
        %2602 = vrot.lane.b32.xlu0 %v2256, 96
        %v2603 = vpop.permute.xlu0 %2602
        %2604 = vrot.lane.b32.xlu0 %v2259, 96
        %v2605 = vpop.permute.xlu0 %2604
        %2606 = vrot.lane.b32.xlu0 %v2261, 96
        %v2607 = vpop.permute.xlu0 %2606
        %2608 = vrot.lane.b32.xlu0 %v2264, 96
        %v2609 = vpop.permute.xlu0 %2608
        %2610 = vrot.lane.b32.xlu0 %v2266, 96
        %v2611 = vpop.permute.xlu0 %2610
        %2612 = vrot.lane.b32.xlu0 %v2269, 96
        %v2613 = vpop.permute.xlu0 %2612
        %2614 = vrot.lane.b32.xlu0 %v2271, 96
        %v2615 = vpop.permute.xlu0 %2614
        %2616 = vrot.lane.b32.xlu0 %v2274, 96
        %v2617 = vpop.permute.xlu0 %2616
        %2618 = vrot.lane.b32.xlu0 %v2276, 96
        %v2619 = vpop.permute.xlu0 %2618
        %2620 = vrot.lane.b32.xlu0 %v2279, 96
        %v2621 = vpop.permute.xlu0 %2620
        %2622 = vrot.lane.b32.xlu0 %v2281, 96
        %v2623 = vpop.permute.xlu0 %2622
        %2624 = vrot.lane.b32.xlu0 %v2284, 96
        %v2625 = vpop.permute.xlu0 %2624
        %2626 = vrot.lane.b32.xlu0 %v2286, 96
        %v2627 = vpop.permute.xlu0 %2626
        %2628 = vrot.lane.b32.xlu0 %v2289, 96
        %v2629 = vpop.permute.xlu0 %2628
        %2630 = vrot.lane.b32.xlu0 %v2291, 96
        %v2631 = vpop.permute.xlu0 %2630
        %2632 = vrot.lane.b32.xlu0 %v2251, 96
        %v2633 = vpop.permute.xlu0 %2632
        %v2651 = vsel %vm400, 0.0, %v2352
        %v2652 = vsel %vm400, %v2216, %v2354
        %v2653 = vsel %vm400, %v2170, %v2356
        %v2654 = vsel %vm400, %v2217, %v2358
        %v2655 = vsel %vm400, %v2173, %v2360
        %v2656 = vsel %vm400, %v2218, %v2362
        %v2657 = vsel %vm400, %v2176, %v2364
        %v2658 = vsel %vm400, %v2219, %v2366
        %v2659 = vsel %vm400, %v2179, %v2368
        %v2660 = vsel %vm400, %v2220, %v2370
        %v2661 = vsel %vm400, %v2182, %v2372
        %v2662 = vsel %vm400, %v2221, %v2374
        %v2663 = vsel %vm400, %v2185, %v2376
        %v2664 = vsel %vm400, %v2222, %v2378
        %v2665 = vsel %vm400, %v2188, %v2380
        %v2666 = vsel %vm400, %v2223, %v2382
        %v2667 = vsel %vm400, %v2191, %v2384
        %vm2668 = vcmask 523264
        %v2669 = vsel %vm2668, %v2651, %v2403
        %v2670 = vsel %vm2668, %v2652, %v2405
        %v2671 = vsel %vm2668, %v2653, %v2407
        %v2672 = vsel %vm2668, %v2654, %v2409
        %v2673 = vsel %vm2668, %v2655, %v2411
        %v2674 = vsel %vm2668, %v2656, %v2413
        %v2675 = vsel %vm2668, %v2657, %v2415
        %v2676 = vsel %vm2668, %v2658, %v2417
        %v2677 = vsel %vm2668, %v2659, %v2419
        %v2678 = vsel %vm2668, %v2660, %v2421
        %v2679 = vsel %vm2668, %v2661, %v2423
        %v2680 = vsel %vm2668, %v2662, %v2425
        %v2681 = vsel %vm2668, %v2663, %v2427
        %v2682 = vsel %vm2668, %v2664, %v2429
        %v2683 = vsel %vm2668, %v2665, %v2431
        %v2684 = vsel %vm2668, %v2666, %v2433
        %v2685 = vsel %vm2668, %v2667, %v2435
        %vm2686 = vcmask 785408
        %v2687 = vsel %vm2686, %v2669, %v2454
        %v2688 = vsel %vm2686, %v2669, %v2456
        %v2689 = vsel %vm2686, %v2670, %v2454
        %v2690 = vsel %vm2686, %v2671, %v2456
        %v2691 = vsel %vm2686, %v2670, %v2458
        %v2692 = vsel %vm2686, %v2671, %v2460
        %v2693 = vsel %vm2686, %v2672, %v2458
        %v2694 = vsel %vm2686, %v2673, %v2460
        %v2695 = vsel %vm2686, %v2672, %v2462
        %v2696 = vsel %vm2686, %v2673, %v2464
        %v2697 = vsel %vm2686, %v2674, %v2462
        %v2698 = vsel %vm2686, %v2675, %v2464
        %v2699 = vsel %vm2686, %v2674, %v2466
        %v2700 = vsel %vm2686, %v2675, %v2468
        %v2701 = vsel %vm2686, %v2676, %v2466
        %v2702 = vsel %vm2686, %v2677, %v2468
        %v2703 = vsel %vm2686, %v2676, %v2470
        %v2704 = vsel %vm2686, %v2677, %v2472
        %v2705 = vsel %vm2686, %v2678, %v2470
        %v2706 = vsel %vm2686, %v2679, %v2472
        %v2707 = vsel %vm2686, %v2678, %v2474
        %v2708 = vsel %vm2686, %v2679, %v2476
        %v2709 = vsel %vm2686, %v2680, %v2474
        %v2710 = vsel %vm2686, %v2681, %v2476
        %v2711 = vsel %vm2686, %v2680, %v2478
        %v2712 = vsel %vm2686, %v2681, %v2480
        %v2713 = vsel %vm2686, %v2682, %v2478
        %v2714 = vsel %vm2686, %v2683, %v2480
        %v2715 = vsel %vm2686, %v2682, %v2482
        %v2716 = vsel %vm2686, %v2683, %v2484
        %v2717 = vsel %vm2686, %v2684, %v2482
        %v2718 = vsel %vm2686, %v2685, %v2484
        %v2719 = vsel %vm400, %v2254, %v2502
        %v2720 = vsel %vm400, %v2256, %v2504
        %v2721 = vsel %vm400, %v2259, %v2506
        %v2722 = vsel %vm400, %v2261, %v2508
        %v2723 = vsel %vm400, %v2264, %v2510
        %v2724 = vsel %vm400, %v2266, %v2512
        %v2725 = vsel %vm400, %v2269, %v2514
        %v2726 = vsel %vm400, %v2271, %v2516
        %v2727 = vsel %vm400, %v2274, %v2518
        %v2728 = vsel %vm400, %v2276, %v2520
        %v2729 = vsel %vm400, %v2279, %v2522
        %v2730 = vsel %vm400, %v2281, %v2524
        %v2731 = vsel %vm400, %v2284, %v2526
        %v2732 = vsel %vm400, %v2286, %v2528
        %v2733 = vsel %vm400, %v2289, %v2530
        %v2734 = vsel %vm400, %v2291, %v2532
        %v2735 = vsel %vm2668, %v2719, %v2550
        %v2736 = vsel %vm2668, %v2720, %v2552
        %v2737 = vsel %vm2668, %v2719, %v2554
        %v2738 = vsel %vm2668, %v2720, %v2556
        %v2739 = vsel %vm2668, %v2721, %v2554
        %v2740 = vsel %vm2668, %v2722, %v2556
        %v2741 = vsel %vm2668, %v2721, %v2558
        %v2742 = vsel %vm2668, %v2722, %v2560
        %v2743 = vsel %vm2668, %v2723, %v2558
        %v2744 = vsel %vm2668, %v2724, %v2560
        %v2745 = vsel %vm2668, %v2723, %v2562
        %v2746 = vsel %vm2668, %v2724, %v2564
        %v2747 = vsel %vm2668, %v2725, %v2562
        %v2748 = vsel %vm2668, %v2726, %v2564
        %v2749 = vsel %vm2668, %v2725, %v2566
        %v2750 = vsel %vm2668, %v2726, %v2568
        %v2751 = vsel %vm2668, %v2727, %v2566
        %v2752 = vsel %vm2668, %v2728, %v2568
        %v2753 = vsel %vm2668, %v2727, %v2570
        %v2754 = vsel %vm2668, %v2728, %v2572
        %v2755 = vsel %vm2668, %v2729, %v2570
        %v2756 = vsel %vm2668, %v2730, %v2572
        %v2757 = vsel %vm2668, %v2729, %v2574
        %v2758 = vsel %vm2668, %v2730, %v2576
        %v2759 = vsel %vm2668, %v2731, %v2574
        %v2760 = vsel %vm2668, %v2732, %v2576
        %v2761 = vsel %vm2668, %v2731, %v2578
        %v2762 = vsel %vm2668, %v2732, %v2580
        %v2763 = vsel %vm2668, %v2733, %v2578
        %v2764 = vsel %vm2668, %v2734, %v2580
        %v2765 = vsel %vm2668, %v2733, %v2582
        %v2766 = vsel %vm2668, %v2734, %v2582
        %v2767 = vsel %vm2686, %v2735, %v2601
        %v2768 = vsel %vm2686, %v2736, %v2603
        %v2769 = vsel %vm2686, %v2737, %v2605
        %v2770 = vsel %vm2686, %v2738, %v2607
        %v2771 = vsel %vm2686, %v2739, %v2605
        %v2772 = vsel %vm2686, %v2740, %v2607
        %v2773 = vsel %vm2686, %v2741, %v2609
        %v2774 = vsel %vm2686, %v2742, %v2611
        %v2775 = vsel %vm2686, %v2743, %v2609
        %v2776 = vsel %vm2686, %v2744, %v2611
        %v2777 = vsel %vm2686, %v2745, %v2613
        %v2778 = vsel %vm2686, %v2746, %v2615
        %v2779 = vsel %vm2686, %v2747, %v2613
        %v2780 = vsel %vm2686, %v2748, %v2615
        %v2781 = vsel %vm2686, %v2749, %v2617
        %v2782 = vsel %vm2686, %v2750, %v2619
        %v2783 = vsel %vm2686, %v2751, %v2617
        %v2784 = vsel %vm2686, %v2752, %v2619
        %v2785 = vsel %vm2686, %v2753, %v2621
        %v2786 = vsel %vm2686, %v2754, %v2623
        %v2787 = vsel %vm2686, %v2755, %v2621
        %v2788 = vsel %vm2686, %v2756, %v2623
        %v2789 = vsel %vm2686, %v2757, %v2625
        %v2790 = vsel %vm2686, %v2758, %v2627
        %v2791 = vsel %vm2686, %v2759, %v2625
        %v2792 = vsel %vm2686, %v2760, %v2627
        %v2793 = vsel %vm2686, %v2761, %v2629
        %v2794 = vsel %vm2686, %v2762, %v2631
        %v2795 = vsel %vm2686, %v2763, %v2629
        %v2796 = vsel %vm2686, %v2764, %v2631
        %v2797 = vsel %vm2686, %v2765, %v2633
        %v2798 = vsel %vm2686, %v2766, %v2633
        %v2800 = vlaneseq
        %v2801 = vshrl.u32 %v2800, 7
        %v2802 = vsub.s32 0, %v2801
        %v2803 = vrot.slane %v1894, %v2802
        %v2805 = vsel %vm400, %v2297, 0
        %v2807 = vsel %vm400, %v2299, 0
        %v2809 = vsel %vm400, %v2302, 0
        %v2811 = vsel %vm400, %v2304, 0
        %v2813 = vsel %vm400, %v2307, 0
        %v2815 = vsel %vm400, %v2309, 0
        %v2817 = vsel %vm400, %v2312, 0
        %v2819 = vsel %vm400, %v2314, 0
        %v2821 = vsel %vm400, %v2317, 0
        %v2823 = vsel %vm400, %v2319, 0
        %v2825 = vsel %vm400, %v2322, 0
        %v2827 = vsel %vm400, %v2324, 0
        %v2829 = vsel %vm400, %v2327, 0
        %v2831 = vsel %vm400, %v2329, 0
        %v2833 = vsel %vm400, %v2332, 0
        %v2835 = vsel %vm400, %v2334, 0
        %v2837 = vsel %vm400, %v2294, 0
        %2839 = vmatprep.subr.mxu0 0.0
        %2840 = vmatpush1.msra.mxu0 %v1858
        %2841 = vmatprep.subr.mxu0 0.0
        %2842 = vmatpush1.msra.mxu0 %v1859
        %2843 = vmatprep.subr.mxu0 0.0
        %2844 = vmatpush1.msra.mxu0 %v1860
        %2845 = vmatprep.subr.mxu0 0.0
        %2846 = vmatpush1.msra.mxu0 %v1861
        %2847 = vmatprep.subr.mxu0 0.0
        %2848 = vmatpush1.msra.mxu0 %v1862
        %2849 = vmatprep.subr.mxu0 0.0
        %2850 = vmatpush1.msra.mxu0 %v1863
        %2851 = vmatprep.subr.mxu0 0.0
        %2852 = vmatpush1.msra.mxu0 %v1864
        %2853 = vmatprep.subr.mxu0 0.0
        %2854 = vmatpush1.msra.mxu0 %v1865
        %2855 = vmatprep.subr.mxu0 0.0
        %2856 = vmatpush1.msra.mxu0 %v1866
        %2857 = vmatprep.subr.mxu0 0.0
        %2858 = vmatpush1.msra.mxu0 %v1867
        %2859 = vmatprep.subr.mxu0 0.0
        %2860 = vmatpush1.msra.mxu0 %v1868
        %2861 = vmatprep.subr.mxu0 0.0
        %2862 = vmatpush1.msra.mxu0 %v1869
        %2863 = vmatprep.subr.mxu0 0.0
        %2864 = vmatpush1.msra.mxu0 %v1870
        %2865 = vmatprep.subr.mxu0 0.0
        %2866 = vmatpush1.msra.mxu0 %v1871
        %2867 = vmatprep.subr.mxu0 0.0
        %2868 = vmatpush1.msra.mxu0 %v1872
        %2869 = vmatprep.subr.mxu0 0.0
        %2870 = vmatpush1.msra.mxu0 %v1873
        %2871 = vmatprep.subr.mxu0 0.0
        %2872 = vmatpush1.msra.mxu0 %v1874
        %2873 = vmatprep.subr.mxu0 0.0
        %2874 = vmatpush1.msra.mxu0 %v1875
        %2875 = vmatprep.subr.mxu0 0.0
        %2876 = vmatpush1.msra.mxu0 %v1876
        %2877 = vmatprep.subr.mxu0 0.0
        %2878 = vmatpush1.msra.mxu0 %v1877
        %2879 = vmatprep.subr.mxu0 0.0
        %2880 = vmatpush1.msra.mxu0 %v1878
        %2881 = vmatprep.subr.mxu0 0.0
        %2882 = vmatpush1.msra.mxu0 %v1879
        %2883 = vmatprep.subr.mxu0 0.0
        %2884 = vmatpush1.msra.mxu0 %v1880
        %2885 = vmatprep.subr.mxu0 0.0
        %2886 = vmatpush1.msra.mxu0 %v1881
        %2887 = vmatprep.subr.mxu0 0.0
        %2888 = vmatpush1.msra.mxu0 %v1882
        %2889 = vmatprep.subr.mxu0 0.0
        %2890 = vmatpush1.msra.mxu0 %v1883
        %2891 = vmatprep.subr.mxu0 0.0
        %2892 = vmatpush1.msra.mxu0 %v1884
        %2893 = vmatprep.subr.mxu0 0.0
        %2894 = vmatpush1.msra.mxu0 %v1885
        %2895 = vmatprep.subr.mxu0 0.0
        %2896 = vmatpush1.msra.mxu0 %v1886
        %2897 = vmatprep.subr.mxu0 0.0
        %2898 = vmatpush1.msra.mxu0 %v1887
        %2899 = vmatprep.subr.mxu0 0.0
        %2900 = vmatpush1.msra.mxu0 %v1888
        %2901 = vmatprep.subr.mxu0 0.0
        %2902 = vmatpush1.msra.mxu0 %v1889
        %2903 = vmatprep.mubr.f32.mxu0 %v2767
        %2904 = vmatmul.mubr.f32.gmra.mrb[0].mxu0 %v2687
        %v2905 = vpop.f32.mrb[0].mxu0
        %v2906 = vadd.f32 %v2803, %v2905
        %v2907 = vpop.f32.mrb[0].mxu0
        %2908 = vmatprep.mubr.f32.mxu0 %v2768
        %2909 = vmatmul.mubr.f32.gmra.mrb[0].mxu0 %v2688
        %v2910 = vpop.f32.mrb[0].mxu0
        %v2911 = vadd.f32 %v2803, %v2910
        %v2912 = vpop.f32.mrb[0].mxu0
        %2913 = vmatprep.mubr.f32.mxu0 %v2769
        %2914 = vmatmul.mubr.f32.gmra.mrb[0].mxu0 %v2689
        %v2915 = vpop.f32.mrb[0].mxu0
        %v2916 = vadd.f32 %v2803, %v2915
        %v2917 = vpop.f32.mrb[0].mxu0
        %2918 = vmatprep.mubr.f32.mxu0 %v2770
        %2919 = vmatmul.mubr.f32.gmra.mrb[0].mxu0 %v2690
        %v2920 = vpop.f32.mrb[0].mxu0
        %v2921 = vadd.f32 %v2803, %v2920
        %v2922 = vpop.f32.mrb[0].mxu0
        %2923 = vmatprep.mubr.f32.mxu0 %v2771
        %2924 = vmatmul.mubr.f32.gmra.mrb[0].mxu0 %v2691
        %v2925 = vpop.f32.mrb[0].mxu0
        %v2926 = vadd.f32 %v2803, %v2925
        %v2927 = vpop.f32.mrb[0].mxu0
        %2928 = vmatprep.mubr.f32.mxu0 %v2772
        %2929 = vmatmul.mubr.f32.gmra.mrb[0].mxu0 %v2692
        %v2930 = vpop.f32.mrb[0].mxu0
        %v2931 = vadd.f32 %v2803, %v2930
        %v2932 = vpop.f32.mrb[0].mxu0
        %2933 = vmatprep.mubr.f32.mxu0 %v2773
        %2934 = vmatmul.mubr.f32.gmra.mrb[0].mxu0 %v2693
        %v2935 = vpop.f32.mrb[0].mxu0
        %v2936 = vadd.f32 %v2803, %v2935
        %v2937 = vpop.f32.mrb[0].mxu0
        %2938 = vmatprep.mubr.f32.mxu0 %v2774
        %2939 = vmatmul.mubr.f32.gmra.mrb[0].mxu0 %v2694
        %v2940 = vpop.f32.mrb[0].mxu0
        %v2941 = vadd.f32 %v2803, %v2940
        %v2942 = vpop.f32.mrb[0].mxu0
        %2943 = vmatprep.mubr.f32.mxu0 %v2775
        %2944 = vmatmul.mubr.f32.gmra.mrb[0].mxu0 %v2695
        %v2945 = vpop.f32.mrb[0].mxu0
        %v2946 = vadd.f32 %v2803, %v2945
        %v2947 = vpop.f32.mrb[0].mxu0
        %2948 = vmatprep.mubr.f32.mxu0 %v2776
        %2949 = vmatmul.mubr.f32.gmra.mrb[0].mxu0 %v2696
        %v2950 = vpop.f32.mrb[0].mxu0
        %v2951 = vadd.f32 %v2803, %v2950
        %v2952 = vpop.f32.mrb[0].mxu0
        %2953 = vmatprep.mubr.f32.mxu0 %v2777
        %2954 = vmatmul.mubr.f32.gmra.mrb[0].mxu0 %v2697
        %v2955 = vpop.f32.mrb[0].mxu0
        %v2956 = vadd.f32 %v2803, %v2955
        %v2957 = vpop.f32.mrb[0].mxu0
        %2958 = vmatprep.mubr.f32.mxu0 %v2778
        %2959 = vmatmul.mubr.f32.gmra.mrb[0].mxu0 %v2698
        %v2960 = vpop.f32.mrb[0].mxu0
        %v2961 = vadd.f32 %v2803, %v2960
        %v2962 = vpop.f32.mrb[0].mxu0
        %2963 = vmatprep.mubr.f32.mxu0 %v2779
        %2964 = vmatmul.mubr.f32.gmra.mrb[0].mxu0 %v2699
        %v2965 = vpop.f32.mrb[0].mxu0
        %v2966 = vadd.f32 %v2803, %v2965
        %v2967 = vpop.f32.mrb[0].mxu0
        %2968 = vmatprep.mubr.f32.mxu0 %v2780
        %2969 = vmatmul.mubr.f32.gmra.mrb[0].mxu0 %v2700
        %v2970 = vpop.f32.mrb[0].mxu0
        %v2971 = vadd.f32 %v2803, %v2970
        %v2972 = vpop.f32.mrb[0].mxu0
        %2973 = vmatprep.mubr.f32.mxu0 %v2781
        %2974 = vmatmul.mubr.f32.gmra.mrb[0].mxu0 %v2701
        %v2975 = vpop.f32.mrb[0].mxu0
        %v2976 = vadd.f32 %v2803, %v2975
        %v2977 = vpop.f32.mrb[0].mxu0
        %2978 = vmatprep.mubr.f32.mxu0 %v2782
        %2979 = vmatmul.mubr.f32.gmra.mrb[0].mxu0 %v2702
        %v2980 = vpop.f32.mrb[0].mxu0
        %v2981 = vadd.f32 %v2803, %v2980
        %v2982 = vpop.f32.mrb[0].mxu0
        %2983 = vmatprep.mubr.f32.mxu0 %v2783
        %2984 = vmatmul.mubr.f32.gmra.mrb[0].mxu0 %v2703
        %v2985 = vpop.f32.mrb[0].mxu0
        %v2986 = vadd.f32 %v2803, %v2985
        %v2987 = vpop.f32.mrb[0].mxu0
        %2988 = vmatprep.mubr.f32.mxu0 %v2784
        %2989 = vmatmul.mubr.f32.gmra.mrb[0].mxu0 %v2704
        %v2990 = vpop.f32.mrb[0].mxu0
        %v2991 = vadd.f32 %v2803, %v2990
        %v2992 = vpop.f32.mrb[0].mxu0
        %2993 = vmatprep.mubr.f32.mxu0 %v2785
        %2994 = vmatmul.mubr.f32.gmra.mrb[0].mxu0 %v2705
        %v2995 = vpop.f32.mrb[0].mxu0
        %v2996 = vadd.f32 %v2803, %v2995
        %v2997 = vpop.f32.mrb[0].mxu0
        %2998 = vmatprep.mubr.f32.mxu0 %v2786
        %2999 = vmatmul.mubr.f32.gmra.mrb[0].mxu0 %v2706
        %v3000 = vpop.f32.mrb[0].mxu0
        %v3001 = vadd.f32 %v2803, %v3000
        %v3002 = vpop.f32.mrb[0].mxu0
        %3003 = vmatprep.mubr.f32.mxu0 %v2787
        %3004 = vmatmul.mubr.f32.gmra.mrb[0].mxu0 %v2707
        %v3005 = vpop.f32.mrb[0].mxu0
        %v3006 = vadd.f32 %v2803, %v3005
        %v3007 = vpop.f32.mrb[0].mxu0
        %3008 = vmatprep.mubr.f32.mxu0 %v2788
        %3009 = vmatmul.mubr.f32.gmra.mrb[0].mxu0 %v2708
        %v3010 = vpop.f32.mrb[0].mxu0
        %v3011 = vadd.f32 %v2803, %v3010
        %v3012 = vpop.f32.mrb[0].mxu0
        %3013 = vmatprep.mubr.f32.mxu0 %v2789
        %3014 = vmatmul.mubr.f32.gmra.mrb[0].mxu0 %v2709
        %v3015 = vpop.f32.mrb[0].mxu0
        %v3016 = vadd.f32 %v2803, %v3015
        %v3017 = vpop.f32.mrb[0].mxu0
        %3018 = vmatprep.mubr.f32.mxu0 %v2790
        %3019 = vmatmul.mubr.f32.gmra.mrb[0].mxu0 %v2710
        %v3020 = vpop.f32.mrb[0].mxu0
        %v3021 = vadd.f32 %v2803, %v3020
        %v3022 = vpop.f32.mrb[0].mxu0
        %3023 = vmatprep.mubr.f32.mxu0 %v2791
        %3024 = vmatmul.mubr.f32.gmra.mrb[0].mxu0 %v2711
        %v3025 = vpop.f32.mrb[0].mxu0
        %v3026 = vadd.f32 %v2803, %v3025
        %v3027 = vpop.f32.mrb[0].mxu0
        %3028 = vmatprep.mubr.f32.mxu0 %v2792
        %3029 = vmatmul.mubr.f32.gmra.mrb[0].mxu0 %v2712
        %v3030 = vpop.f32.mrb[0].mxu0
        %v3031 = vadd.f32 %v2803, %v3030
        %v3032 = vpop.f32.mrb[0].mxu0
        %3033 = vmatprep.mubr.f32.mxu0 %v2793
        %3034 = vmatmul.mubr.f32.gmra.mrb[0].mxu0 %v2713
        %v3035 = vpop.f32.mrb[0].mxu0
        %v3036 = vadd.f32 %v2803, %v3035
        %v3037 = vpop.f32.mrb[0].mxu0
        %3038 = vmatprep.mubr.f32.mxu0 %v2794
        %3039 = vmatmul.mubr.f32.gmra.mrb[0].mxu0 %v2714
        %v3040 = vpop.f32.mrb[0].mxu0
        %v3041 = vadd.f32 %v2803, %v3040
        %v3042 = vpop.f32.mrb[0].mxu0
        %3043 = vmatprep.mubr.f32.mxu0 %v2795
        %3044 = vmatmul.mubr.f32.gmra.mrb[0].mxu0 %v2715
        %v3045 = vpop.f32.mrb[0].mxu0
        %v3046 = vadd.f32 %v2803, %v3045
        %v3047 = vpop.f32.mrb[0].mxu0
        %3048 = vmatprep.mubr.f32.mxu0 %v2796
        %3049 = vmatmul.mubr.f32.gmra.mrb[0].mxu0 %v2716
        %v3050 = vpop.f32.mrb[0].mxu0
        %v3051 = vadd.f32 %v2803, %v3050
        %v3052 = vpop.f32.mrb[0].mxu0
        %3053 = vmatprep.mubr.f32.mxu0 %v2797
        %3054 = vmatmul.mubr.f32.gmra.mrb[0].mxu0 %v2717
        %v3055 = vpop.f32.mrb[0].mxu0
        %v3056 = vadd.f32 %v2803, %v3055
        %v3057 = vpop.f32.mrb[0].mxu0
        %3058 = vmatprep.mubr.f32.mxu0 %v2798
        %3059 = vmatmul.mubr.f32.gmra.mrb[0].mxu0 %v2718
        %v3060 = vpop.f32.mrb[0].mxu0
        %v3061 = vadd.f32 %v2803, %v3060
        %v3062 = vpop.f32.mrb[0].mxu0
        %3063 = vdwg.mxu0
        %3064 = vmatprep.subr.mxu0 0.0
        %3065 = vmatpush1.msra.mxu0 %v1890
        %3066 = vmatprep.subr.mxu0 0.0
        %3067 = vmatpush1.msra.mxu0 %v1891
        %3068 = vmatprep.subr.mxu0 0.0
        %3069 = vmatpush1.msra.mxu0 %v1892
        %3070 = vmatprep.subr.mxu0 0.0
        %3071 = vmatpush1.msra.mxu0 %v1893
        %3072 = vmatprep.subr.mxu0 0.0
        %3073 = vmatpush1.msra.mxu0 0.0
        %3074 = vmatprep.subr.mxu0 0.0
        %3075 = vmatpush1.msra.mxu0 0.0
        %3076 = vmatprep.subr.mxu0 0.0
        %3077 = vmatpush1.msra.mxu0 0.0
        %3078 = vmatprep.subr.mxu0 0.0
        %3079 = vmatpush1.msra.mxu0 0.0
        %3080 = vmatprep.subr.mxu0 0.0
        %3081 = vmatpush1.msra.mxu0 0.0
        %3082 = vmatprep.subr.mxu0 0.0
        %3083 = vmatpush1.msra.mxu0 0.0
        %3084 = vmatprep.subr.mxu0 0.0
        %3085 = vmatpush1.msra.mxu0 0.0
        %3086 = vmatprep.subr.mxu0 0.0
        %3087 = vmatpush1.msra.mxu0 0.0
        %3088 = vmatprep.subr.mxu0 0.0
        %3089 = vmatpush1.msra.mxu0 0.0
        %3090 = vmatprep.subr.mxu0 0.0
        %3091 = vmatpush1.msra.mxu0 0.0
        %3092 = vmatprep.subr.mxu0 0.0
        %3093 = vmatpush1.msra.mxu0 0.0
        %3094 = vmatprep.subr.mxu0 0.0
        %3095 = vmatpush1.msra.mxu0 0.0
        %3096 = vmatprep.subr.mxu0 0.0
        %3097 = vmatpush1.msra.mxu0 0.0
        %3098 = vmatprep.subr.mxu0 0.0
        %3099 = vmatpush1.msra.mxu0 0.0
        %3100 = vmatprep.subr.mxu0 0.0
        %3101 = vmatpush1.msra.mxu0 0.0
        %3102 = vmatprep.subr.mxu0 0.0
        %3103 = vmatpush1.msra.mxu0 0.0
        %3104 = vmatprep.subr.mxu0 0.0
        %3105 = vmatpush1.msra.mxu0 0.0
        %3106 = vmatprep.subr.mxu0 0.0
        %3107 = vmatpush1.msra.mxu0 0.0
        %3108 = vmatprep.subr.mxu0 0.0
        %3109 = vmatpush1.msra.mxu0 0.0
        %3110 = vmatprep.subr.mxu0 0.0
        %3111 = vmatpush1.msra.mxu0 0.0
        %3112 = vmatprep.subr.mxu0 0.0
        %3113 = vmatpush1.msra.mxu0 0.0
        %3114 = vmatprep.subr.mxu0 0.0
        %3115 = vmatpush1.msra.mxu0 0.0
        %3116 = vmatprep.subr.mxu0 0.0
        %3117 = vmatpush1.msra.mxu0 0.0
        %3118 = vmatprep.subr.mxu0 0.0
        %3119 = vmatpush1.msra.mxu0 0.0
        %3120 = vmatprep.subr.mxu0 0.0
        %3121 = vmatpush1.msra.mxu0 0.0
        %3122 = vmatprep.subr.mxu0 0.0
        %3123 = vmatpush1.msra.mxu0 0.0
        %3124 = vmatprep.subr.mxu0 0.0
        %3125 = vmatpush1.msra.mxu0 0.0
        %3126 = vmatprep.subr.mxu0 0.0
        %3127 = vmatpush1.msra.mxu0 0.0
        %3128 = vmatprep.mubr.f32.mxu0 0.0
        %3129 = vmatmul.mubr.f32.gmra.mrb[0].mxu0 %v2805
        %v3130 = vpop.f32.mrb[0].mxu0
        %v3131 = vadd.f32 %v2906, %v3130
        %v3132 = vpop.f32.mrb[0].mxu0
        %3133 = vmatprep.mubr.f32.mxu0 0.0
        %3134 = vmatmul.mubr.f32.gmra.mrb[0].mxu0 %v2807
        %v3135 = vpop.f32.mrb[0].mxu0
        %v3136 = vadd.f32 %v2911, %v3135
        %v3137 = vpop.f32.mrb[0].mxu0
        %3138 = vmatprep.mubr.f32.mxu0 0.0
        %3139 = vmatmul.mubr.f32.gmra.mrb[0].mxu0 %v2809
        %v3140 = vpop.f32.mrb[0].mxu0
        %v3141 = vadd.f32 %v2916, %v3140
        %v3142 = vpop.f32.mrb[0].mxu0
        %3143 = vmatprep.mubr.f32.mxu0 0.0
        %3144 = vmatmul.mubr.f32.gmra.mrb[0].mxu0 %v2811
        %v3145 = vpop.f32.mrb[0].mxu0
        %v3146 = vadd.f32 %v2921, %v3145
        %v3147 = vpop.f32.mrb[0].mxu0
        %3148 = vmatprep.mubr.f32.mxu0 0.0
        %3149 = vmatmul.mubr.f32.gmra.mrb[0].mxu0 %v2809
        %v3150 = vpop.f32.mrb[0].mxu0
        %v3151 = vadd.f32 %v2926, %v3150
        %v3152 = vpop.f32.mrb[0].mxu0
        %3153 = vmatprep.mubr.f32.mxu0 0.0
        %3154 = vmatmul.mubr.f32.gmra.mrb[0].mxu0 %v2811
        %v3155 = vpop.f32.mrb[0].mxu0
        %v3156 = vadd.f32 %v2931, %v3155
        %v3157 = vpop.f32.mrb[0].mxu0
        %3158 = vmatprep.mubr.f32.mxu0 0.0
        %3159 = vmatmul.mubr.f32.gmra.mrb[0].mxu0 %v2813
        %v3160 = vpop.f32.mrb[0].mxu0
        %v3161 = vadd.f32 %v2936, %v3160
        %v3162 = vpop.f32.mrb[0].mxu0
        %3163 = vmatprep.mubr.f32.mxu0 0.0
        %3164 = vmatmul.mubr.f32.gmra.mrb[0].mxu0 %v2815
        %v3165 = vpop.f32.mrb[0].mxu0
        %v3166 = vadd.f32 %v2941, %v3165
        %v3167 = vpop.f32.mrb[0].mxu0
        %3168 = vmatprep.mubr.f32.mxu0 0.0
        %3169 = vmatmul.mubr.f32.gmra.mrb[0].mxu0 %v2813
        %v3170 = vpop.f32.mrb[0].mxu0
        %v3171 = vadd.f32 %v2946, %v3170
        %v3172 = vpop.f32.mrb[0].mxu0
        %3173 = vmatprep.mubr.f32.mxu0 0.0
        %3174 = vmatmul.mubr.f32.gmra.mrb[0].mxu0 %v2815
        %v3175 = vpop.f32.mrb[0].mxu0
        %v3176 = vadd.f32 %v2951, %v3175
        %v3177 = vpop.f32.mrb[0].mxu0
        %3178 = vmatprep.mubr.f32.mxu0 0.0
        %3179 = vmatmul.mubr.f32.gmra.mrb[0].mxu0 %v2817
        %v3180 = vpop.f32.mrb[0].mxu0
        %v3181 = vadd.f32 %v2956, %v3180
        %v3182 = vpop.f32.mrb[0].mxu0
        %3183 = vmatprep.mubr.f32.mxu0 0.0
        %3184 = vmatmul.mubr.f32.gmra.mrb[0].mxu0 %v2819
        %v3185 = vpop.f32.mrb[0].mxu0
        %v3186 = vadd.f32 %v2961, %v3185
        %v3187 = vpop.f32.mrb[0].mxu0
        %3188 = vmatprep.mubr.f32.mxu0 0.0
        %3189 = vmatmul.mubr.f32.gmra.mrb[0].mxu0 %v2817
        %v3190 = vpop.f32.mrb[0].mxu0
        %v3191 = vadd.f32 %v2966, %v3190
        %v3192 = vpop.f32.mrb[0].mxu0
        %3193 = vmatprep.mubr.f32.mxu0 0.0
        %3194 = vmatmul.mubr.f32.gmra.mrb[0].mxu0 %v2819
        %v3195 = vpop.f32.mrb[0].mxu0
        %v3196 = vadd.f32 %v2971, %v3195
        %v3197 = vpop.f32.mrb[0].mxu0
        %3198 = vmatprep.mubr.f32.mxu0 0.0
        %3199 = vmatmul.mubr.f32.gmra.mrb[0].mxu0 %v2821
        %v3200 = vpop.f32.mrb[0].mxu0
        %v3201 = vadd.f32 %v2976, %v3200
        %v3202 = vpop.f32.mrb[0].mxu0
        %3203 = vmatprep.mubr.f32.mxu0 0.0
        %3204 = vmatmul.mubr.f32.gmra.mrb[0].mxu0 %v2823
        %v3205 = vpop.f32.mrb[0].mxu0
        %v3206 = vadd.f32 %v2981, %v3205
        %v3207 = vpop.f32.mrb[0].mxu0
        %3208 = vmatprep.mubr.f32.mxu0 0.0
        %3209 = vmatmul.mubr.f32.gmra.mrb[0].mxu0 %v2821
        %v3210 = vpop.f32.mrb[0].mxu0
        %v3211 = vadd.f32 %v2986, %v3210
        %v3212 = vpop.f32.mrb[0].mxu0
        %3213 = vmatprep.mubr.f32.mxu0 0.0
        %3214 = vmatmul.mubr.f32.gmra.mrb[0].mxu0 %v2823
        %v3215 = vpop.f32.mrb[0].mxu0
        %v3216 = vadd.f32 %v2991, %v3215
        %v3217 = vpop.f32.mrb[0].mxu0
        %3218 = vmatprep.mubr.f32.mxu0 0.0
        %3219 = vmatmul.mubr.f32.gmra.mrb[0].mxu0 %v2825
        %v3220 = vpop.f32.mrb[0].mxu0
        %v3221 = vadd.f32 %v2996, %v3220
        %v3222 = vpop.f32.mrb[0].mxu0
        %3223 = vmatprep.mubr.f32.mxu0 0.0
        %3224 = vmatmul.mubr.f32.gmra.mrb[0].mxu0 %v2827
        %v3225 = vpop.f32.mrb[0].mxu0
        %v3226 = vadd.f32 %v3001, %v3225
        %v3227 = vpop.f32.mrb[0].mxu0
        %3228 = vmatprep.mubr.f32.mxu0 0.0
        %3229 = vmatmul.mubr.f32.gmra.mrb[0].mxu0 %v2825
        %v3230 = vpop.f32.mrb[0].mxu0
        %v3231 = vadd.f32 %v3006, %v3230
        %v3232 = vpop.f32.mrb[0].mxu0
        %3233 = vmatprep.mubr.f32.mxu0 0.0
        %3234 = vmatmul.mubr.f32.gmra.mrb[0].mxu0 %v2827
        %v3235 = vpop.f32.mrb[0].mxu0
        %v3236 = vadd.f32 %v3011, %v3235
        %v3237 = vpop.f32.mrb[0].mxu0
        %3238 = vmatprep.mubr.f32.mxu0 0.0
        %3239 = vmatmul.mubr.f32.gmra.mrb[0].mxu0 %v2829
        %v3240 = vpop.f32.mrb[0].mxu0
        %v3241 = vadd.f32 %v3016, %v3240
        %v3242 = vpop.f32.mrb[0].mxu0
        %3243 = vmatprep.mubr.f32.mxu0 0.0
        %3244 = vmatmul.mubr.f32.gmra.mrb[0].mxu0 %v2831
        %v3245 = vpop.f32.mrb[0].mxu0
        %v3246 = vadd.f32 %v3021, %v3245
        %v3247 = vpop.f32.mrb[0].mxu0
        %3248 = vmatprep.mubr.f32.mxu0 0.0
        %3249 = vmatmul.mubr.f32.gmra.mrb[0].mxu0 %v2829
        %v3250 = vpop.f32.mrb[0].mxu0
        %v3251 = vadd.f32 %v3026, %v3250
        %v3252 = vpop.f32.mrb[0].mxu0
        %3253 = vmatprep.mubr.f32.mxu0 0.0
        %3254 = vmatmul.mubr.f32.gmra.mrb[0].mxu0 %v2831
        %v3255 = vpop.f32.mrb[0].mxu0
        %v3256 = vadd.f32 %v3031, %v3255
        %v3257 = vpop.f32.mrb[0].mxu0
        %3258 = vmatprep.mubr.f32.mxu0 0.0
        %3259 = vmatmul.mubr.f32.gmra.mrb[0].mxu0 %v2833
        %v3260 = vpop.f32.mrb[0].mxu0
        %v3261 = vadd.f32 %v3036, %v3260
        %v3262 = vpop.f32.mrb[0].mxu0
        %3263 = vmatprep.mubr.f32.mxu0 0.0
        %3264 = vmatmul.mubr.f32.gmra.mrb[0].mxu0 %v2835
        %v3265 = vpop.f32.mrb[0].mxu0
        %v3266 = vadd.f32 %v3041, %v3265
        %v3267 = vpop.f32.mrb[0].mxu0
        %3268 = vmatprep.mubr.f32.mxu0 0.0
        %3269 = vmatmul.mubr.f32.gmra.mrb[0].mxu0 %v2833
        %v3270 = vpop.f32.mrb[0].mxu0
        %v3271 = vadd.f32 %v3046, %v3270
        %v3272 = vpop.f32.mrb[0].mxu0
        %3273 = vmatprep.mubr.f32.mxu0 0.0
        %3274 = vmatmul.mubr.f32.gmra.mrb[0].mxu0 %v2835
        %v3275 = vpop.f32.mrb[0].mxu0
        %v3276 = vadd.f32 %v3051, %v3275
        %v3277 = vpop.f32.mrb[0].mxu0
        %3278 = vmatprep.mubr.f32.mxu0 0.0
        %3279 = vmatmul.mubr.f32.gmra.mrb[0].mxu0 %v2837
        %v3280 = vpop.f32.mrb[0].mxu0
        %v3281 = vadd.f32 %v3056, %v3280
        %v3282 = vpop.f32.mrb[0].mxu0
        %3283 = vmatprep.mubr.f32.mxu0 0.0
        %3284 = vmatmul.mubr.f32.gmra.mrb[0].mxu0 %v2837
        %v3285 = vpop.f32.mrb[0].mxu0
        %v3286 = vadd.f32 %v3061, %v3285
        %v3287 = vpop.f32.mrb[0].mxu0
        %3288 = vdwg.mxu0
        %v3289 = vld [vmem:[%s5] sm:$0x1]
        %v3290 = vld [vmem:[%s6] sm:$0x1]
        %v3291 = vsel %vm400, %v3131, 0.0
        %v3292 = vsel %vm400, %v3136, 0.0
        %v3293 = vadd.f32 %v3291, %v3292
        %v3294 = vsel %vm400, %v3141, 0.0
        %v3295 = vadd.f32 %v3293, %v3294
        %v3296 = vsel %vm400, %v3146, 0.0
        %v3297 = vadd.f32 %v3295, %v3296
        %v3298 = vsel %vm400, %v3151, 0.0
        %v3299 = vadd.f32 %v3297, %v3298
        %v3300 = vsel %vm400, %v3156, 0.0
        %v3301 = vadd.f32 %v3299, %v3300
        %v3302 = vsel %vm400, %v3161, 0.0
        %v3303 = vadd.f32 %v3301, %v3302
        %v3304 = vsel %vm400, %v3166, 0.0
        %v3305 = vadd.f32 %v3303, %v3304
        %v3306 = vsel %vm400, %v3171, 0.0
        %v3307 = vadd.f32 %v3305, %v3306
        %v3308 = vsel %vm400, %v3176, 0.0
        %v3309 = vadd.f32 %v3307, %v3308
        %v3310 = vsel %vm400, %v3181, 0.0
        %v3311 = vadd.f32 %v3309, %v3310
        %v3312 = vsel %vm400, %v3186, 0.0
        %v3313 = vadd.f32 %v3311, %v3312
        %v3314 = vsel %vm400, %v3191, 0.0
        %v3315 = vadd.f32 %v3313, %v3314
        %v3316 = vsel %vm400, %v3196, 0.0
        %v3317 = vadd.f32 %v3315, %v3316
        %v3318 = vsel %vm400, %v3201, 0.0
        %v3319 = vadd.f32 %v3317, %v3318
        %v3320 = vsel %vm400, %v3206, 0.0
        %v3321 = vadd.f32 %v3319, %v3320
        %v3322 = vsel %vm400, %v3211, 0.0
        %v3323 = vadd.f32 %v3321, %v3322
        %v3324 = vsel %vm400, %v3216, 0.0
        %v3325 = vadd.f32 %v3323, %v3324
        %v3326 = vsel %vm400, %v3221, 0.0
        %v3327 = vadd.f32 %v3325, %v3326
        %v3328 = vsel %vm400, %v3226, 0.0
        %v3329 = vadd.f32 %v3327, %v3328
        %v3330 = vsel %vm400, %v3231, 0.0
        %v3331 = vadd.f32 %v3329, %v3330
        %v3332 = vsel %vm400, %v3236, 0.0
        %v3333 = vadd.f32 %v3331, %v3332
        %v3334 = vsel %vm400, %v3241, 0.0
        %v3335 = vadd.f32 %v3333, %v3334
        %v3336 = vsel %vm400, %v3246, 0.0
        %v3337 = vadd.f32 %v3335, %v3336
        %v3338 = vsel %vm400, %v3251, 0.0
        %v3339 = vadd.f32 %v3337, %v3338
        %v3340 = vsel %vm400, %v3256, 0.0
        %v3341 = vadd.f32 %v3339, %v3340
        %v3342 = vsel %vm400, %v3261, 0.0
        %v3343 = vadd.f32 %v3341, %v3342
        %v3344 = vsel %vm400, %v3266, 0.0
        %v3345 = vadd.f32 %v3343, %v3344
        %v3346 = vsel %vm400, %v3271, 0.0
        %v3347 = vadd.f32 %v3345, %v3346
        %v3348 = vsel %vm400, %v3276, 0.0
        %v3349 = vadd.f32 %v3347, %v3348
        %v3350 = vsel %vm400, %v3281, 0.0
        %v3351 = vadd.f32 %v3349, %v3350
        %v3352 = vsel %vm400, %v3286, 0.0
        %v3353 = vadd.f32 %v3351, %v3352
        %v3354 = vrot.slane %v3353, 4
        %v3355 = vadd.f32 %v3353, %v3354
        %v3356 = vrot.slane %v3355, 2
        %v3357 = vadd.f32 %v3355, %v3356
        %v3358 = vrot.slane %v3357, 1
        %v3359 = vadd.f32 %v3357, %v3358
        %v3360 = vmul.f32 %v3359, 0.00390625
        %v3361 = vsub.f32 %v3131, %v3360
        %v3362 = vsub.f32 %v3136, %v3360
        %v3363 = vsub.f32 %v3141, %v3360
        %v3364 = vsub.f32 %v3146, %v3360
        %v3365 = vsub.f32 %v3151, %v3360
        %v3366 = vsub.f32 %v3156, %v3360
        %v3367 = vsub.f32 %v3161, %v3360
        %v3368 = vsub.f32 %v3166, %v3360
        %v3369 = vsub.f32 %v3171, %v3360
        %v3370 = vsub.f32 %v3176, %v3360
        %v3371 = vsub.f32 %v3181, %v3360
        %v3372 = vsub.f32 %v3186, %v3360
        %v3373 = vsub.f32 %v3191, %v3360
        %v3374 = vsub.f32 %v3196, %v3360
        %v3375 = vsub.f32 %v3201, %v3360
        %v3376 = vsub.f32 %v3206, %v3360
        %v3377 = vsub.f32 %v3211, %v3360
        %v3378 = vsub.f32 %v3216, %v3360
        %v3379 = vsub.f32 %v3221, %v3360
        %v3380 = vsub.f32 %v3226, %v3360
        %v3381 = vsub.f32 %v3231, %v3360
        %v3382 = vsub.f32 %v3236, %v3360
        %v3383 = vsub.f32 %v3241, %v3360
        %v3384 = vsub.f32 %v3246, %v3360
        %v3385 = vsub.f32 %v3251, %v3360
        %v3386 = vsub.f32 %v3256, %v3360
        %v3387 = vsub.f32 %v3261, %v3360
        %v3388 = vsub.f32 %v3266, %v3360
        %v3389 = vsub.f32 %v3271, %v3360
        %v3390 = vsub.f32 %v3276, %v3360
        %v3391 = vsub.f32 %v3281, %v3360
        %v3392 = vsub.f32 %v3286, %v3360
        %v3393 = vmul.f32 %v3361, %v3361
        %v3394 = vmul.f32 %v3362, %v3362
        %v3395 = vmul.f32 %v3363, %v3363
        %v3396 = vmul.f32 %v3364, %v3364
        %v3397 = vmul.f32 %v3365, %v3365
        %v3398 = vmul.f32 %v3366, %v3366
        %v3399 = vmul.f32 %v3367, %v3367
        %v3400 = vmul.f32 %v3368, %v3368
        %v3401 = vmul.f32 %v3369, %v3369
        %v3402 = vmul.f32 %v3370, %v3370
        %v3403 = vmul.f32 %v3371, %v3371
        %v3404 = vmul.f32 %v3372, %v3372
        %v3405 = vmul.f32 %v3373, %v3373
        %v3406 = vmul.f32 %v3374, %v3374
        %v3407 = vmul.f32 %v3375, %v3375
        %v3408 = vmul.f32 %v3376, %v3376
        %v3409 = vmul.f32 %v3377, %v3377
        %v3410 = vmul.f32 %v3378, %v3378
        %v3411 = vmul.f32 %v3379, %v3379
        %v3412 = vmul.f32 %v3380, %v3380
        %v3413 = vmul.f32 %v3381, %v3381
        %v3414 = vmul.f32 %v3382, %v3382
        %v3415 = vmul.f32 %v3383, %v3383
        %v3416 = vmul.f32 %v3384, %v3384
        %v3417 = vmul.f32 %v3385, %v3385
        %v3418 = vmul.f32 %v3386, %v3386
        %v3419 = vmul.f32 %v3387, %v3387
        %v3420 = vmul.f32 %v3388, %v3388
        %v3421 = vmul.f32 %v3389, %v3389
        %v3422 = vmul.f32 %v3390, %v3390
        %v3423 = vmul.f32 %v3391, %v3391
        %v3424 = vmul.f32 %v3392, %v3392
        %v3425 = vsel %vm400, %v3393, 0.0
        %v3426 = vsel %vm400, %v3394, 0.0
        %v3427 = vadd.f32 %v3425, %v3426
        %v3428 = vsel %vm400, %v3395, 0.0
        %v3429 = vadd.f32 %v3427, %v3428
        %v3430 = vsel %vm400, %v3396, 0.0
        %v3431 = vadd.f32 %v3429, %v3430
        %v3432 = vsel %vm400, %v3397, 0.0
        %v3433 = vadd.f32 %v3431, %v3432
        %v3434 = vsel %vm400, %v3398, 0.0
        %v3435 = vadd.f32 %v3433, %v3434
        %v3436 = vsel %vm400, %v3399, 0.0
        %v3437 = vadd.f32 %v3435, %v3436
        %v3438 = vsel %vm400, %v3400, 0.0
        %v3439 = vadd.f32 %v3437, %v3438
        %v3440 = vsel %vm400, %v3401, 0.0
        %v3441 = vadd.f32 %v3439, %v3440
        %v3442 = vsel %vm400, %v3402, 0.0
        %v3443 = vadd.f32 %v3441, %v3442
        %v3444 = vsel %vm400, %v3403, 0.0
        %v3445 = vadd.f32 %v3443, %v3444
        %v3446 = vsel %vm400, %v3404, 0.0
        %v3447 = vadd.f32 %v3445, %v3446
        %v3448 = vsel %vm400, %v3405, 0.0
        %v3449 = vadd.f32 %v3447, %v3448
        %v3450 = vsel %vm400, %v3406, 0.0
        %v3451 = vadd.f32 %v3449, %v3450
        %v3452 = vsel %vm400, %v3407, 0.0
        %v3453 = vadd.f32 %v3451, %v3452
        %v3454 = vsel %vm400, %v3408, 0.0
        %v3455 = vadd.f32 %v3453, %v3454
        %v3456 = vsel %vm400, %v3409, 0.0
        %v3457 = vadd.f32 %v3455, %v3456
        %v3458 = vsel %vm400, %v3410, 0.0
        %v3459 = vadd.f32 %v3457, %v3458
        %v3460 = vsel %vm400, %v3411, 0.0
        %v3461 = vadd.f32 %v3459, %v3460
        %v3462 = vsel %vm400, %v3412, 0.0
        %v3463 = vadd.f32 %v3461, %v3462
        %v3464 = vsel %vm400, %v3413, 0.0
        %v3465 = vadd.f32 %v3463, %v3464
        %v3466 = vsel %vm400, %v3414, 0.0
        %v3467 = vadd.f32 %v3465, %v3466
        %v3468 = vsel %vm400, %v3415, 0.0
        %v3469 = vadd.f32 %v3467, %v3468
        %v3470 = vsel %vm400, %v3416, 0.0
        %v3471 = vadd.f32 %v3469, %v3470
        %v3472 = vsel %vm400, %v3417, 0.0
        %v3473 = vadd.f32 %v3471, %v3472
        %v3474 = vsel %vm400, %v3418, 0.0
        %v3475 = vadd.f32 %v3473, %v3474
        %v3476 = vsel %vm400, %v3419, 0.0
        %v3477 = vadd.f32 %v3475, %v3476
        %v3478 = vsel %vm400, %v3420, 0.0
        %v3479 = vadd.f32 %v3477, %v3478
        %v3480 = vsel %vm400, %v3421, 0.0
        %v3481 = vadd.f32 %v3479, %v3480
        %v3482 = vsel %vm400, %v3422, 0.0
        %v3483 = vadd.f32 %v3481, %v3482
        %v3484 = vsel %vm400, %v3423, 0.0
        %v3485 = vadd.f32 %v3483, %v3484
        %v3486 = vsel %vm400, %v3424, 0.0
        %v3487 = vadd.f32 %v3485, %v3486
        %v3488 = vrot.slane %v3487, 4
        %v3489 = vadd.f32 %v3487, %v3488
        %v3490 = vrot.slane %v3489, 2
        %v3491 = vadd.f32 %v3489, %v3490
        %v3492 = vrot.slane %v3491, 1
        %v3493 = vadd.f32 %v3491, %v3492
        %v3494 = vmul.f32 %v3493, 0.00390625
        %v3495 = vadd.f32 %v3494, 1e-05
        %v3496 = vrsqrt.pop %v3495
        %v3497 = vmul.f32 %v3496, %v3289
        %v3498 = vlaneseq
        %v3499 = vshrl.u32 %v3498, 7
        %v3500 = vsub.s32 0, %v3499
        %v3501 = vrot.slane %v3497, %v3500
        %v3502 = vmul.f32 %v3361, %v3501
        %v3503 = vmul.f32 %v3362, %v3501
        %v3504 = vmul.f32 %v3363, %v3501
        %v3505 = vmul.f32 %v3364, %v3501
        %v3506 = vmul.f32 %v3365, %v3501
        %v3507 = vmul.f32 %v3366, %v3501
        %v3508 = vmul.f32 %v3367, %v3501
        %v3509 = vmul.f32 %v3368, %v3501
        %v3510 = vmul.f32 %v3369, %v3501
        %v3511 = vmul.f32 %v3370, %v3501
        %v3512 = vmul.f32 %v3371, %v3501
        %v3513 = vmul.f32 %v3372, %v3501
        %v3514 = vmul.f32 %v3373, %v3501
        %v3515 = vmul.f32 %v3374, %v3501
        %v3516 = vmul.f32 %v3375, %v3501
        %v3517 = vmul.f32 %v3376, %v3501
        %v3518 = vmul.f32 %v3377, %v3501
        %v3519 = vmul.f32 %v3378, %v3501
        %v3520 = vmul.f32 %v3379, %v3501
        %v3521 = vmul.f32 %v3380, %v3501
        %v3522 = vmul.f32 %v3381, %v3501
        %v3523 = vmul.f32 %v3382, %v3501
        %v3524 = vmul.f32 %v3383, %v3501
        %v3525 = vmul.f32 %v3384, %v3501
        %v3526 = vmul.f32 %v3385, %v3501
        %v3527 = vmul.f32 %v3386, %v3501
        %v3528 = vmul.f32 %v3387, %v3501
        %v3529 = vmul.f32 %v3388, %v3501
        %v3530 = vmul.f32 %v3389, %v3501
        %v3531 = vmul.f32 %v3390, %v3501
        %v3532 = vmul.f32 %v3391, %v3501
        %v3533 = vmul.f32 %v3392, %v3501
        %v3535 = vlaneseq
        %v3536 = vshrl.u32 %v3535, 7
        %v3537 = vsub.s32 0, %v3536
        %v3538 = vrot.slane %v3290, %v3537
        %v3540 = vadd.f32 %v3502, %v3538
        %v3541 = vadd.f32 %v3503, %v3538
        %v3542 = vadd.f32 %v3504, %v3538
        %v3543 = vadd.f32 %v3505, %v3538
        %v3544 = vadd.f32 %v3506, %v3538
        %v3545 = vadd.f32 %v3507, %v3538
        %v3546 = vadd.f32 %v3508, %v3538
        %v3547 = vadd.f32 %v3509, %v3538
        %v3548 = vadd.f32 %v3510, %v3538
        %v3549 = vadd.f32 %v3511, %v3538
        %v3550 = vadd.f32 %v3512, %v3538
        %v3551 = vadd.f32 %v3513, %v3538
        %v3552 = vadd.f32 %v3514, %v3538
        %v3553 = vadd.f32 %v3515, %v3538
        %v3554 = vadd.f32 %v3516, %v3538
        %v3555 = vadd.f32 %v3517, %v3538
        %v3556 = vadd.f32 %v3518, %v3538
        %v3557 = vadd.f32 %v3519, %v3538
        %v3558 = vadd.f32 %v3520, %v3538
        %v3559 = vadd.f32 %v3521, %v3538
        %v3560 = vadd.f32 %v3522, %v3538
        %v3561 = vadd.f32 %v3523, %v3538
        %v3562 = vadd.f32 %v3524, %v3538
        %v3563 = vadd.f32 %v3525, %v3538
        %v3564 = vadd.f32 %v3526, %v3538
        %v3565 = vadd.f32 %v3527, %v3538
        %v3566 = vadd.f32 %v3528, %v3538
        %v3567 = vadd.f32 %v3529, %v3538
        %v3568 = vadd.f32 %v3530, %v3538
        %v3569 = vadd.f32 %v3531, %v3538
        %v3570 = vadd.f32 %v3532, %v3538
        %v3571 = vadd.f32 %v3533, %v3538
        %v3572 = vxor.u32 %v3540, 2147483648
        %v3573 = vxor.u32 %v3541, 2147483648
        %v3574 = vxor.u32 %v3542, 2147483648
        %v3575 = vxor.u32 %v3543, 2147483648
        %v3576 = vxor.u32 %v3544, 2147483648
        %v3577 = vxor.u32 %v3545, 2147483648
        %v3578 = vxor.u32 %v3546, 2147483648
        %v3579 = vxor.u32 %v3547, 2147483648
        %v3580 = vxor.u32 %v3548, 2147483648
        %v3581 = vxor.u32 %v3549, 2147483648
        %v3582 = vxor.u32 %v3550, 2147483648
        %v3583 = vxor.u32 %v3551, 2147483648
        %v3584 = vxor.u32 %v3552, 2147483648
        %v3585 = vxor.u32 %v3553, 2147483648
        %v3586 = vxor.u32 %v3554, 2147483648
        %v3587 = vxor.u32 %v3555, 2147483648
        %v3588 = vxor.u32 %v3556, 2147483648
        %v3589 = vxor.u32 %v3557, 2147483648
        %v3590 = vxor.u32 %v3558, 2147483648
        %v3591 = vxor.u32 %v3559, 2147483648
        %v3592 = vxor.u32 %v3560, 2147483648
        %v3593 = vxor.u32 %v3561, 2147483648
        %v3594 = vxor.u32 %v3562, 2147483648
        %v3595 = vxor.u32 %v3563, 2147483648
        %v3596 = vxor.u32 %v3564, 2147483648
        %v3597 = vxor.u32 %v3565, 2147483648
        %v3598 = vxor.u32 %v3566, 2147483648
        %v3599 = vxor.u32 %v3567, 2147483648
        %v3600 = vxor.u32 %v3568, 2147483648
        %v3601 = vxor.u32 %v3569, 2147483648
        %v3602 = vxor.u32 %v3570, 2147483648
        %v3603 = vxor.u32 %v3571, 2147483648
        %v3604 = vmul.f32 %v3572, 1.442695
        %v3605 = vpow.pop %v3604
        %v3606 = vmul.f32 %v3573, 1.442695
        %v3607 = vpow.pop %v3606
        %v3608 = vmul.f32 %v3574, 1.442695
        %v3609 = vpow.pop %v3608
        %v3610 = vmul.f32 %v3575, 1.442695
        %v3611 = vpow.pop %v3610
        %v3612 = vmul.f32 %v3576, 1.442695
        %v3613 = vpow.pop %v3612
        %v3614 = vmul.f32 %v3577, 1.442695
        %v3615 = vpow.pop %v3614
        %v3616 = vmul.f32 %v3578, 1.442695
        %v3617 = vpow.pop %v3616
        %v3618 = vmul.f32 %v3579, 1.442695
        %v3619 = vpow.pop %v3618
        %v3620 = vmul.f32 %v3580, 1.442695
        %v3621 = vpow.pop %v3620
        %v3622 = vmul.f32 %v3581, 1.442695
        %v3623 = vpow.pop %v3622
        %v3624 = vmul.f32 %v3582, 1.442695
        %v3625 = vpow.pop %v3624
        %v3626 = vmul.f32 %v3583, 1.442695
        %v3627 = vpow.pop %v3626
        %v3628 = vmul.f32 %v3584, 1.442695
        %v3629 = vpow.pop %v3628
        %v3630 = vmul.f32 %v3585, 1.442695
        %v3631 = vpow.pop %v3630
        %v3632 = vmul.f32 %v3586, 1.442695
        %v3633 = vpow.pop %v3632
        %v3634 = vmul.f32 %v3587, 1.442695
        %v3635 = vpow.pop %v3634
        %v3636 = vmul.f32 %v3588, 1.442695
        %v3637 = vpow.pop %v3636
        %v3638 = vmul.f32 %v3589, 1.442695
        %v3639 = vpow.pop %v3638
        %v3640 = vmul.f32 %v3590, 1.442695
        %v3641 = vpow.pop %v3640
        %v3642 = vmul.f32 %v3591, 1.442695
        %v3643 = vpow.pop %v3642
        %v3644 = vmul.f32 %v3592, 1.442695
        %v3645 = vpow.pop %v3644
        %v3646 = vmul.f32 %v3593, 1.442695
        %v3647 = vpow.pop %v3646
        %v3648 = vmul.f32 %v3594, 1.442695
        %v3649 = vpow.pop %v3648
        %v3650 = vmul.f32 %v3595, 1.442695
        %v3651 = vpow.pop %v3650
        %v3652 = vmul.f32 %v3596, 1.442695
        %v3653 = vpow.pop %v3652
        %v3654 = vmul.f32 %v3597, 1.442695
        %v3655 = vpow.pop %v3654
        %v3656 = vmul.f32 %v3598, 1.442695
        %v3657 = vpow.pop %v3656
        %v3658 = vmul.f32 %v3599, 1.442695
        %v3659 = vpow.pop %v3658
        %v3660 = vmul.f32 %v3600, 1.442695
        %v3661 = vpow.pop %v3660
        %v3662 = vmul.f32 %v3601, 1.442695
        %v3663 = vpow.pop %v3662
        %v3664 = vmul.f32 %v3602, 1.442695
        %v3665 = vpow.pop %v3664
        %v3666 = vmul.f32 %v3603, 1.442695
        %v3667 = vpow.pop %v3666
        %v3668 = vadd.f32 %v3605, 1.0
        %v3669 = vadd.f32 %v3607, 1.0
        %v3670 = vadd.f32 %v3609, 1.0
        %v3671 = vadd.f32 %v3611, 1.0
        %v3672 = vadd.f32 %v3613, 1.0
        %v3673 = vadd.f32 %v3615, 1.0
        %v3674 = vadd.f32 %v3617, 1.0
        %v3675 = vadd.f32 %v3619, 1.0
        %v3676 = vadd.f32 %v3621, 1.0
        %v3677 = vadd.f32 %v3623, 1.0
        %v3678 = vadd.f32 %v3625, 1.0
        %v3679 = vadd.f32 %v3627, 1.0
        %v3680 = vadd.f32 %v3629, 1.0
        %v3681 = vadd.f32 %v3631, 1.0
        %v3682 = vadd.f32 %v3633, 1.0
        %v3683 = vadd.f32 %v3635, 1.0
        %v3684 = vadd.f32 %v3637, 1.0
        %v3685 = vadd.f32 %v3639, 1.0
        %v3686 = vadd.f32 %v3641, 1.0
        %v3687 = vadd.f32 %v3643, 1.0
        %v3688 = vadd.f32 %v3645, 1.0
        %v3689 = vadd.f32 %v3647, 1.0
        %v3690 = vadd.f32 %v3649, 1.0
        %v3691 = vadd.f32 %v3651, 1.0
        %v3692 = vadd.f32 %v3653, 1.0
        %v3693 = vadd.f32 %v3655, 1.0
        %v3694 = vadd.f32 %v3657, 1.0
        %v3695 = vadd.f32 %v3659, 1.0
        %v3696 = vadd.f32 %v3661, 1.0
        %v3697 = vadd.f32 %v3663, 1.0
        %v3698 = vadd.f32 %v3665, 1.0
        %v3699 = vadd.f32 %v3667, 1.0
        %v3700 = vrcp.pop %v3668
        %v3701 = vmul.f32 1.0, %v3700
        %v3702 = vrcp.pop %v3669
        %v3703 = vmul.f32 1.0, %v3702
        %v3704 = vrcp.pop %v3670
        %v3705 = vmul.f32 1.0, %v3704
        %v3706 = vrcp.pop %v3671
        %v3707 = vmul.f32 1.0, %v3706
        %v3708 = vrcp.pop %v3672
        %v3709 = vmul.f32 1.0, %v3708
        %v3710 = vrcp.pop %v3673
        %v3711 = vmul.f32 1.0, %v3710
        %v3712 = vrcp.pop %v3674
        %v3713 = vmul.f32 1.0, %v3712
        %v3714 = vrcp.pop %v3675
        %v3715 = vmul.f32 1.0, %v3714
        %v3716 = vrcp.pop %v3676
        %v3717 = vmul.f32 1.0, %v3716
        %v3718 = vrcp.pop %v3677
        %v3719 = vmul.f32 1.0, %v3718
        %v3720 = vrcp.pop %v3678
        %v3721 = vmul.f32 1.0, %v3720
        %v3722 = vrcp.pop %v3679
        %v3723 = vmul.f32 1.0, %v3722
        %v3724 = vrcp.pop %v3680
        %v3725 = vmul.f32 1.0, %v3724
        %v3726 = vrcp.pop %v3681
        %v3727 = vmul.f32 1.0, %v3726
        %v3728 = vrcp.pop %v3682
        %v3729 = vmul.f32 1.0, %v3728
        %v3730 = vrcp.pop %v3683
        %v3731 = vmul.f32 1.0, %v3730
        %v3732 = vrcp.pop %v3684
        %v3733 = vmul.f32 1.0, %v3732
        %v3734 = vrcp.pop %v3685
        %v3735 = vmul.f32 1.0, %v3734
        %v3736 = vrcp.pop %v3686
        %v3737 = vmul.f32 1.0, %v3736
        %v3738 = vrcp.pop %v3687
        %v3739 = vmul.f32 1.0, %v3738
        %v3740 = vrcp.pop %v3688
        %v3741 = vmul.f32 1.0, %v3740
        %v3742 = vrcp.pop %v3689
        %v3743 = vmul.f32 1.0, %v3742
        %v3744 = vrcp.pop %v3690
        %v3745 = vmul.f32 1.0, %v3744
        %v3746 = vrcp.pop %v3691
        %v3747 = vmul.f32 1.0, %v3746
        %v3748 = vrcp.pop %v3692
        %v3749 = vmul.f32 1.0, %v3748
        %v3750 = vrcp.pop %v3693
        %v3751 = vmul.f32 1.0, %v3750
        %v3752 = vrcp.pop %v3694
        %v3753 = vmul.f32 1.0, %v3752
        %v3754 = vrcp.pop %v3695
        %v3755 = vmul.f32 1.0, %v3754
        %v3756 = vrcp.pop %v3696
        %v3757 = vmul.f32 1.0, %v3756
        %v3758 = vrcp.pop %v3697
        %v3759 = vmul.f32 1.0, %v3758
        %v3760 = vrcp.pop %v3698
        %v3761 = vmul.f32 1.0, %v3760
        %v3762 = vrcp.pop %v3699
        %v3763 = vmul.f32 1.0, %v3762
        %v3764 = vmul.f32 %v3540, %v3701
        %v3765 = vmul.f32 %v3541, %v3703
        %v3766 = vmul.f32 %v3542, %v3705
        %v3767 = vmul.f32 %v3543, %v3707
        %v3768 = vmul.f32 %v3544, %v3709
        %v3769 = vmul.f32 %v3545, %v3711
        %v3770 = vmul.f32 %v3546, %v3713
        %v3771 = vmul.f32 %v3547, %v3715
        %v3772 = vmul.f32 %v3548, %v3717
        %v3773 = vmul.f32 %v3549, %v3719
        %v3774 = vmul.f32 %v3550, %v3721
        %v3775 = vmul.f32 %v3551, %v3723
        %v3776 = vmul.f32 %v3552, %v3725
        %v3777 = vmul.f32 %v3553, %v3727
        %v3778 = vmul.f32 %v3554, %v3729
        %v3779 = vmul.f32 %v3555, %v3731
        %v3780 = vmul.f32 %v3556, %v3733
        %v3781 = vmul.f32 %v3557, %v3735
        %v3782 = vmul.f32 %v3558, %v3737
        %v3783 = vmul.f32 %v3559, %v3739
        %v3784 = vmul.f32 %v3560, %v3741
        %v3785 = vmul.f32 %v3561, %v3743
        %v3786 = vmul.f32 %v3562, %v3745
        %v3787 = vmul.f32 %v3563, %v3747
        %v3788 = vmul.f32 %v3564, %v3749
        %v3789 = vmul.f32 %v3565, %v3751
        %v3790 = vmul.f32 %v3566, %v3753
        %v3791 = vmul.f32 %v3567, %v3755
        %v3792 = vmul.f32 %v3568, %v3757
        %v3793 = vmul.f32 %v3569, %v3759
        %v3794 = vmul.f32 %v3570, %v3761
        %v3795 = vmul.f32 %v3571, %v3763
        %v3796 = vld [vmem:[#allocation2] sm:$0xff]
        %v3797 = vld [vmem:[#allocation2 + $0x8] sm:$0xff]
        %v3798 = vld [vmem:[#allocation2 + $0x10] sm:$0xff]
        %v3799 = vld [vmem:[#allocation2 + $0x18] sm:$0xff]
        %v3800 = vld [vmem:[#allocation2 + $0x20] sm:$0xff]
        %v3801 = vld [vmem:[#allocation2 + $0x28] sm:$0xff]
        %v3802 = vld [vmem:[#allocation2 + $0x30] sm:$0xff]
        %v3803 = vld [vmem:[#allocation2 + $0x38] sm:$0xff]
        %v3804 = vld [vmem:[#allocation2 + $0x40] sm:$0xff]
        %v3805 = vld [vmem:[#allocation2 + $0x48] sm:$0xff]
        %v3806 = vld [vmem:[#allocation2 + $0x50] sm:$0xff]
        %v3807 = vld [vmem:[#allocation2 + $0x58] sm:$0xff]
        %v3808 = vld [vmem:[#allocation2 + $0x60] sm:$0xff]
        %v3809 = vld [vmem:[#allocation2 + $0x68] sm:$0xff]
        %v3810 = vld [vmem:[#allocation2 + $0x70] sm:$0xff]
        %v3811 = vld [vmem:[#allocation2 + $0x78] sm:$0xff]
        %v3812 = vld [vmem:[#allocation2 + $0x80] sm:$0xff]
        %v3813 = vld [vmem:[#allocation2 + $0x88] sm:$0xff]
        %v3814 = vld [vmem:[#allocation2 + $0x90] sm:$0xff]
        %v3815 = vld [vmem:[#allocation2 + $0x98] sm:$0xff]
        %v3816 = vld [vmem:[#allocation2 + $0xa0] sm:$0xff]
        %v3817 = vld [vmem:[#allocation2 + $0xa8] sm:$0xff]
        %v3818 = vld [vmem:[#allocation2 + $0xb0] sm:$0xff]
        %v3819 = vld [vmem:[#allocation2 + $0xb8] sm:$0xff]
        %v3820 = vld [vmem:[#allocation2 + $0xc0] sm:$0xff]
        %v3821 = vld [vmem:[#allocation2 + $0xc8] sm:$0xff]
        %v3822 = vld [vmem:[#allocation2 + $0xd0] sm:$0xff]
        %v3823 = vld [vmem:[#allocation2 + $0xd8] sm:$0xff]
        %v3824 = vld [vmem:[#allocation2 + $0xe0] sm:$0xff]
        %v3825 = vld [vmem:[#allocation2 + $0xe8] sm:$0xff]
        %v3826 = vld [vmem:[#allocation2 + $0xf0] sm:$0xff]
        %v3827 = vld [vmem:[#allocation2 + $0xf8] sm:$0xff]
        %v3828 = vld [vmem:[#allocation2 + $0x100] sm:$0xff]
        %v3829 = vld [vmem:[#allocation2 + $0x108] sm:$0xff]
        %v3830 = vld [vmem:[#allocation2 + $0x110] sm:$0xff]
        %v3831 = vld [vmem:[#allocation2 + $0x118] sm:$0xff]
        %v3832 = vld [vmem:[%s8] sm:$0x1]
        %v3865 = vrot.slane %v3764, 7
        %v3866 = vrot.slane %v3765, 7
        %v3867 = vsel %vm2167, %v3865, %v3866
        %v3868 = vrot.slane %v3766, 7
        %v3869 = vrot.slane %v3767, 7
        %v3870 = vsel %vm2167, %v3868, %v3869
        %v3871 = vrot.slane %v3768, 7
        %v3872 = vrot.slane %v3769, 7
        %v3873 = vsel %vm2167, %v3871, %v3872
        %v3874 = vrot.slane %v3770, 7
        %v3875 = vrot.slane %v3771, 7
        %v3876 = vsel %vm2167, %v3874, %v3875
        %v3877 = vrot.slane %v3772, 7
        %v3878 = vrot.slane %v3773, 7
        %v3879 = vsel %vm2167, %v3877, %v3878
        %v3880 = vrot.slane %v3774, 7
        %v3881 = vrot.slane %v3775, 7
        %v3882 = vsel %vm2167, %v3880, %v3881
        %v3883 = vrot.slane %v3776, 7
        %v3884 = vrot.slane %v3777, 7
        %v3885 = vsel %vm2167, %v3883, %v3884
        %v3886 = vrot.slane %v3778, 7
        %v3887 = vrot.slane %v3779, 7
        %v3888 = vsel %vm2167, %v3886, %v3887
        %v3889 = vrot.slane %v3780, 7
        %v3890 = vrot.slane %v3781, 7
        %v3891 = vsel %vm2167, %v3889, %v3890
        %v3892 = vrot.slane %v3782, 7
        %v3893 = vrot.slane %v3783, 7
        %v3894 = vsel %vm2167, %v3892, %v3893
        %v3895 = vrot.slane %v3784, 7
        %v3896 = vrot.slane %v3785, 7
        %v3897 = vsel %vm2167, %v3895, %v3896
        %v3898 = vrot.slane %v3786, 7
        %v3899 = vrot.slane %v3787, 7
        %v3900 = vsel %vm2167, %v3898, %v3899
        %v3901 = vrot.slane %v3788, 7
        %v3902 = vrot.slane %v3789, 7
        %v3903 = vsel %vm2167, %v3901, %v3902
        %v3904 = vrot.slane %v3790, 7
        %v3905 = vrot.slane %v3791, 7
        %v3906 = vsel %vm2167, %v3904, %v3905
        %v3907 = vrot.slane %v3792, 7
        %v3908 = vrot.slane %v3793, 7
        %v3909 = vsel %vm2167, %v3907, %v3908
        %v3910 = vrot.slane %v3794, 7
        %v3911 = vrot.slane %v3795, 7
        %v3912 = vsel %vm2167, %v3910, %v3911
        %v3960 = vsel %vm2167, 0.0, %v3865
        %v3961 = vsel %vm2167, 0.0, %v3868
        %v3962 = vsel %vm2167, 0.0, %v3871
        %v3963 = vsel %vm2167, 0.0, %v3874
        %v3964 = vsel %vm2167, 0.0, %v3877
        %v3965 = vsel %vm2167, 0.0, %v3880
        %v3966 = vsel %vm2167, 0.0, %v3883
        %v3967 = vsel %vm2167, 0.0, %v3886
        %v3968 = vsel %vm2167, 0.0, %v3889
        %v3969 = vsel %vm2167, 0.0, %v3892
        %v3970 = vsel %vm2167, 0.0, %v3895
        %v3971 = vsel %vm2167, 0.0, %v3898
        %v3972 = vsel %vm2167, 0.0, %v3901
        %v3973 = vsel %vm2167, 0.0, %v3904
        %v3974 = vsel %vm2167, 0.0, %v3907
        %v3975 = vsel %vm2167, 0.0, %v3910
        %v3976 = vsel %vm2167, %v3866, 0.0
        %v3977 = vsel %vm2167, %v3869, 0.0
        %v3978 = vsel %vm2167, %v3872, 0.0
        %v3979 = vsel %vm2167, %v3875, 0.0
        %v3980 = vsel %vm2167, %v3878, 0.0
        %v3981 = vsel %vm2167, %v3881, 0.0
        %v3982 = vsel %vm2167, %v3884, 0.0
        %v3983 = vsel %vm2167, %v3887, 0.0
        %v3984 = vsel %vm2167, %v3890, 0.0
        %v3985 = vsel %vm2167, %v3893, 0.0
        %v3986 = vsel %vm2167, %v3896, 0.0
        %v3987 = vsel %vm2167, %v3899, 0.0
        %v3988 = vsel %vm2167, %v3902, 0.0
        %v3989 = vsel %vm2167, %v3905, 0.0
        %v3990 = vsel %vm2167, %v3908, 0.0
        %v3991 = vsel %vm2167, %v3911, 0.0
        %v4022 = vrot.slane %v3960, 1
        %v4023 = vrot.slane %v3867, 1
        %v4024 = vsel %vm2249, %v4022, %v4023
        %v4025 = vrot.slane %v3976, 1
        %v4026 = vsel %vm2249, %v4023, %v4025
        %v4027 = vrot.slane %v3961, 1
        %v4028 = vrot.slane %v3870, 1
        %v4029 = vsel %vm2249, %v4027, %v4028
        %v4030 = vrot.slane %v3977, 1
        %v4031 = vsel %vm2249, %v4028, %v4030
        %v4032 = vrot.slane %v3962, 1
        %v4033 = vrot.slane %v3873, 1
        %v4034 = vsel %vm2249, %v4032, %v4033
        %v4035 = vrot.slane %v3978, 1
        %v4036 = vsel %vm2249, %v4033, %v4035
        %v4037 = vrot.slane %v3963, 1
        %v4038 = vrot.slane %v3876, 1
        %v4039 = vsel %vm2249, %v4037, %v4038
        %v4040 = vrot.slane %v3979, 1
        %v4041 = vsel %vm2249, %v4038, %v4040
        %v4042 = vrot.slane %v3964, 1
        %v4043 = vrot.slane %v3879, 1
        %v4044 = vsel %vm2249, %v4042, %v4043
        %v4045 = vrot.slane %v3980, 1
        %v4046 = vsel %vm2249, %v4043, %v4045
        %v4047 = vrot.slane %v3965, 1
        %v4048 = vrot.slane %v3882, 1
        %v4049 = vsel %vm2249, %v4047, %v4048
        %v4050 = vrot.slane %v3981, 1
        %v4051 = vsel %vm2249, %v4048, %v4050
        %v4052 = vrot.slane %v3966, 1
        %v4053 = vrot.slane %v3885, 1
        %v4054 = vsel %vm2249, %v4052, %v4053
        %v4055 = vrot.slane %v3982, 1
        %v4056 = vsel %vm2249, %v4053, %v4055
        %v4057 = vrot.slane %v3967, 1
        %v4058 = vrot.slane %v3888, 1
        %v4059 = vsel %vm2249, %v4057, %v4058
        %v4060 = vrot.slane %v3983, 1
        %v4061 = vsel %vm2249, %v4058, %v4060
        %v4062 = vrot.slane %v3968, 1
        %v4063 = vrot.slane %v3891, 1
        %v4064 = vsel %vm2249, %v4062, %v4063
        %v4065 = vrot.slane %v3984, 1
        %v4066 = vsel %vm2249, %v4063, %v4065
        %v4067 = vrot.slane %v3969, 1
        %v4068 = vrot.slane %v3894, 1
        %v4069 = vsel %vm2249, %v4067, %v4068
        %v4070 = vrot.slane %v3985, 1
        %v4071 = vsel %vm2249, %v4068, %v4070
        %v4072 = vrot.slane %v3970, 1
        %v4073 = vrot.slane %v3897, 1
        %v4074 = vsel %vm2249, %v4072, %v4073
        %v4075 = vrot.slane %v3986, 1
        %v4076 = vsel %vm2249, %v4073, %v4075
        %v4077 = vrot.slane %v3971, 1
        %v4078 = vrot.slane %v3900, 1
        %v4079 = vsel %vm2249, %v4077, %v4078
        %v4080 = vrot.slane %v3987, 1
        %v4081 = vsel %vm2249, %v4078, %v4080
        %v4082 = vrot.slane %v3972, 1
        %v4083 = vrot.slane %v3903, 1
        %v4084 = vsel %vm2249, %v4082, %v4083
        %v4085 = vrot.slane %v3988, 1
        %v4086 = vsel %vm2249, %v4083, %v4085
        %v4087 = vrot.slane %v3973, 1
        %v4088 = vrot.slane %v3906, 1
        %v4089 = vsel %vm2249, %v4087, %v4088
        %v4090 = vrot.slane %v3989, 1
        %v4091 = vsel %vm2249, %v4088, %v4090
        %v4092 = vrot.slane %v3974, 1
        %v4093 = vrot.slane %v3909, 1
        %v4094 = vsel %vm2249, %v4092, %v4093
        %v4095 = vrot.slane %v3990, 1
        %v4096 = vsel %vm2249, %v4093, %v4095
        %v4097 = vrot.slane %v3960, 2
        %v4098 = vrot.slane %v3867, 2
        %v4099 = vsel %vm2292, %v4097, %v4098
        %v4100 = vrot.slane %v3976, 2
        %v4101 = vsel %vm2292, %v4098, %v4100
        %v4102 = vrot.slane %v3961, 2
        %v4103 = vrot.slane %v3870, 2
        %v4104 = vsel %vm2292, %v4102, %v4103
        %v4105 = vrot.slane %v3977, 2
        %v4106 = vsel %vm2292, %v4103, %v4105
        %v4107 = vrot.slane %v3962, 2
        %v4108 = vrot.slane %v3873, 2
        %v4109 = vsel %vm2292, %v4107, %v4108
        %v4110 = vrot.slane %v3978, 2
        %v4111 = vsel %vm2292, %v4108, %v4110
        %v4112 = vrot.slane %v3963, 2
        %v4113 = vrot.slane %v3876, 2
        %v4114 = vsel %vm2292, %v4112, %v4113
        %v4115 = vrot.slane %v3979, 2
        %v4116 = vsel %vm2292, %v4113, %v4115
        %v4117 = vrot.slane %v3964, 2
        %v4118 = vrot.slane %v3879, 2
        %v4119 = vsel %vm2292, %v4117, %v4118
        %v4120 = vrot.slane %v3980, 2
        %v4121 = vsel %vm2292, %v4118, %v4120
        %v4122 = vrot.slane %v3965, 2
        %v4123 = vrot.slane %v3882, 2
        %v4124 = vsel %vm2292, %v4122, %v4123
        %v4125 = vrot.slane %v3981, 2
        %v4126 = vsel %vm2292, %v4123, %v4125
        %v4127 = vrot.slane %v3966, 2
        %v4128 = vrot.slane %v3885, 2
        %v4129 = vsel %vm2292, %v4127, %v4128
        %v4130 = vrot.slane %v3982, 2
        %v4131 = vsel %vm2292, %v4128, %v4130
        %v4132 = vrot.slane %v3967, 2
        %v4133 = vrot.slane %v3888, 2
        %v4134 = vsel %vm2292, %v4132, %v4133
        %v4135 = vrot.slane %v3983, 2
        %v4136 = vsel %vm2292, %v4133, %v4135
        %v4137 = vrot.slane %v3968, 2
        %v4138 = vrot.slane %v3891, 2
        %v4139 = vsel %vm2292, %v4137, %v4138
        %v4140 = vrot.slane %v3984, 2
        %v4141 = vsel %vm2292, %v4138, %v4140
        %v4142 = vrot.slane %v3969, 2
        %v4143 = vrot.slane %v3894, 2
        %v4144 = vsel %vm2292, %v4142, %v4143
        %v4145 = vrot.slane %v3985, 2
        %v4146 = vsel %vm2292, %v4143, %v4145
        %v4147 = vrot.slane %v3970, 2
        %v4148 = vrot.slane %v3897, 2
        %v4149 = vsel %vm2292, %v4147, %v4148
        %v4150 = vrot.slane %v3986, 2
        %v4151 = vsel %vm2292, %v4148, %v4150
        %v4152 = vrot.slane %v3971, 2
        %v4153 = vrot.slane %v3900, 2
        %v4154 = vsel %vm2292, %v4152, %v4153
        %v4155 = vrot.slane %v3987, 2
        %v4156 = vsel %vm2292, %v4153, %v4155
        %v4157 = vrot.slane %v3972, 2
        %v4158 = vrot.slane %v3903, 2
        %v4159 = vsel %vm2292, %v4157, %v4158
        %v4160 = vrot.slane %v3988, 2
        %v4161 = vsel %vm2292, %v4158, %v4160
        %v4162 = vrot.slane %v3973, 2
        %v4163 = vrot.slane %v3906, 2
        %v4164 = vsel %vm2292, %v4162, %v4163
        %v4165 = vrot.slane %v3989, 2
        %v4166 = vsel %vm2292, %v4163, %v4165
        %v4167 = vrot.slane %v3974, 2
        %v4168 = vrot.slane %v3909, 2
        %v4169 = vsel %vm2292, %v4167, %v4168
        %v4170 = vrot.slane %v3990, 2
        %v4171 = vsel %vm2292, %v4168, %v4170
        %v4174 = vrot.slane %v3975, 1
        %v4175 = vrot.slane %v3912, 1
        %v4176 = vsel %vm2249, %v4174, %v4175
        %v4177 = vrot.slane %v3991, 1
        %v4178 = vsel %vm2249, %v4175, %v4177
        %v4211 = vrot.slane %v3975, 2
        %v4212 = vrot.slane %v3912, 2
        %v4213 = vsel %vm2292, %v4211, %v4212
        %v4214 = vrot.slane %v3991, 2
        %v4215 = vsel %vm2292, %v4212, %v4214
        %4216 = vrot.lane.b32.xlu0 %v4024, 32
        %v4217 = vpop.permute.xlu0 %4216
        %4218 = vrot.lane.b32.xlu0 %v4026, 32
        %v4219 = vpop.permute.xlu0 %4218
        %4220 = vrot.lane.b32.xlu0 %v4029, 32
        %v4221 = vpop.permute.xlu0 %4220
        %4222 = vrot.lane.b32.xlu0 %v4031, 32
        %v4223 = vpop.permute.xlu0 %4222
        %4224 = vrot.lane.b32.xlu0 %v4034, 32
        %v4225 = vpop.permute.xlu0 %4224
        %4226 = vrot.lane.b32.xlu0 %v4036, 32
        %v4227 = vpop.permute.xlu0 %4226
        %4228 = vrot.lane.b32.xlu0 %v4039, 32
        %v4229 = vpop.permute.xlu0 %4228
        %4230 = vrot.lane.b32.xlu0 %v4041, 32
        %v4231 = vpop.permute.xlu0 %4230
        %4232 = vrot.lane.b32.xlu0 %v4044, 32
        %v4233 = vpop.permute.xlu0 %4232
        %4234 = vrot.lane.b32.xlu0 %v4046, 32
        %v4235 = vpop.permute.xlu0 %4234
        %4236 = vrot.lane.b32.xlu0 %v4049, 32
        %v4237 = vpop.permute.xlu0 %4236
        %4238 = vrot.lane.b32.xlu0 %v4051, 32
        %v4239 = vpop.permute.xlu0 %4238
        %4240 = vrot.lane.b32.xlu0 %v4054, 32
        %v4241 = vpop.permute.xlu0 %4240
        %4242 = vrot.lane.b32.xlu0 %v4056, 32
        %v4243 = vpop.permute.xlu0 %4242
        %4244 = vrot.lane.b32.xlu0 %v4059, 32
        %v4245 = vpop.permute.xlu0 %4244
        %4246 = vrot.lane.b32.xlu0 %v4061, 32
        %v4247 = vpop.permute.xlu0 %4246
        %4248 = vrot.lane.b32.xlu0 %v4064, 32
        %v4249 = vpop.permute.xlu0 %4248
        %4250 = vrot.lane.b32.xlu0 %v4066, 32
        %v4251 = vpop.permute.xlu0 %4250
        %4252 = vrot.lane.b32.xlu0 %v4069, 32
        %v4253 = vpop.permute.xlu0 %4252
        %4254 = vrot.lane.b32.xlu0 %v4071, 32
        %v4255 = vpop.permute.xlu0 %4254
        %4256 = vrot.lane.b32.xlu0 %v4074, 32
        %v4257 = vpop.permute.xlu0 %4256
        %4258 = vrot.lane.b32.xlu0 %v4076, 32
        %v4259 = vpop.permute.xlu0 %4258
        %4260 = vrot.lane.b32.xlu0 %v4079, 32
        %v4261 = vpop.permute.xlu0 %4260
        %4262 = vrot.lane.b32.xlu0 %v4081, 32
        %v4263 = vpop.permute.xlu0 %4262
        %4264 = vrot.lane.b32.xlu0 %v4084, 32
        %v4265 = vpop.permute.xlu0 %4264
        %4266 = vrot.lane.b32.xlu0 %v4086, 32
        %v4267 = vpop.permute.xlu0 %4266
        %4268 = vrot.lane.b32.xlu0 %v4089, 32
        %v4269 = vpop.permute.xlu0 %4268
        %4270 = vrot.lane.b32.xlu0 %v4091, 32
        %v4271 = vpop.permute.xlu0 %4270
        %4272 = vrot.lane.b32.xlu0 %v4094, 32
        %v4273 = vpop.permute.xlu0 %4272
        %4274 = vrot.lane.b32.xlu0 %v4096, 32
        %v4275 = vpop.permute.xlu0 %4274
        %4306 = vrot.lane.b32.xlu0 %v4099, 64
        %v4307 = vpop.permute.xlu0 %4306
        %4308 = vrot.lane.b32.xlu0 %v4101, 64
        %v4309 = vpop.permute.xlu0 %4308
        %4310 = vrot.lane.b32.xlu0 %v4104, 64
        %v4311 = vpop.permute.xlu0 %4310
        %4312 = vrot.lane.b32.xlu0 %v4106, 64
        %v4313 = vpop.permute.xlu0 %4312
        %4314 = vrot.lane.b32.xlu0 %v4109, 64
        %v4315 = vpop.permute.xlu0 %4314
        %4316 = vrot.lane.b32.xlu0 %v4111, 64
        %v4317 = vpop.permute.xlu0 %4316
        %4318 = vrot.lane.b32.xlu0 %v4114, 64
        %v4319 = vpop.permute.xlu0 %4318
        %4320 = vrot.lane.b32.xlu0 %v4116, 64
        %v4321 = vpop.permute.xlu0 %4320
        %4322 = vrot.lane.b32.xlu0 %v4119, 64
        %v4323 = vpop.permute.xlu0 %4322
        %4324 = vrot.lane.b32.xlu0 %v4121, 64
        %v4325 = vpop.permute.xlu0 %4324
        %4326 = vrot.lane.b32.xlu0 %v4124, 64
        %v4327 = vpop.permute.xlu0 %4326
        %4328 = vrot.lane.b32.xlu0 %v4126, 64
        %v4329 = vpop.permute.xlu0 %4328
        %4330 = vrot.lane.b32.xlu0 %v4129, 64
        %v4331 = vpop.permute.xlu0 %4330
        %4332 = vrot.lane.b32.xlu0 %v4131, 64
        %v4333 = vpop.permute.xlu0 %4332
        %4334 = vrot.lane.b32.xlu0 %v4134, 64
        %v4335 = vpop.permute.xlu0 %4334
        %4336 = vrot.lane.b32.xlu0 %v4136, 64
        %v4337 = vpop.permute.xlu0 %4336
        %4338 = vrot.lane.b32.xlu0 %v4139, 64
        %v4339 = vpop.permute.xlu0 %4338
        %4340 = vrot.lane.b32.xlu0 %v4141, 64
        %v4341 = vpop.permute.xlu0 %4340
        %4342 = vrot.lane.b32.xlu0 %v4144, 64
        %v4343 = vpop.permute.xlu0 %4342
        %4344 = vrot.lane.b32.xlu0 %v4146, 64
        %v4345 = vpop.permute.xlu0 %4344
        %4346 = vrot.lane.b32.xlu0 %v4149, 64
        %v4347 = vpop.permute.xlu0 %4346
        %4348 = vrot.lane.b32.xlu0 %v4151, 64
        %v4349 = vpop.permute.xlu0 %4348
        %4350 = vrot.lane.b32.xlu0 %v4154, 64
        %v4351 = vpop.permute.xlu0 %4350
        %4352 = vrot.lane.b32.xlu0 %v4156, 64
        %v4353 = vpop.permute.xlu0 %4352
        %4354 = vrot.lane.b32.xlu0 %v4159, 64
        %v4355 = vpop.permute.xlu0 %4354
        %4356 = vrot.lane.b32.xlu0 %v4161, 64
        %v4357 = vpop.permute.xlu0 %4356
        %4358 = vrot.lane.b32.xlu0 %v4164, 64
        %v4359 = vpop.permute.xlu0 %4358
        %4360 = vrot.lane.b32.xlu0 %v4166, 64
        %v4361 = vpop.permute.xlu0 %4360
        %4362 = vrot.lane.b32.xlu0 %v4169, 64
        %v4363 = vpop.permute.xlu0 %4362
        %4364 = vrot.lane.b32.xlu0 %v4171, 64
        %v4365 = vpop.permute.xlu0 %4364
        %4396 = vrot.lane.b32.xlu0 %v3960, 96
        %v4397 = vpop.permute.xlu0 %4396
        %4398 = vrot.lane.b32.xlu0 %v3867, 96
        %v4399 = vpop.permute.xlu0 %4398
        %4400 = vrot.lane.b32.xlu0 %v3961, 96
        %v4401 = vpop.permute.xlu0 %4400
        %4402 = vrot.lane.b32.xlu0 %v3870, 96
        %v4403 = vpop.permute.xlu0 %4402
        %4404 = vrot.lane.b32.xlu0 %v3962, 96
        %v4405 = vpop.permute.xlu0 %4404
        %4406 = vrot.lane.b32.xlu0 %v3873, 96
        %v4407 = vpop.permute.xlu0 %4406
        %4408 = vrot.lane.b32.xlu0 %v3963, 96
        %v4409 = vpop.permute.xlu0 %4408
        %4410 = vrot.lane.b32.xlu0 %v3876, 96
        %v4411 = vpop.permute.xlu0 %4410
        %4412 = vrot.lane.b32.xlu0 %v3964, 96
        %v4413 = vpop.permute.xlu0 %4412
        %4414 = vrot.lane.b32.xlu0 %v3879, 96
        %v4415 = vpop.permute.xlu0 %4414
        %4416 = vrot.lane.b32.xlu0 %v3965, 96
        %v4417 = vpop.permute.xlu0 %4416
        %4418 = vrot.lane.b32.xlu0 %v3882, 96
        %v4419 = vpop.permute.xlu0 %4418
        %4420 = vrot.lane.b32.xlu0 %v3966, 96
        %v4421 = vpop.permute.xlu0 %4420
        %4422 = vrot.lane.b32.xlu0 %v3885, 96
        %v4423 = vpop.permute.xlu0 %4422
        %4424 = vrot.lane.b32.xlu0 %v3967, 96
        %v4425 = vpop.permute.xlu0 %4424
        %4426 = vrot.lane.b32.xlu0 %v3888, 96
        %v4427 = vpop.permute.xlu0 %4426
        %4428 = vrot.lane.b32.xlu0 %v3968, 96
        %v4429 = vpop.permute.xlu0 %4428
        %4430 = vrot.lane.b32.xlu0 %v3891, 96
        %v4431 = vpop.permute.xlu0 %4430
        %4432 = vrot.lane.b32.xlu0 %v3969, 96
        %v4433 = vpop.permute.xlu0 %4432
        %4434 = vrot.lane.b32.xlu0 %v3894, 96
        %v4435 = vpop.permute.xlu0 %4434
        %4436 = vrot.lane.b32.xlu0 %v3970, 96
        %v4437 = vpop.permute.xlu0 %4436
        %4438 = vrot.lane.b32.xlu0 %v3897, 96
        %v4439 = vpop.permute.xlu0 %4438
        %4440 = vrot.lane.b32.xlu0 %v3971, 96
        %v4441 = vpop.permute.xlu0 %4440
        %4442 = vrot.lane.b32.xlu0 %v3900, 96
        %v4443 = vpop.permute.xlu0 %4442
        %4444 = vrot.lane.b32.xlu0 %v3972, 96
        %v4445 = vpop.permute.xlu0 %4444
        %4446 = vrot.lane.b32.xlu0 %v3903, 96
        %v4447 = vpop.permute.xlu0 %4446
        %4448 = vrot.lane.b32.xlu0 %v3973, 96
        %v4449 = vpop.permute.xlu0 %4448
        %4450 = vrot.lane.b32.xlu0 %v3906, 96
        %v4451 = vpop.permute.xlu0 %4450
        %4452 = vrot.lane.b32.xlu0 %v3974, 96
        %v4453 = vpop.permute.xlu0 %4452
        %4454 = vrot.lane.b32.xlu0 %v3909, 96
        %v4455 = vpop.permute.xlu0 %4454
        %4456 = vrot.lane.b32.xlu0 %v3975, 96
        %v4457 = vpop.permute.xlu0 %4456
        %4458 = vrot.lane.b32.xlu0 %v3912, 96
        %v4459 = vpop.permute.xlu0 %4458
        %4492 = vrot.lane.b32.xlu0 %v4099, 32
        %v4493 = vpop.permute.xlu0 %4492
        %4494 = vrot.lane.b32.xlu0 %v4101, 32
        %v4495 = vpop.permute.xlu0 %4494
        %4496 = vrot.lane.b32.xlu0 %v4104, 32
        %v4497 = vpop.permute.xlu0 %4496
        %4498 = vrot.lane.b32.xlu0 %v4106, 32
        %v4499 = vpop.permute.xlu0 %4498
        %4500 = vrot.lane.b32.xlu0 %v4109, 32
        %v4501 = vpop.permute.xlu0 %4500
        %4502 = vrot.lane.b32.xlu0 %v4111, 32
        %v4503 = vpop.permute.xlu0 %4502
        %4504 = vrot.lane.b32.xlu0 %v4114, 32
        %v4505 = vpop.permute.xlu0 %4504
        %4506 = vrot.lane.b32.xlu0 %v4116, 32
        %v4507 = vpop.permute.xlu0 %4506
        %4508 = vrot.lane.b32.xlu0 %v4119, 32
        %v4509 = vpop.permute.xlu0 %4508
        %4510 = vrot.lane.b32.xlu0 %v4121, 32
        %v4511 = vpop.permute.xlu0 %4510
        %4512 = vrot.lane.b32.xlu0 %v4124, 32
        %v4513 = vpop.permute.xlu0 %4512
        %4514 = vrot.lane.b32.xlu0 %v4126, 32
        %v4515 = vpop.permute.xlu0 %4514
        %4516 = vrot.lane.b32.xlu0 %v4129, 32
        %v4517 = vpop.permute.xlu0 %4516
        %4518 = vrot.lane.b32.xlu0 %v4131, 32
        %v4519 = vpop.permute.xlu0 %4518
        %4520 = vrot.lane.b32.xlu0 %v4134, 32
        %v4521 = vpop.permute.xlu0 %4520
        %4522 = vrot.lane.b32.xlu0 %v4136, 32
        %v4523 = vpop.permute.xlu0 %4522
        %4524 = vrot.lane.b32.xlu0 %v4139, 32
        %v4525 = vpop.permute.xlu0 %4524
        %4526 = vrot.lane.b32.xlu0 %v4141, 32
        %v4527 = vpop.permute.xlu0 %4526
        %4528 = vrot.lane.b32.xlu0 %v4144, 32
        %v4529 = vpop.permute.xlu0 %4528
        %4530 = vrot.lane.b32.xlu0 %v4146, 32
        %v4531 = vpop.permute.xlu0 %4530
        %4532 = vrot.lane.b32.xlu0 %v4149, 32
        %v4533 = vpop.permute.xlu0 %4532
        %4534 = vrot.lane.b32.xlu0 %v4151, 32
        %v4535 = vpop.permute.xlu0 %4534
        %4536 = vrot.lane.b32.xlu0 %v4154, 32
        %v4537 = vpop.permute.xlu0 %4536
        %4538 = vrot.lane.b32.xlu0 %v4156, 32
        %v4539 = vpop.permute.xlu0 %4538
        %4540 = vrot.lane.b32.xlu0 %v4159, 32
        %v4541 = vpop.permute.xlu0 %4540
        %4542 = vrot.lane.b32.xlu0 %v4161, 32
        %v4543 = vpop.permute.xlu0 %4542
        %4544 = vrot.lane.b32.xlu0 %v4164, 32
        %v4545 = vpop.permute.xlu0 %4544
        %4546 = vrot.lane.b32.xlu0 %v4166, 32
        %v4547 = vpop.permute.xlu0 %4546
        %4548 = vrot.lane.b32.xlu0 %v4169, 32
        %v4549 = vpop.permute.xlu0 %4548
        %4550 = vrot.lane.b32.xlu0 %v4171, 32
        %v4551 = vpop.permute.xlu0 %4550
        %4552 = vrot.lane.b32.xlu0 %v4213, 32
        %v4553 = vpop.permute.xlu0 %4552
        %4554 = vrot.lane.b32.xlu0 %v4215, 32
        %v4555 = vpop.permute.xlu0 %4554
        %4588 = vrot.lane.b32.xlu0 %v3961, 64
        %v4589 = vpop.permute.xlu0 %4588
        %4590 = vrot.lane.b32.xlu0 %v3870, 64
        %v4591 = vpop.permute.xlu0 %4590
        %4592 = vrot.lane.b32.xlu0 %v3962, 64
        %v4593 = vpop.permute.xlu0 %4592
        %4594 = vrot.lane.b32.xlu0 %v3873, 64
        %v4595 = vpop.permute.xlu0 %4594
        %4596 = vrot.lane.b32.xlu0 %v3963, 64
        %v4597 = vpop.permute.xlu0 %4596
        %4598 = vrot.lane.b32.xlu0 %v3876, 64
        %v4599 = vpop.permute.xlu0 %4598
        %4600 = vrot.lane.b32.xlu0 %v3964, 64
        %v4601 = vpop.permute.xlu0 %4600
        %4602 = vrot.lane.b32.xlu0 %v3879, 64
        %v4603 = vpop.permute.xlu0 %4602
        %4604 = vrot.lane.b32.xlu0 %v3965, 64
        %v4605 = vpop.permute.xlu0 %4604
        %4606 = vrot.lane.b32.xlu0 %v3882, 64
        %v4607 = vpop.permute.xlu0 %4606
        %4608 = vrot.lane.b32.xlu0 %v3966, 64
        %v4609 = vpop.permute.xlu0 %4608
        %4610 = vrot.lane.b32.xlu0 %v3885, 64
        %v4611 = vpop.permute.xlu0 %4610
        %4612 = vrot.lane.b32.xlu0 %v3967, 64
        %v4613 = vpop.permute.xlu0 %4612
        %4614 = vrot.lane.b32.xlu0 %v3888, 64
        %v4615 = vpop.permute.xlu0 %4614
        %4616 = vrot.lane.b32.xlu0 %v3968, 64
        %v4617 = vpop.permute.xlu0 %4616
        %4618 = vrot.lane.b32.xlu0 %v3891, 64
        %v4619 = vpop.permute.xlu0 %4618
        %4620 = vrot.lane.b32.xlu0 %v3969, 64
        %v4621 = vpop.permute.xlu0 %4620
        %4622 = vrot.lane.b32.xlu0 %v3894, 64
        %v4623 = vpop.permute.xlu0 %4622
        %4624 = vrot.lane.b32.xlu0 %v3970, 64
        %v4625 = vpop.permute.xlu0 %4624
        %4626 = vrot.lane.b32.xlu0 %v3897, 64
        %v4627 = vpop.permute.xlu0 %4626
        %4628 = vrot.lane.b32.xlu0 %v3971, 64
        %v4629 = vpop.permute.xlu0 %4628
        %4630 = vrot.lane.b32.xlu0 %v3900, 64
        %v4631 = vpop.permute.xlu0 %4630
        %4632 = vrot.lane.b32.xlu0 %v3972, 64
        %v4633 = vpop.permute.xlu0 %4632
        %4634 = vrot.lane.b32.xlu0 %v3903, 64
        %v4635 = vpop.permute.xlu0 %4634
        %4636 = vrot.lane.b32.xlu0 %v3973, 64
        %v4637 = vpop.permute.xlu0 %4636
        %4638 = vrot.lane.b32.xlu0 %v3906, 64
        %v4639 = vpop.permute.xlu0 %4638
        %4640 = vrot.lane.b32.xlu0 %v3974, 64
        %v4641 = vpop.permute.xlu0 %4640
        %4642 = vrot.lane.b32.xlu0 %v3909, 64
        %v4643 = vpop.permute.xlu0 %4642
        %4644 = vrot.lane.b32.xlu0 %v3975, 64
        %v4645 = vpop.permute.xlu0 %4644
        %4646 = vrot.lane.b32.xlu0 %v3912, 64
        %v4647 = vpop.permute.xlu0 %4646
        %4678 = vrot.lane.b32.xlu0 %v4029, 96
        %v4679 = vpop.permute.xlu0 %4678
        %4680 = vrot.lane.b32.xlu0 %v4031, 96
        %v4681 = vpop.permute.xlu0 %4680
        %4682 = vrot.lane.b32.xlu0 %v4034, 96
        %v4683 = vpop.permute.xlu0 %4682
        %4684 = vrot.lane.b32.xlu0 %v4036, 96
        %v4685 = vpop.permute.xlu0 %4684
        %4686 = vrot.lane.b32.xlu0 %v4039, 96
        %v4687 = vpop.permute.xlu0 %4686
        %4688 = vrot.lane.b32.xlu0 %v4041, 96
        %v4689 = vpop.permute.xlu0 %4688
        %4690 = vrot.lane.b32.xlu0 %v4044, 96
        %v4691 = vpop.permute.xlu0 %4690
        %4692 = vrot.lane.b32.xlu0 %v4046, 96
        %v4693 = vpop.permute.xlu0 %4692
        %4694 = vrot.lane.b32.xlu0 %v4049, 96
        %v4695 = vpop.permute.xlu0 %4694
        %4696 = vrot.lane.b32.xlu0 %v4051, 96
        %v4697 = vpop.permute.xlu0 %4696
        %4698 = vrot.lane.b32.xlu0 %v4054, 96
        %v4699 = vpop.permute.xlu0 %4698
        %4700 = vrot.lane.b32.xlu0 %v4056, 96
        %v4701 = vpop.permute.xlu0 %4700
        %4702 = vrot.lane.b32.xlu0 %v4059, 96
        %v4703 = vpop.permute.xlu0 %4702
        %4704 = vrot.lane.b32.xlu0 %v4061, 96
        %v4705 = vpop.permute.xlu0 %4704
        %4706 = vrot.lane.b32.xlu0 %v4064, 96
        %v4707 = vpop.permute.xlu0 %4706
        %4708 = vrot.lane.b32.xlu0 %v4066, 96
        %v4709 = vpop.permute.xlu0 %4708
        %4710 = vrot.lane.b32.xlu0 %v4069, 96
        %v4711 = vpop.permute.xlu0 %4710
        %4712 = vrot.lane.b32.xlu0 %v4071, 96
        %v4713 = vpop.permute.xlu0 %4712
        %4714 = vrot.lane.b32.xlu0 %v4074, 96
        %v4715 = vpop.permute.xlu0 %4714
        %4716 = vrot.lane.b32.xlu0 %v4076, 96
        %v4717 = vpop.permute.xlu0 %4716
        %4718 = vrot.lane.b32.xlu0 %v4079, 96
        %v4719 = vpop.permute.xlu0 %4718
        %4720 = vrot.lane.b32.xlu0 %v4081, 96
        %v4721 = vpop.permute.xlu0 %4720
        %4722 = vrot.lane.b32.xlu0 %v4084, 96
        %v4723 = vpop.permute.xlu0 %4722
        %4724 = vrot.lane.b32.xlu0 %v4086, 96
        %v4725 = vpop.permute.xlu0 %4724
        %4726 = vrot.lane.b32.xlu0 %v4089, 96
        %v4727 = vpop.permute.xlu0 %4726
        %4728 = vrot.lane.b32.xlu0 %v4091, 96
        %v4729 = vpop.permute.xlu0 %4728
        %4730 = vrot.lane.b32.xlu0 %v4094, 96
        %v4731 = vpop.permute.xlu0 %4730
        %4732 = vrot.lane.b32.xlu0 %v4096, 96
        %v4733 = vpop.permute.xlu0 %4732
        %4734 = vrot.lane.b32.xlu0 %v4176, 96
        %v4735 = vpop.permute.xlu0 %4734
        %4736 = vrot.lane.b32.xlu0 %v4178, 96
        %v4737 = vpop.permute.xlu0 %4736
        %v4768 = vsel %vm400, %v3960, %v4217
        %v4769 = vsel %vm400, %v3867, %v4219
        %v4770 = vsel %vm400, %v3961, %v4221
        %v4771 = vsel %vm400, %v3870, %v4223
        %v4772 = vsel %vm400, %v3962, %v4225
        %v4773 = vsel %vm400, %v3873, %v4227
        %v4774 = vsel %vm400, %v3963, %v4229
        %v4775 = vsel %vm400, %v3876, %v4231
        %v4776 = vsel %vm400, %v3964, %v4233
        %v4777 = vsel %vm400, %v3879, %v4235
        %v4778 = vsel %vm400, %v3965, %v4237
        %v4779 = vsel %vm400, %v3882, %v4239
        %v4780 = vsel %vm400, %v3966, %v4241
        %v4781 = vsel %vm400, %v3885, %v4243
        %v4782 = vsel %vm400, %v3967, %v4245
        %v4783 = vsel %vm400, %v3888, %v4247
        %v4784 = vsel %vm400, %v3968, %v4249
        %v4785 = vsel %vm400, %v3891, %v4251
        %v4786 = vsel %vm400, %v3969, %v4253
        %v4787 = vsel %vm400, %v3894, %v4255
        %v4788 = vsel %vm400, %v3970, %v4257
        %v4789 = vsel %vm400, %v3897, %v4259
        %v4790 = vsel %vm400, %v3971, %v4261
        %v4791 = vsel %vm400, %v3900, %v4263
        %v4792 = vsel %vm400, %v3972, %v4265
        %v4793 = vsel %vm400, %v3903, %v4267
        %v4794 = vsel %vm400, %v3973, %v4269
        %v4795 = vsel %vm400, %v3906, %v4271
        %v4796 = vsel %vm400, %v3974, %v4273
        %v4797 = vsel %vm400, %v3909, %v4275
        %v4798 = vsel %vm2668, %v4768, %v4307
        %v4799 = vsel %vm2668, %v4769, %v4309
        %v4800 = vsel %vm2668, %v4770, %v4311
        %v4801 = vsel %vm2668, %v4771, %v4313
        %v4802 = vsel %vm2668, %v4772, %v4315
        %v4803 = vsel %vm2668, %v4773, %v4317
        %v4804 = vsel %vm2668, %v4774, %v4319
        %v4805 = vsel %vm2668, %v4775, %v4321
        %v4806 = vsel %vm2668, %v4776, %v4323
        %v4807 = vsel %vm2668, %v4777, %v4325
        %v4808 = vsel %vm2668, %v4778, %v4327
        %v4809 = vsel %vm2668, %v4779, %v4329
        %v4810 = vsel %vm2668, %v4780, %v4331
        %v4811 = vsel %vm2668, %v4781, %v4333
        %v4812 = vsel %vm2668, %v4782, %v4335
        %v4813 = vsel %vm2668, %v4783, %v4337
        %v4814 = vsel %vm2668, %v4784, %v4339
        %v4815 = vsel %vm2668, %v4785, %v4341
        %v4816 = vsel %vm2668, %v4786, %v4343
        %v4817 = vsel %vm2668, %v4787, %v4345
        %v4818 = vsel %vm2668, %v4788, %v4347
        %v4819 = vsel %vm2668, %v4789, %v4349
        %v4820 = vsel %vm2668, %v4790, %v4351
        %v4821 = vsel %vm2668, %v4791, %v4353
        %v4822 = vsel %vm2668, %v4792, %v4355
        %v4823 = vsel %vm2668, %v4793, %v4357
        %v4824 = vsel %vm2668, %v4794, %v4359
        %v4825 = vsel %vm2668, %v4795, %v4361
        %v4826 = vsel %vm2668, %v4796, %v4363
        %v4827 = vsel %vm2668, %v4797, %v4365
        %v4828 = vsel %vm2686, %v2669, %v4397
        %v4829 = vsel %vm2686, %v2669, %v4399
        %v4830 = vsel %vm2686, %v4798, %v4401
        %v4831 = vsel %vm2686, %v4799, %v4403
        %v4832 = vsel %vm2686, %v4800, %v4405
        %v4833 = vsel %vm2686, %v4801, %v4407
        %v4834 = vsel %vm2686, %v4802, %v4409
        %v4835 = vsel %vm2686, %v4803, %v4411
        %v4836 = vsel %vm2686, %v4804, %v4413
        %v4837 = vsel %vm2686, %v4805, %v4415
        %v4838 = vsel %vm2686, %v4806, %v4417
        %v4839 = vsel %vm2686, %v4807, %v4419
        %v4840 = vsel %vm2686, %v4808, %v4421
        %v4841 = vsel %vm2686, %v4809, %v4423
        %v4842 = vsel %vm2686, %v4810, %v4425
        %v4843 = vsel %vm2686, %v4811, %v4427
        %v4844 = vsel %vm2686, %v4812, %v4429
        %v4845 = vsel %vm2686, %v4813, %v4431
        %v4846 = vsel %vm2686, %v4814, %v4433
        %v4847 = vsel %vm2686, %v4815, %v4435
        %v4848 = vsel %vm2686, %v4816, %v4437
        %v4849 = vsel %vm2686, %v4817, %v4439
        %v4850 = vsel %vm2686, %v4818, %v4441
        %v4851 = vsel %vm2686, %v4819, %v4443
        %v4852 = vsel %vm2686, %v4820, %v4445
        %v4853 = vsel %vm2686, %v4821, %v4447
        %v4854 = vsel %vm2686, %v4822, %v4449
        %v4855 = vsel %vm2686, %v4823, %v4451
        %v4856 = vsel %vm2686, %v4824, %v4453
        %v4857 = vsel %vm2686, %v4825, %v4455
        %v4858 = vsel %vm2686, %v4826, %v4457
        %v4859 = vsel %vm2686, %v4827, %v4459
        %v4860 = vsel %vm400, %v4024, %v4493
        %v4861 = vsel %vm400, %v4026, %v4495
        %v4862 = vsel %vm400, %v4029, %v4497
        %v4863 = vsel %vm400, %v4031, %v4499
        %v4864 = vsel %vm400, %v4034, %v4501
        %v4865 = vsel %vm400, %v4036, %v4503
        %v4866 = vsel %vm400, %v4039, %v4505
        %v4867 = vsel %vm400, %v4041, %v4507
        %v4868 = vsel %vm400, %v4044, %v4509
        %v4869 = vsel %vm400, %v4046, %v4511
        %v4870 = vsel %vm400, %v4049, %v4513
        %v4871 = vsel %vm400, %v4051, %v4515
        %v4872 = vsel %vm400, %v4054, %v4517
        %v4873 = vsel %vm400, %v4056, %v4519
        %v4874 = vsel %vm400, %v4059, %v4521
        %v4875 = vsel %vm400, %v4061, %v4523
        %v4876 = vsel %vm400, %v4064, %v4525
        %v4877 = vsel %vm400, %v4066, %v4527
        %v4878 = vsel %vm400, %v4069, %v4529
        %v4879 = vsel %vm400, %v4071, %v4531
        %v4880 = vsel %vm400, %v4074, %v4533
        %v4881 = vsel %vm400, %v4076, %v4535
        %v4882 = vsel %vm400, %v4079, %v4537
        %v4883 = vsel %vm400, %v4081, %v4539
        %v4884 = vsel %vm400, %v4084, %v4541
        %v4885 = vsel %vm400, %v4086, %v4543
        %v4886 = vsel %vm400, %v4089, %v4545
        %v4887 = vsel %vm400, %v4091, %v4547
        %v4888 = vsel %vm400, %v4094, %v4549
        %v4889 = vsel %vm400, %v4096, %v4551
        %v4890 = vsel %vm400, %v4176, %v4553
        %v4891 = vsel %vm400, %v4178, %v4555
        %v4892 = vsel %vm2668, %v4860, %v4589
        %v4893 = vsel %vm2668, %v4861, %v4591
        %v4894 = vsel %vm2668, %v4862, %v4593
        %v4895 = vsel %vm2668, %v4863, %v4595
        %v4896 = vsel %vm2668, %v4864, %v4597
        %v4897 = vsel %vm2668, %v4865, %v4599
        %v4898 = vsel %vm2668, %v4866, %v4601
        %v4899 = vsel %vm2668, %v4867, %v4603
        %v4900 = vsel %vm2668, %v4868, %v4605
        %v4901 = vsel %vm2668, %v4869, %v4607
        %v4902 = vsel %vm2668, %v4870, %v4609
        %v4903 = vsel %vm2668, %v4871, %v4611
        %v4904 = vsel %vm2668, %v4872, %v4613
        %v4905 = vsel %vm2668, %v4873, %v4615
        %v4906 = vsel %vm2668, %v4874, %v4617
        %v4907 = vsel %vm2668, %v4875, %v4619
        %v4908 = vsel %vm2668, %v4876, %v4621
        %v4909 = vsel %vm2668, %v4877, %v4623
        %v4910 = vsel %vm2668, %v4878, %v4625
        %v4911 = vsel %vm2668, %v4879, %v4627
        %v4912 = vsel %vm2668, %v4880, %v4629
        %v4913 = vsel %vm2668, %v4881, %v4631
        %v4914 = vsel %vm2668, %v4882, %v4633
        %v4915 = vsel %vm2668, %v4883, %v4635
        %v4916 = vsel %vm2668, %v4884, %v4637
        %v4917 = vsel %vm2668, %v4885, %v4639
        %v4918 = vsel %vm2668, %v4886, %v4641
        %v4919 = vsel %vm2668, %v4887, %v4643
        %v4920 = vsel %vm2668, %v4888, %v4645
        %v4921 = vsel %vm2668, %v4889, %v4647
        %v4922 = vsel %vm2668, %v4890, %v2582
        %v4923 = vsel %vm2668, %v4891, %v2582
        %v4924 = vsel %vm2686, %v4892, %v4679
        %v4925 = vsel %vm2686, %v4893, %v4681
        %v4926 = vsel %vm2686, %v4894, %v4683
        %v4927 = vsel %vm2686, %v4895, %v4685
        %v4928 = vsel %vm2686, %v4896, %v4687
        %v4929 = vsel %vm2686, %v4897, %v4689
        %v4930 = vsel %vm2686, %v4898, %v4691
        %v4931 = vsel %vm2686, %v4899, %v4693
        %v4932 = vsel %vm2686, %v4900, %v4695
        %v4933 = vsel %vm2686, %v4901, %v4697
        %v4934 = vsel %vm2686, %v4902, %v4699
        %v4935 = vsel %vm2686, %v4903, %v4701
        %v4936 = vsel %vm2686, %v4904, %v4703
        %v4937 = vsel %vm2686, %v4905, %v4705
        %v4938 = vsel %vm2686, %v4906, %v4707
        %v4939 = vsel %vm2686, %v4907, %v4709
        %v4940 = vsel %vm2686, %v4908, %v4711
        %v4941 = vsel %vm2686, %v4909, %v4713
        %v4942 = vsel %vm2686, %v4910, %v4715
        %v4943 = vsel %vm2686, %v4911, %v4717
        %v4944 = vsel %vm2686, %v4912, %v4719
        %v4945 = vsel %vm2686, %v4913, %v4721
        %v4946 = vsel %vm2686, %v4914, %v4723
        %v4947 = vsel %vm2686, %v4915, %v4725
        %v4948 = vsel %vm2686, %v4916, %v4727
        %v4949 = vsel %vm2686, %v4917, %v4729
        %v4950 = vsel %vm2686, %v4918, %v4731
        %v4951 = vsel %vm2686, %v4919, %v4733
        %v4952 = vsel %vm2686, %v4920, %v4735
        %v4953 = vsel %vm2686, %v4921, %v4737
        %v4954 = vsel %vm2686, %v4922, %v2633
        %v4955 = vsel %vm2686, %v4923, %v2633
        %v4957 = vlaneseq
        %v4958 = vshrl.u32 %v4957, 7
        %v4959 = vsub.s32 0, %v4958
        %v4960 = vrot.slane %v3832, %v4959
        %v4962 = vsel %vm400, %v4104, 0
        %v4964 = vsel %vm400, %v4106, 0
        %v4966 = vsel %vm400, %v4109, 0
        %v4968 = vsel %vm400, %v4111, 0
        %v4970 = vsel %vm400, %v4114, 0
        %v4972 = vsel %vm400, %v4116, 0
        %v4974 = vsel %vm400, %v4119, 0
        %v4976 = vsel %vm400, %v4121, 0
        %v4978 = vsel %vm400, %v4124, 0
        %v4980 = vsel %vm400, %v4126, 0
        %v4982 = vsel %vm400, %v4129, 0
        %v4984 = vsel %vm400, %v4131, 0
        %v4986 = vsel %vm400, %v4134, 0
        %v4988 = vsel %vm400, %v4136, 0
        %v4990 = vsel %vm400, %v4139, 0
        %v4992 = vsel %vm400, %v4141, 0
        %v4994 = vsel %vm400, %v4144, 0
        %v4996 = vsel %vm400, %v4146, 0
        %v4998 = vsel %vm400, %v4149, 0
        %v5000 = vsel %vm400, %v4151, 0
        %v5002 = vsel %vm400, %v4154, 0
        %v5004 = vsel %vm400, %v4156, 0
        %v5006 = vsel %vm400, %v4159, 0
        %v5008 = vsel %vm400, %v4161, 0
        %v5010 = vsel %vm400, %v4164, 0
        %v5012 = vsel %vm400, %v4166, 0
        %v5014 = vsel %vm400, %v4169, 0
        %v5016 = vsel %vm400, %v4171, 0
        %v5018 = vsel %vm400, %v4213, 0
        %v5020 = vsel %vm400, %v4215, 0
        %5022 = vmatprep.subr.mxu0 0.0
        %5023 = vmatpush1.msra.mxu0 %v3796
        %5024 = vmatprep.subr.mxu0 0.0
        %5025 = vmatpush1.msra.mxu0 %v3797
        %5026 = vmatprep.subr.mxu0 0.0
        %5027 = vmatpush1.msra.mxu0 %v3798
        %5028 = vmatprep.subr.mxu0 0.0
        %5029 = vmatpush1.msra.mxu0 %v3799
        %5030 = vmatprep.subr.mxu0 0.0
        %5031 = vmatpush1.msra.mxu0 %v3800
        %5032 = vmatprep.subr.mxu0 0.0
        %5033 = vmatpush1.msra.mxu0 %v3801
        %5034 = vmatprep.subr.mxu0 0.0
        %5035 = vmatpush1.msra.mxu0 %v3802
        %5036 = vmatprep.subr.mxu0 0.0
        %5037 = vmatpush1.msra.mxu0 %v3803
        %5038 = vmatprep.subr.mxu0 0.0
        %5039 = vmatpush1.msra.mxu0 %v3804
        %5040 = vmatprep.subr.mxu0 0.0
        %5041 = vmatpush1.msra.mxu0 %v3805
        %5042 = vmatprep.subr.mxu0 0.0
        %5043 = vmatpush1.msra.mxu0 %v3806
        %5044 = vmatprep.subr.mxu0 0.0
        %5045 = vmatpush1.msra.mxu0 %v3807
        %5046 = vmatprep.subr.mxu0 0.0
        %5047 = vmatpush1.msra.mxu0 %v3808
        %5048 = vmatprep.subr.mxu0 0.0
        %5049 = vmatpush1.msra.mxu0 %v3809
        %5050 = vmatprep.subr.mxu0 0.0
        %5051 = vmatpush1.msra.mxu0 %v3810
        %5052 = vmatprep.subr.mxu0 0.0
        %5053 = vmatpush1.msra.mxu0 %v3811
        %5054 = vmatprep.subr.mxu0 0.0
        %5055 = vmatpush1.msra.mxu0 %v3812
        %5056 = vmatprep.subr.mxu0 0.0
        %5057 = vmatpush1.msra.mxu0 %v3813
        %5058 = vmatprep.subr.mxu0 0.0
        %5059 = vmatpush1.msra.mxu0 %v3814
        %5060 = vmatprep.subr.mxu0 0.0
        %5061 = vmatpush1.msra.mxu0 %v3815
        %5062 = vmatprep.subr.mxu0 0.0
        %5063 = vmatpush1.msra.mxu0 %v3816
        %5064 = vmatprep.subr.mxu0 0.0
        %5065 = vmatpush1.msra.mxu0 %v3817
        %5066 = vmatprep.subr.mxu0 0.0
        %5067 = vmatpush1.msra.mxu0 %v3818
        %5068 = vmatprep.subr.mxu0 0.0
        %5069 = vmatpush1.msra.mxu0 %v3819
        %5070 = vmatprep.subr.mxu0 0.0
        %5071 = vmatpush1.msra.mxu0 %v3820
        %5072 = vmatprep.subr.mxu0 0.0
        %5073 = vmatpush1.msra.mxu0 %v3821
        %5074 = vmatprep.subr.mxu0 0.0
        %5075 = vmatpush1.msra.mxu0 %v3822
        %5076 = vmatprep.subr.mxu0 0.0
        %5077 = vmatpush1.msra.mxu0 %v3823
        %5078 = vmatprep.subr.mxu0 0.0
        %5079 = vmatpush1.msra.mxu0 %v3824
        %5080 = vmatprep.subr.mxu0 0.0
        %5081 = vmatpush1.msra.mxu0 %v3825
        %5082 = vmatprep.subr.mxu0 0.0
        %5083 = vmatpush1.msra.mxu0 %v3826
        %5084 = vmatprep.subr.mxu0 0.0
        %5085 = vmatpush1.msra.mxu0 %v3827
        %5086 = vmatprep.mubr.f32.mxu0 %v4924
        %5087 = vmatmul.mubr.f32.gmra.mrb[0].mxu0 %v4828
        %v5088 = vpop.f32.mrb[0].mxu0
        %v5089 = vadd.f32 %v4960, %v5088
        %v5090 = vpop.f32.mrb[0].mxu0
        %5091 = vmatprep.mubr.f32.mxu0 %v4925
        %5092 = vmatmul.mubr.f32.gmra.mrb[0].mxu0 %v4829
        %v5093 = vpop.f32.mrb[0].mxu0
        %v5094 = vadd.f32 %v4960, %v5093
        %v5095 = vpop.f32.mrb[0].mxu0
        %5096 = vmatprep.mubr.f32.mxu0 %v4926
        %5097 = vmatmul.mubr.f32.gmra.mrb[0].mxu0 %v4830
        %v5098 = vpop.f32.mrb[0].mxu0
        %v5099 = vadd.f32 %v4960, %v5098
        %v5100 = vpop.f32.mrb[0].mxu0
        %5101 = vmatprep.mubr.f32.mxu0 %v4927
        %5102 = vmatmul.mubr.f32.gmra.mrb[0].mxu0 %v4831
        %v5103 = vpop.f32.mrb[0].mxu0
        %v5104 = vadd.f32 %v4960, %v5103
        %v5105 = vpop.f32.mrb[0].mxu0
        %5106 = vmatprep.mubr.f32.mxu0 %v4928
        %5107 = vmatmul.mubr.f32.gmra.mrb[0].mxu0 %v4832
        %v5108 = vpop.f32.mrb[0].mxu0
        %v5109 = vadd.f32 %v4960, %v5108
        %v5110 = vpop.f32.mrb[0].mxu0
        %5111 = vmatprep.mubr.f32.mxu0 %v4929
        %5112 = vmatmul.mubr.f32.gmra.mrb[0].mxu0 %v4833
        %v5113 = vpop.f32.mrb[0].mxu0
        %v5114 = vadd.f32 %v4960, %v5113
        %v5115 = vpop.f32.mrb[0].mxu0
        %5116 = vmatprep.mubr.f32.mxu0 %v4930
        %5117 = vmatmul.mubr.f32.gmra.mrb[0].mxu0 %v4834
        %v5118 = vpop.f32.mrb[0].mxu0
        %v5119 = vadd.f32 %v4960, %v5118
        %v5120 = vpop.f32.mrb[0].mxu0
        %5121 = vmatprep.mubr.f32.mxu0 %v4931
        %5122 = vmatmul.mubr.f32.gmra.mrb[0].mxu0 %v4835
        %v5123 = vpop.f32.mrb[0].mxu0
        %v5124 = vadd.f32 %v4960, %v5123
        %v5125 = vpop.f32.mrb[0].mxu0
        %5126 = vmatprep.mubr.f32.mxu0 %v4932
        %5127 = vmatmul.mubr.f32.gmra.mrb[0].mxu0 %v4836
        %v5128 = vpop.f32.mrb[0].mxu0
        %v5129 = vadd.f32 %v4960, %v5128
        %v5130 = vpop.f32.mrb[0].mxu0
        %5131 = vmatprep.mubr.f32.mxu0 %v4933
        %5132 = vmatmul.mubr.f32.gmra.mrb[0].mxu0 %v4837
        %v5133 = vpop.f32.mrb[0].mxu0
        %v5134 = vadd.f32 %v4960, %v5133
        %v5135 = vpop.f32.mrb[0].mxu0
        %5136 = vmatprep.mubr.f32.mxu0 %v4934
        %5137 = vmatmul.mubr.f32.gmra.mrb[0].mxu0 %v4838
        %v5138 = vpop.f32.mrb[0].mxu0
        %v5139 = vadd.f32 %v4960, %v5138
        %v5140 = vpop.f32.mrb[0].mxu0
        %5141 = vmatprep.mubr.f32.mxu0 %v4935
        %5142 = vmatmul.mubr.f32.gmra.mrb[0].mxu0 %v4839
        %v5143 = vpop.f32.mrb[0].mxu0
        %v5144 = vadd.f32 %v4960, %v5143
        %v5145 = vpop.f32.mrb[0].mxu0
        %5146 = vmatprep.mubr.f32.mxu0 %v4936
        %5147 = vmatmul.mubr.f32.gmra.mrb[0].mxu0 %v4840
        %v5148 = vpop.f32.mrb[0].mxu0
        %v5149 = vadd.f32 %v4960, %v5148
        %v5150 = vpop.f32.mrb[0].mxu0
        %5151 = vmatprep.mubr.f32.mxu0 %v4937
        %5152 = vmatmul.mubr.f32.gmra.mrb[0].mxu0 %v4841
        %v5153 = vpop.f32.mrb[0].mxu0
        %v5154 = vadd.f32 %v4960, %v5153
        %v5155 = vpop.f32.mrb[0].mxu0
        %5156 = vmatprep.mubr.f32.mxu0 %v4938
        %5157 = vmatmul.mubr.f32.gmra.mrb[0].mxu0 %v4842
        %v5158 = vpop.f32.mrb[0].mxu0
        %v5159 = vadd.f32 %v4960, %v5158
        %v5160 = vpop.f32.mrb[0].mxu0
        %5161 = vmatprep.mubr.f32.mxu0 %v4939
        %5162 = vmatmul.mubr.f32.gmra.mrb[0].mxu0 %v4843
        %v5163 = vpop.f32.mrb[0].mxu0
        %v5164 = vadd.f32 %v4960, %v5163
        %v5165 = vpop.f32.mrb[0].mxu0
        %5166 = vmatprep.mubr.f32.mxu0 %v4940
        %5167 = vmatmul.mubr.f32.gmra.mrb[0].mxu0 %v4844
        %v5168 = vpop.f32.mrb[0].mxu0
        %v5169 = vadd.f32 %v4960, %v5168
        %v5170 = vpop.f32.mrb[0].mxu0
        %5171 = vmatprep.mubr.f32.mxu0 %v4941
        %5172 = vmatmul.mubr.f32.gmra.mrb[0].mxu0 %v4845
        %v5173 = vpop.f32.mrb[0].mxu0
        %v5174 = vadd.f32 %v4960, %v5173
        %v5175 = vpop.f32.mrb[0].mxu0
        %5176 = vmatprep.mubr.f32.mxu0 %v4942
        %5177 = vmatmul.mubr.f32.gmra.mrb[0].mxu0 %v4846
        %v5178 = vpop.f32.mrb[0].mxu0
        %v5179 = vadd.f32 %v4960, %v5178
        %v5180 = vpop.f32.mrb[0].mxu0
        %5181 = vmatprep.mubr.f32.mxu0 %v4943
        %5182 = vmatmul.mubr.f32.gmra.mrb[0].mxu0 %v4847
        %v5183 = vpop.f32.mrb[0].mxu0
        %v5184 = vadd.f32 %v4960, %v5183
        %v5185 = vpop.f32.mrb[0].mxu0
        %5186 = vmatprep.mubr.f32.mxu0 %v4944
        %5187 = vmatmul.mubr.f32.gmra.mrb[0].mxu0 %v4848
        %v5188 = vpop.f32.mrb[0].mxu0
        %v5189 = vadd.f32 %v4960, %v5188
        %v5190 = vpop.f32.mrb[0].mxu0
        %5191 = vmatprep.mubr.f32.mxu0 %v4945
        %5192 = vmatmul.mubr.f32.gmra.mrb[0].mxu0 %v4849
        %v5193 = vpop.f32.mrb[0].mxu0
        %v5194 = vadd.f32 %v4960, %v5193
        %v5195 = vpop.f32.mrb[0].mxu0
        %5196 = vmatprep.mubr.f32.mxu0 %v4946
        %5197 = vmatmul.mubr.f32.gmra.mrb[0].mxu0 %v4850
        %v5198 = vpop.f32.mrb[0].mxu0
        %v5199 = vadd.f32 %v4960, %v5198
        %v5200 = vpop.f32.mrb[0].mxu0
        %5201 = vmatprep.mubr.f32.mxu0 %v4947
        %5202 = vmatmul.mubr.f32.gmra.mrb[0].mxu0 %v4851
        %v5203 = vpop.f32.mrb[0].mxu0
        %v5204 = vadd.f32 %v4960, %v5203
        %v5205 = vpop.f32.mrb[0].mxu0
        %5206 = vmatprep.mubr.f32.mxu0 %v4948
        %5207 = vmatmul.mubr.f32.gmra.mrb[0].mxu0 %v4852
        %v5208 = vpop.f32.mrb[0].mxu0
        %v5209 = vadd.f32 %v4960, %v5208
        %v5210 = vpop.f32.mrb[0].mxu0
        %5211 = vmatprep.mubr.f32.mxu0 %v4949
        %5212 = vmatmul.mubr.f32.gmra.mrb[0].mxu0 %v4853
        %v5213 = vpop.f32.mrb[0].mxu0
        %v5214 = vadd.f32 %v4960, %v5213
        %v5215 = vpop.f32.mrb[0].mxu0
        %5216 = vmatprep.mubr.f32.mxu0 %v4950
        %5217 = vmatmul.mubr.f32.gmra.mrb[0].mxu0 %v4854
        %v5218 = vpop.f32.mrb[0].mxu0
        %v5219 = vadd.f32 %v4960, %v5218
        %v5220 = vpop.f32.mrb[0].mxu0
        %5221 = vmatprep.mubr.f32.mxu0 %v4951
        %5222 = vmatmul.mubr.f32.gmra.mrb[0].mxu0 %v4855
        %v5223 = vpop.f32.mrb[0].mxu0
        %v5224 = vadd.f32 %v4960, %v5223
        %v5225 = vpop.f32.mrb[0].mxu0
        %5226 = vmatprep.mubr.f32.mxu0 %v4952
        %5227 = vmatmul.mubr.f32.gmra.mrb[0].mxu0 %v4856
        %v5228 = vpop.f32.mrb[0].mxu0
        %v5229 = vadd.f32 %v4960, %v5228
        %v5230 = vpop.f32.mrb[0].mxu0
        %5231 = vmatprep.mubr.f32.mxu0 %v4953
        %5232 = vmatmul.mubr.f32.gmra.mrb[0].mxu0 %v4857
        %v5233 = vpop.f32.mrb[0].mxu0
        %v5234 = vadd.f32 %v4960, %v5233
        %v5235 = vpop.f32.mrb[0].mxu0
        %5236 = vmatprep.mubr.f32.mxu0 %v4954
        %5237 = vmatmul.mubr.f32.gmra.mrb[0].mxu0 %v4858
        %v5238 = vpop.f32.mrb[0].mxu0
        %v5239 = vadd.f32 %v4960, %v5238
        %v5240 = vpop.f32.mrb[0].mxu0
        %5241 = vmatprep.mubr.f32.mxu0 %v4955
        %5242 = vmatmul.mubr.f32.gmra.mrb[0].mxu0 %v4859
        %v5243 = vpop.f32.mrb[0].mxu0
        %v5244 = vadd.f32 %v4960, %v5243
        %v5245 = vpop.f32.mrb[0].mxu0
        %5246 = vdwg.mxu0
        %5247 = vmatprep.subr.mxu0 0.0
        %5248 = vmatpush1.msra.mxu0 %v3828
        %5249 = vmatprep.subr.mxu0 0.0
        %5250 = vmatpush1.msra.mxu0 %v3829
        %5251 = vmatprep.subr.mxu0 0.0
        %5252 = vmatpush1.msra.mxu0 %v3830
        %5253 = vmatprep.subr.mxu0 0.0
        %5254 = vmatpush1.msra.mxu0 %v3831
        %5255 = vmatprep.subr.mxu0 0.0
        %5256 = vmatpush1.msra.mxu0 0.0
        %5257 = vmatprep.subr.mxu0 0.0
        %5258 = vmatpush1.msra.mxu0 0.0
        %5259 = vmatprep.subr.mxu0 0.0
        %5260 = vmatpush1.msra.mxu0 0.0
        %5261 = vmatprep.subr.mxu0 0.0
        %5262 = vmatpush1.msra.mxu0 0.0
        %5263 = vmatprep.subr.mxu0 0.0
        %5264 = vmatpush1.msra.mxu0 0.0
        %5265 = vmatprep.subr.mxu0 0.0
        %5266 = vmatpush1.msra.mxu0 0.0
        %5267 = vmatprep.subr.mxu0 0.0
        %5268 = vmatpush1.msra.mxu0 0.0
        %5269 = vmatprep.subr.mxu0 0.0
        %5270 = vmatpush1.msra.mxu0 0.0
        %5271 = vmatprep.subr.mxu0 0.0
        %5272 = vmatpush1.msra.mxu0 0.0
        %5273 = vmatprep.subr.mxu0 0.0
        %5274 = vmatpush1.msra.mxu0 0.0
        %5275 = vmatprep.subr.mxu0 0.0
        %5276 = vmatpush1.msra.mxu0 0.0
        %5277 = vmatprep.subr.mxu0 0.0
        %5278 = vmatpush1.msra.mxu0 0.0
        %5279 = vmatprep.subr.mxu0 0.0
        %5280 = vmatpush1.msra.mxu0 0.0
        %5281 = vmatprep.subr.mxu0 0.0
        %5282 = vmatpush1.msra.mxu0 0.0
        %5283 = vmatprep.subr.mxu0 0.0
        %5284 = vmatpush1.msra.mxu0 0.0
        %5285 = vmatprep.subr.mxu0 0.0
        %5286 = vmatpush1.msra.mxu0 0.0
        %5287 = vmatprep.subr.mxu0 0.0
        %5288 = vmatpush1.msra.mxu0 0.0
        %5289 = vmatprep.subr.mxu0 0.0
        %5290 = vmatpush1.msra.mxu0 0.0
        %5291 = vmatprep.subr.mxu0 0.0
        %5292 = vmatpush1.msra.mxu0 0.0
        %5293 = vmatprep.subr.mxu0 0.0
        %5294 = vmatpush1.msra.mxu0 0.0
        %5295 = vmatprep.subr.mxu0 0.0
        %5296 = vmatpush1.msra.mxu0 0.0
        %5297 = vmatprep.subr.mxu0 0.0
        %5298 = vmatpush1.msra.mxu0 0.0
        %5299 = vmatprep.subr.mxu0 0.0
        %5300 = vmatpush1.msra.mxu0 0.0
        %5301 = vmatprep.subr.mxu0 0.0
        %5302 = vmatpush1.msra.mxu0 0.0
        %5303 = vmatprep.subr.mxu0 0.0
        %5304 = vmatpush1.msra.mxu0 0.0
        %5305 = vmatprep.subr.mxu0 0.0
        %5306 = vmatpush1.msra.mxu0 0.0
        %5307 = vmatprep.subr.mxu0 0.0
        %5308 = vmatpush1.msra.mxu0 0.0
        %5309 = vmatprep.subr.mxu0 0.0
        %5310 = vmatpush1.msra.mxu0 0.0
        %5311 = vmatprep.mubr.f32.mxu0 0.0
        %5312 = vmatmul.mubr.f32.gmra.mrb[0].mxu0 %v4962
        %v5313 = vpop.f32.mrb[0].mxu0
        %v5314 = vadd.f32 %v5089, %v5313
        %v5315 = vpop.f32.mrb[0].mxu0
        %5316 = vmatprep.mubr.f32.mxu0 0.0
        %5317 = vmatmul.mubr.f32.gmra.mrb[0].mxu0 %v4964
        %v5318 = vpop.f32.mrb[0].mxu0
        %v5319 = vadd.f32 %v5094, %v5318
        %v5320 = vpop.f32.mrb[0].mxu0
        %5321 = vmatprep.mubr.f32.mxu0 0.0
        %5322 = vmatmul.mubr.f32.gmra.mrb[0].mxu0 %v4966
        %v5323 = vpop.f32.mrb[0].mxu0
        %v5324 = vadd.f32 %v5099, %v5323
        %v5325 = vpop.f32.mrb[0].mxu0
        %5326 = vmatprep.mubr.f32.mxu0 0.0
        %5327 = vmatmul.mubr.f32.gmra.mrb[0].mxu0 %v4968
        %v5328 = vpop.f32.mrb[0].mxu0
        %v5329 = vadd.f32 %v5104, %v5328
        %v5330 = vpop.f32.mrb[0].mxu0
        %5331 = vmatprep.mubr.f32.mxu0 0.0
        %5332 = vmatmul.mubr.f32.gmra.mrb[0].mxu0 %v4970
        %v5333 = vpop.f32.mrb[0].mxu0
        %v5334 = vadd.f32 %v5109, %v5333
        %v5335 = vpop.f32.mrb[0].mxu0
        %5336 = vmatprep.mubr.f32.mxu0 0.0
        %5337 = vmatmul.mubr.f32.gmra.mrb[0].mxu0 %v4972
        %v5338 = vpop.f32.mrb[0].mxu0
        %v5339 = vadd.f32 %v5114, %v5338
        %v5340 = vpop.f32.mrb[0].mxu0
        %5341 = vmatprep.mubr.f32.mxu0 0.0
        %5342 = vmatmul.mubr.f32.gmra.mrb[0].mxu0 %v4974
        %v5343 = vpop.f32.mrb[0].mxu0
        %v5344 = vadd.f32 %v5119, %v5343
        %v5345 = vpop.f32.mrb[0].mxu0
        %5346 = vmatprep.mubr.f32.mxu0 0.0
        %5347 = vmatmul.mubr.f32.gmra.mrb[0].mxu0 %v4976
        %v5348 = vpop.f32.mrb[0].mxu0
        %v5349 = vadd.f32 %v5124, %v5348
        %v5350 = vpop.f32.mrb[0].mxu0
        %5351 = vmatprep.mubr.f32.mxu0 0.0
        %5352 = vmatmul.mubr.f32.gmra.mrb[0].mxu0 %v4978
        %v5353 = vpop.f32.mrb[0].mxu0
        %v5354 = vadd.f32 %v5129, %v5353
        %v5355 = vpop.f32.mrb[0].mxu0
        %5356 = vmatprep.mubr.f32.mxu0 0.0
        %5357 = vmatmul.mubr.f32.gmra.mrb[0].mxu0 %v4980
        %v5358 = vpop.f32.mrb[0].mxu0
        %v5359 = vadd.f32 %v5134, %v5358
        %v5360 = vpop.f32.mrb[0].mxu0
        %5361 = vmatprep.mubr.f32.mxu0 0.0
        %5362 = vmatmul.mubr.f32.gmra.mrb[0].mxu0 %v4982
        %v5363 = vpop.f32.mrb[0].mxu0
        %v5364 = vadd.f32 %v5139, %v5363
        %v5365 = vpop.f32.mrb[0].mxu0
        %5366 = vmatprep.mubr.f32.mxu0 0.0
        %5367 = vmatmul.mubr.f32.gmra.mrb[0].mxu0 %v4984
        %v5368 = vpop.f32.mrb[0].mxu0
        %v5369 = vadd.f32 %v5144, %v5368
        %v5370 = vpop.f32.mrb[0].mxu0
        %5371 = vmatprep.mubr.f32.mxu0 0.0
        %5372 = vmatmul.mubr.f32.gmra.mrb[0].mxu0 %v4986
        %v5373 = vpop.f32.mrb[0].mxu0
        %v5374 = vadd.f32 %v5149, %v5373
        %v5375 = vpop.f32.mrb[0].mxu0
        %5376 = vmatprep.mubr.f32.mxu0 0.0
        %5377 = vmatmul.mubr.f32.gmra.mrb[0].mxu0 %v4988
        %v5378 = vpop.f32.mrb[0].mxu0
        %v5379 = vadd.f32 %v5154, %v5378
        %v5380 = vpop.f32.mrb[0].mxu0
        %5381 = vmatprep.mubr.f32.mxu0 0.0
        %5382 = vmatmul.mubr.f32.gmra.mrb[0].mxu0 %v4990
        %v5383 = vpop.f32.mrb[0].mxu0
        %v5384 = vadd.f32 %v5159, %v5383
        %v5385 = vpop.f32.mrb[0].mxu0
        %5386 = vmatprep.mubr.f32.mxu0 0.0
        %5387 = vmatmul.mubr.f32.gmra.mrb[0].mxu0 %v4992
        %v5388 = vpop.f32.mrb[0].mxu0
        %v5389 = vadd.f32 %v5164, %v5388
        %v5390 = vpop.f32.mrb[0].mxu0
        %5391 = vmatprep.mubr.f32.mxu0 0.0
        %5392 = vmatmul.mubr.f32.gmra.mrb[0].mxu0 %v4994
        %v5393 = vpop.f32.mrb[0].mxu0
        %v5394 = vadd.f32 %v5169, %v5393
        %v5395 = vpop.f32.mrb[0].mxu0
        %5396 = vmatprep.mubr.f32.mxu0 0.0
        %5397 = vmatmul.mubr.f32.gmra.mrb[0].mxu0 %v4996
        %v5398 = vpop.f32.mrb[0].mxu0
        %v5399 = vadd.f32 %v5174, %v5398
        %v5400 = vpop.f32.mrb[0].mxu0
        %5401 = vmatprep.mubr.f32.mxu0 0.0
        %5402 = vmatmul.mubr.f32.gmra.mrb[0].mxu0 %v4998
        %v5403 = vpop.f32.mrb[0].mxu0
        %v5404 = vadd.f32 %v5179, %v5403
        %v5405 = vpop.f32.mrb[0].mxu0
        %5406 = vmatprep.mubr.f32.mxu0 0.0
        %5407 = vmatmul.mubr.f32.gmra.mrb[0].mxu0 %v5000
        %v5408 = vpop.f32.mrb[0].mxu0
        %v5409 = vadd.f32 %v5184, %v5408
        %v5410 = vpop.f32.mrb[0].mxu0
        %5411 = vmatprep.mubr.f32.mxu0 0.0
        %5412 = vmatmul.mubr.f32.gmra.mrb[0].mxu0 %v5002
        %v5413 = vpop.f32.mrb[0].mxu0
        %v5414 = vadd.f32 %v5189, %v5413
        %v5415 = vpop.f32.mrb[0].mxu0
        %5416 = vmatprep.mubr.f32.mxu0 0.0
        %5417 = vmatmul.mubr.f32.gmra.mrb[0].mxu0 %v5004
        %v5418 = vpop.f32.mrb[0].mxu0
        %v5419 = vadd.f32 %v5194, %v5418
        %v5420 = vpop.f32.mrb[0].mxu0
        %5421 = vmatprep.mubr.f32.mxu0 0.0
        %5422 = vmatmul.mubr.f32.gmra.mrb[0].mxu0 %v5006
        %v5423 = vpop.f32.mrb[0].mxu0
        %v5424 = vadd.f32 %v5199, %v5423
        %v5425 = vpop.f32.mrb[0].mxu0
        %5426 = vmatprep.mubr.f32.mxu0 0.0
        %5427 = vmatmul.mubr.f32.gmra.mrb[0].mxu0 %v5008
        %v5428 = vpop.f32.mrb[0].mxu0
        %v5429 = vadd.f32 %v5204, %v5428
        %v5430 = vpop.f32.mrb[0].mxu0
        %5431 = vmatprep.mubr.f32.mxu0 0.0
        %5432 = vmatmul.mubr.f32.gmra.mrb[0].mxu0 %v5010
        %v5433 = vpop.f32.mrb[0].mxu0
        %v5434 = vadd.f32 %v5209, %v5433
        %v5435 = vpop.f32.mrb[0].mxu0
        %5436 = vmatprep.mubr.f32.mxu0 0.0
        %5437 = vmatmul.mubr.f32.gmra.mrb[0].mxu0 %v5012
        %v5438 = vpop.f32.mrb[0].mxu0
        %v5439 = vadd.f32 %v5214, %v5438
        %v5440 = vpop.f32.mrb[0].mxu0
        %5441 = vmatprep.mubr.f32.mxu0 0.0
        %5442 = vmatmul.mubr.f32.gmra.mrb[0].mxu0 %v5014
        %v5443 = vpop.f32.mrb[0].mxu0
        %v5444 = vadd.f32 %v5219, %v5443
        %v5445 = vpop.f32.mrb[0].mxu0
        %5446 = vmatprep.mubr.f32.mxu0 0.0
        %5447 = vmatmul.mubr.f32.gmra.mrb[0].mxu0 %v5016
        %v5448 = vpop.f32.mrb[0].mxu0
        %v5449 = vadd.f32 %v5224, %v5448
        %v5450 = vpop.f32.mrb[0].mxu0
        %5451 = vmatprep.mubr.f32.mxu0 0.0
        %5452 = vmatmul.mubr.f32.gmra.mrb[0].mxu0 %v5018
        %v5453 = vpop.f32.mrb[0].mxu0
        %v5454 = vadd.f32 %v5229, %v5453
        %v5455 = vpop.f32.mrb[0].mxu0
        %5456 = vmatprep.mubr.f32.mxu0 0.0
        %5457 = vmatmul.mubr.f32.gmra.mrb[0].mxu0 %v5020
        %v5458 = vpop.f32.mrb[0].mxu0
        %v5459 = vadd.f32 %v5234, %v5458
        %v5460 = vpop.f32.mrb[0].mxu0
        %5461 = vmatprep.mubr.f32.mxu0 0.0
        %5462 = vmatmul.mubr.f32.gmra.mrb[0].mxu0 %v2837
        %v5463 = vpop.f32.mrb[0].mxu0
        %v5464 = vadd.f32 %v5239, %v5463
        %v5465 = vpop.f32.mrb[0].mxu0
        %5466 = vmatprep.mubr.f32.mxu0 0.0
        %5467 = vmatmul.mubr.f32.gmra.mrb[0].mxu0 %v2837
        %v5468 = vpop.f32.mrb[0].mxu0
        %v5469 = vadd.f32 %v5244, %v5468
        %v5470 = vpop.f32.mrb[0].mxu0
        %5471 = vdwg.mxu0
        %v5472 = vcombine.low %v1605, %v1609
        %v5473 = vcombine.low %v1613, %v1617
        %v5475 = vunpack.c.l.s4 1983009808
        %v5476 = vunpack.c.0.s8 %v5475
        %v5477 = vlaneseq
        %v5478 = vshrl.u32 %v5477, 7
        %v5479 = vsub.s32 %v5476, %v5478
        %v5480 = vrot.slane %v5472, %v5479
        %v5482 = vunpack.c.l.s4 1983009808
        %v5483 = vunpack.c.0.s8 %v5482
        %v5484 = vlaneseq
        %v5485 = vshrl.u32 %v5484, 7
        %v5486 = vsub.s32 %v5483, %v5485
        %v5487 = vrot.slane %v5473, %v5486
        %v5488 = vcombine.low %v5480, %v5487
        %v5489 = vcombine.low %v1621, %v1625
        %v5490 = vcombine.low %v1629, %v1633
        %v5492 = vunpack.c.l.s4 1983009808
        %v5493 = vunpack.c.0.s8 %v5492
        %v5494 = vlaneseq
        %v5495 = vshrl.u32 %v5494, 7
        %v5496 = vsub.s32 %v5493, %v5495
        %v5497 = vrot.slane %v5489, %v5496
        %v5499 = vunpack.c.l.s4 1983009808
        %v5500 = vunpack.c.0.s8 %v5499
        %v5501 = vlaneseq
        %v5502 = vshrl.u32 %v5501, 7
        %v5503 = vsub.s32 %v5500, %v5502
        %v5504 = vrot.slane %v5490, %v5503
        %v5505 = vcombine.low %v5497, %v5504
        %v5506 = vcombine.low %v1637, %v1641
        %v5507 = vcombine.low %v1645, %v1649
        %v5509 = vunpack.c.l.s4 1983009808
        %v5510 = vunpack.c.0.s8 %v5509
        %v5511 = vlaneseq
        %v5512 = vshrl.u32 %v5511, 7
        %v5513 = vsub.s32 %v5510, %v5512
        %v5514 = vrot.slane %v5506, %v5513
        %v5516 = vunpack.c.l.s4 1983009808
        %v5517 = vunpack.c.0.s8 %v5516
        %v5518 = vlaneseq
        %v5519 = vshrl.u32 %v5518, 7
        %v5520 = vsub.s32 %v5517, %v5519
        %v5521 = vrot.slane %v5507, %v5520
        %v5522 = vcombine.low %v5514, %v5521
        %v5523 = vcombine.low %v1653, %v1657
        %v5524 = vcombine.low %v1661, %v1665
        %v5526 = vunpack.c.l.s4 1983009808
        %v5527 = vunpack.c.0.s8 %v5526
        %v5528 = vlaneseq
        %v5529 = vshrl.u32 %v5528, 7
        %v5530 = vsub.s32 %v5527, %v5529
        %v5531 = vrot.slane %v5523, %v5530
        %v5533 = vunpack.c.l.s4 1983009808
        %v5534 = vunpack.c.0.s8 %v5533
        %v5535 = vlaneseq
        %v5536 = vshrl.u32 %v5535, 7
        %v5537 = vsub.s32 %v5534, %v5536
        %v5538 = vrot.slane %v5524, %v5537
        %v5539 = vcombine.low %v5531, %v5538
        %v5540 = vcombine.low %v1669, %v1673
        %v5541 = vcombine.low %v1677, %v1681
        %v5543 = vunpack.c.l.s4 1983009808
        %v5544 = vunpack.c.0.s8 %v5543
        %v5545 = vlaneseq
        %v5546 = vshrl.u32 %v5545, 7
        %v5547 = vsub.s32 %v5544, %v5546
        %v5548 = vrot.slane %v5540, %v5547
        %v5550 = vunpack.c.l.s4 1983009808
        %v5551 = vunpack.c.0.s8 %v5550
        %v5552 = vlaneseq
        %v5553 = vshrl.u32 %v5552, 7
        %v5554 = vsub.s32 %v5551, %v5553
        %v5555 = vrot.slane %v5541, %v5554
        %v5556 = vcombine.low %v5548, %v5555
        %v5557 = vcombine.low %v1685, %v1689
        %v5558 = vcombine.low %v1693, %v1697
        %v5560 = vunpack.c.l.s4 1983009808
        %v5561 = vunpack.c.0.s8 %v5560
        %v5562 = vlaneseq
        %v5563 = vshrl.u32 %v5562, 7
        %v5564 = vsub.s32 %v5561, %v5563
        %v5565 = vrot.slane %v5557, %v5564
        %v5567 = vunpack.c.l.s4 1983009808
        %v5568 = vunpack.c.0.s8 %v5567
        %v5569 = vlaneseq
        %v5570 = vshrl.u32 %v5569, 7
        %v5571 = vsub.s32 %v5568, %v5570
        %v5572 = vrot.slane %v5558, %v5571
        %v5573 = vcombine.low %v5565, %v5572
        %v5574 = vcombine.low %v1701, %v1705
        %v5575 = vcombine.low %v1709, %v1713
        %v5577 = vunpack.c.l.s4 1983009808
        %v5578 = vunpack.c.0.s8 %v5577
        %v5579 = vlaneseq
        %v5580 = vshrl.u32 %v5579, 7
        %v5581 = vsub.s32 %v5578, %v5580
        %v5582 = vrot.slane %v5574, %v5581
        %v5584 = vunpack.c.l.s4 1983009808
        %v5585 = vunpack.c.0.s8 %v5584
        %v5586 = vlaneseq
        %v5587 = vshrl.u32 %v5586, 7
        %v5588 = vsub.s32 %v5585, %v5587
        %v5589 = vrot.slane %v5575, %v5588
        %v5590 = vcombine.low %v5582, %v5589
        %v5591 = vcombine.low %v1717, %v1721
        %v5592 = vcombine.low %v1725, %v1729
        %v5594 = vunpack.c.l.s4 1983009808
        %v5595 = vunpack.c.0.s8 %v5594
        %v5596 = vlaneseq
        %v5597 = vshrl.u32 %v5596, 7
        %v5598 = vsub.s32 %v5595, %v5597
        %v5599 = vrot.slane %v5591, %v5598
        %v5601 = vunpack.c.l.s4 1983009808
        %v5602 = vunpack.c.0.s8 %v5601
        %v5603 = vlaneseq
        %v5604 = vshrl.u32 %v5603, 7
        %v5605 = vsub.s32 %v5602, %v5604
        %v5606 = vrot.slane %v5592, %v5605
        %v5607 = vcombine.low %v5599, %v5606
        %v5608 = vcombine.low %v1733, %v1737
        %v5609 = vcombine.low %v1741, %v1745
        %v5611 = vunpack.c.l.s4 1983009808
        %v5612 = vunpack.c.0.s8 %v5611
        %v5613 = vlaneseq
        %v5614 = vshrl.u32 %v5613, 7
        %v5615 = vsub.s32 %v5612, %v5614
        %v5616 = vrot.slane %v5608, %v5615
        %v5618 = vunpack.c.l.s4 1983009808
        %v5619 = vunpack.c.0.s8 %v5618
        %v5620 = vlaneseq
        %v5621 = vshrl.u32 %v5620, 7
        %v5622 = vsub.s32 %v5619, %v5621
        %v5623 = vrot.slane %v5609, %v5622
        %v5624 = vcombine.low %v5616, %v5623
        %v5625 = vcombine.low %v1749, %v1753
        %v5626 = vcombine.low %v1757, %v1761
        %v5628 = vunpack.c.l.s4 1983009808
        %v5629 = vunpack.c.0.s8 %v5628
        %v5630 = vlaneseq
        %v5631 = vshrl.u32 %v5630, 7
        %v5632 = vsub.s32 %v5629, %v5631
        %v5633 = vrot.slane %v5625, %v5632
        %v5635 = vunpack.c.l.s4 1983009808
        %v5636 = vunpack.c.0.s8 %v5635
        %v5637 = vlaneseq
        %v5638 = vshrl.u32 %v5637, 7
        %v5639 = vsub.s32 %v5636, %v5638
        %v5640 = vrot.slane %v5626, %v5639
        %v5641 = vcombine.low %v5633, %v5640
        %v5642 = vcombine.low %v1765, %v1769
        %v5643 = vcombine.low %v1773, %v1777
        %v5645 = vunpack.c.l.s4 1983009808
        %v5646 = vunpack.c.0.s8 %v5645
        %v5647 = vlaneseq
        %v5648 = vshrl.u32 %v5647, 7
        %v5649 = vsub.s32 %v5646, %v5648
        %v5650 = vrot.slane %v5642, %v5649
        %v5652 = vunpack.c.l.s4 1983009808
        %v5653 = vunpack.c.0.s8 %v5652
        %v5654 = vlaneseq
        %v5655 = vshrl.u32 %v5654, 7
        %v5656 = vsub.s32 %v5653, %v5655
        %v5657 = vrot.slane %v5643, %v5656
        %v5658 = vcombine.low %v5650, %v5657
        %v5659 = vcombine.low %v1781, %v1785
        %v5660 = vcombine.low %v1789, %v1793
        %v5662 = vunpack.c.l.s4 1983009808
        %v5663 = vunpack.c.0.s8 %v5662
        %v5664 = vlaneseq
        %v5665 = vshrl.u32 %v5664, 7
        %v5666 = vsub.s32 %v5663, %v5665
        %v5667 = vrot.slane %v5659, %v5666
        %v5669 = vunpack.c.l.s4 1983009808
        %v5670 = vunpack.c.0.s8 %v5669
        %v5671 = vlaneseq
        %v5672 = vshrl.u32 %v5671, 7
        %v5673 = vsub.s32 %v5670, %v5672
        %v5674 = vrot.slane %v5660, %v5673
        %v5675 = vcombine.low %v5667, %v5674
        %v5676 = vcombine.low %v1797, %v1801
        %v5677 = vcombine.low %v1805, %v1809
        %v5679 = vunpack.c.l.s4 1983009808
        %v5680 = vunpack.c.0.s8 %v5679
        %v5681 = vlaneseq
        %v5682 = vshrl.u32 %v5681, 7
        %v5683 = vsub.s32 %v5680, %v5682
        %v5684 = vrot.slane %v5676, %v5683
        %v5686 = vunpack.c.l.s4 1983009808
        %v5687 = vunpack.c.0.s8 %v5686
        %v5688 = vlaneseq
        %v5689 = vshrl.u32 %v5688, 7
        %v5690 = vsub.s32 %v5687, %v5689
        %v5691 = vrot.slane %v5677, %v5690
        %v5692 = vcombine.low %v5684, %v5691
        %v5693 = vcombine.low %v1813, %v1817
        %v5694 = vcombine.low %v1821, %v1825
        %v5696 = vunpack.c.l.s4 1983009808
        %v5697 = vunpack.c.0.s8 %v5696
        %v5698 = vlaneseq
        %v5699 = vshrl.u32 %v5698, 7
        %v5700 = vsub.s32 %v5697, %v5699
        %v5701 = vrot.slane %v5693, %v5700
        %v5703 = vunpack.c.l.s4 1983009808
        %v5704 = vunpack.c.0.s8 %v5703
        %v5705 = vlaneseq
        %v5706 = vshrl.u32 %v5705, 7
        %v5707 = vsub.s32 %v5704, %v5706
        %v5708 = vrot.slane %v5694, %v5707
        %v5709 = vcombine.low %v5701, %v5708
        %v5710 = vcombine.low %v1829, %v1833
        %v5711 = vcombine.low %v1837, %v1841
        %v5713 = vunpack.c.l.s4 1983009808
        %v5714 = vunpack.c.0.s8 %v5713
        %v5715 = vlaneseq
        %v5716 = vshrl.u32 %v5715, 7
        %v5717 = vsub.s32 %v5714, %v5716
        %v5718 = vrot.slane %v5710, %v5717
        %v5720 = vunpack.c.l.s4 1983009808
        %v5721 = vunpack.c.0.s8 %v5720
        %v5722 = vlaneseq
        %v5723 = vshrl.u32 %v5722, 7
        %v5724 = vsub.s32 %v5721, %v5723
        %v5725 = vrot.slane %v5711, %v5724
        %v5726 = vcombine.low %v5718, %v5725
        %v5727 = vcombine.low %v1845, %v1849
        %v5728 = vcombine.low %v1853, %v1857
        %v5730 = vunpack.c.l.s4 1983009808
        %v5731 = vunpack.c.0.s8 %v5730
        %v5732 = vlaneseq
        %v5733 = vshrl.u32 %v5732, 7
        %v5734 = vsub.s32 %v5731, %v5733
        %v5735 = vrot.slane %v5727, %v5734
        %v5737 = vunpack.c.l.s4 1983009808
        %v5738 = vunpack.c.0.s8 %v5737
        %v5739 = vlaneseq
        %v5740 = vshrl.u32 %v5739, 7
        %v5741 = vsub.s32 %v5738, %v5740
        %v5742 = vrot.slane %v5728, %v5741
        %v5743 = vcombine.low %v5735, %v5742
        %v5760 = vadd.f32 %v5314, %v5488
        %v5761 = vadd.f32 %v5319, %v5505
        %v5762 = vadd.f32 %v5324, %v5488
        %v5763 = vadd.f32 %v5329, %v5505
        %v5764 = vadd.f32 %v5334, %v5522
        %v5765 = vadd.f32 %v5339, %v5539
        %v5766 = vadd.f32 %v5344, %v5522
        %v5767 = vadd.f32 %v5349, %v5539
        %v5768 = vadd.f32 %v5354, %v5556
        %v5769 = vadd.f32 %v5359, %v5573
        %v5770 = vadd.f32 %v5364, %v5556
        %v5771 = vadd.f32 %v5369, %v5573
        %v5772 = vadd.f32 %v5374, %v5590
        %v5773 = vadd.f32 %v5379, %v5607
        %v5774 = vadd.f32 %v5384, %v5590
        %v5775 = vadd.f32 %v5389, %v5607
        %v5776 = vadd.f32 %v5394, %v5624
        %v5777 = vadd.f32 %v5399, %v5641
        %v5778 = vadd.f32 %v5404, %v5624
        %v5779 = vadd.f32 %v5409, %v5641
        %v5780 = vadd.f32 %v5414, %v5658
        %v5781 = vadd.f32 %v5419, %v5675
        %v5782 = vadd.f32 %v5424, %v5658
        %v5783 = vadd.f32 %v5429, %v5675
        %v5784 = vadd.f32 %v5434, %v5692
        %v5785 = vadd.f32 %v5439, %v5709
        %v5786 = vadd.f32 %v5444, %v5692
        %v5787 = vadd.f32 %v5449, %v5709
        %v5788 = vadd.f32 %v5454, %v5726
        %v5789 = vadd.f32 %v5459, %v5743
        %v5790 = vadd.f32 %v5464, %v5726
        %v5791 = vadd.f32 %v5469, %v5743
        %5792 = vxpose.xlu0.b32.start [1/16] %v5760, 128
        %5793 = vxpose.xlu0.b32.cont [2/16] %v5761, 128
        %5794 = vxpose.xlu0.b32.cont [3/16] %v5762, 128
        %5795 = vxpose.xlu0.b32.cont [4/16] %v5763, 128
        %5796 = vxpose.xlu0.b32.cont [5/16] %v5764, 128
        %5797 = vxpose.xlu0.b32.cont [6/16] %v5765, 128
        %5798 = vxpose.xlu0.b32.cont [7/16] %v5766, 128
        %5799 = vxpose.xlu0.b32.cont [8/16] %v5767, 128
        %5800 = vxpose.xlu0.b32.cont [9/16] %v5768, 128
        %5801 = vxpose.xlu0.b32.cont [10/16] %v5769, 128
        %5802 = vxpose.xlu0.b32.cont [11/16] %v5770, 128
        %5803 = vxpose.xlu0.b32.cont [12/16] %v5771, 128
        %5804 = vxpose.xlu0.b32.cont [13/16] %v5772, 128
        %5805 = vxpose.xlu0.b32.cont [14/16] %v5773, 128
        %5806 = vxpose.xlu0.b32.cont [15/16] %v5774, 128
        %5807 = vxpose.xlu0.b32.end [16/16] %v5775, 128
        %v5808 = vpop.trf.xlu0
        %v5809 = vpop.trf.xlu0
        %v5810 = vpop.trf.xlu0
        %v5811 = vpop.trf.xlu0
        %v5812 = vpop.trf.xlu0
        %v5813 = vpop.trf.xlu0
        %v5814 = vpop.trf.xlu0
        %v5815 = vpop.trf.xlu0
        %v5816 = vpop.trf.xlu0
        %v5817 = vpop.trf.xlu0
        %v5818 = vpop.trf.xlu0
        %v5819 = vpop.trf.xlu0
        %v5820 = vpop.trf.xlu0
        %v5821 = vpop.trf.xlu0
        %v5822 = vpop.trf.xlu0
        %v5823 = vpop.trf.xlu0
        %5824 = vxpose.xlu0.b32.start [1/16] %v5776, 128
        %5825 = vxpose.xlu0.b32.cont [2/16] %v5777, 128
        %5826 = vxpose.xlu0.b32.cont [3/16] %v5778, 128
        %5827 = vxpose.xlu0.b32.cont [4/16] %v5779, 128
        %5828 = vxpose.xlu0.b32.cont [5/16] %v5780, 128
        %5829 = vxpose.xlu0.b32.cont [6/16] %v5781, 128
        %5830 = vxpose.xlu0.b32.cont [7/16] %v5782, 128
        %5831 = vxpose.xlu0.b32.cont [8/16] %v5783, 128
        %5832 = vxpose.xlu0.b32.cont [9/16] %v5784, 128
        %5833 = vxpose.xlu0.b32.cont [10/16] %v5785, 128
        %5834 = vxpose.xlu0.b32.cont [11/16] %v5786, 128
        %5835 = vxpose.xlu0.b32.cont [12/16] %v5787, 128
        %5836 = vxpose.xlu0.b32.cont [13/16] %v5788, 128
        %5837 = vxpose.xlu0.b32.cont [14/16] %v5789, 128
        %5838 = vxpose.xlu0.b32.cont [15/16] %v5790, 128
        %5839 = vxpose.xlu0.b32.end [16/16] %v5791, 128
        %v5840 = vpop.trf.xlu0
        %v5841 = vpop.trf.xlu0
        %v5842 = vpop.trf.xlu0
        %v5843 = vpop.trf.xlu0
        %v5844 = vpop.trf.xlu0
        %v5845 = vpop.trf.xlu0
        %v5846 = vpop.trf.xlu0
        %v5847 = vpop.trf.xlu0
        %v5848 = vpop.trf.xlu0
        %v5849 = vpop.trf.xlu0
        %v5850 = vpop.trf.xlu0
        %v5851 = vpop.trf.xlu0
        %v5852 = vpop.trf.xlu0
        %v5853 = vpop.trf.xlu0
        %v5854 = vpop.trf.xlu0
        %v5855 = vpop.trf.xlu0
        %5856 = vst [vmem:[%s361] sm:$0xff] %v5808
        %5857 = vst [vmem:[%s361 + $0x8] sm:$0xff] %v5840
        %5858 = vst [vmem:[%s361 + $0x10] sm:$0xff] %v5809
        %5859 = vst [vmem:[%s361 + $0x18] sm:$0xff] %v5841
        %5860 = vst [vmem:[%s361 + $0x20] sm:$0xff] %v5810
        %5861 = vst [vmem:[%s361 + $0x28] sm:$0xff] %v5842
        %5862 = vst [vmem:[%s361 + $0x30] sm:$0xff] %v5811
        %5863 = vst [vmem:[%s361 + $0x38] sm:$0xff] %v5843
        %p5864 = scmp.lt.s32.totalorder %s21, 1
        %s5865 = scalar_select %p5864, %s21, 1
        %s5866 = smul.addr %s5865, 8
        %s5867 = smul.addr %s5866, 8
        %s5868 = scalar_lea.vmem %s9, %s5867
        // Predicated region
        $region61: #{upsample_res_forward.1} parent=55 // pred_check
          %p5869 = pneg %p238
        $region62: #{upsample_res_forward.1} parent=55 // pred_check_branch
          %5871 = sbr.rel (%p5869) target = $region64
        $region63: #{upsample_res_forward.1} parent=55 // pred_region
          _
        $region64: #{upsample_res_forward.1} parent=55 // pred_fallthru
          _
      $region56: #{upsample_res_forward.1} parent=5 // pred_fallthru
        _
      %p5872 = scmp.le.s32.totalorder 2, %s16
      // Predicated region
      $region65: #{upsample_res_forward.1} parent=5 // pred_check
        %p5873 = pneg %p5872
      $region66: #{upsample_res_forward.1} parent=5 // pred_check_branch
        %5875 = sbr.rel (%p5873) target = $region68
      $region67: #{upsample_res_forward.1} parent=5 // pred_region
        %s5876 = ssub.s32 %s16, 2
        // Predicated region
        $region69: #{upsample_res_forward.1} parent=67 // pred_check
          %p5877 = pneg %p244
        $region70: #{upsample_res_forward.1} parent=67 // pred_check_branch
          %5879 = sbr.rel (%p5877) target = $region72
        $region71: #{upsample_res_forward.1} parent=67 // pred_region
          %p5880 = scmp.lt.s32.totalorder %s22, 1
          %s5881 = scalar_select %p5880, %s22, 1
          %s5882 = smul.addr %s5881, 8
          %s5883 = smul.addr %s5882, 8
          %s5884 = scalar_lea.vmem %s9, %s5883
        $region72: #{upsample_res_forward.1} parent=67 // pred_fallthru
          _
      $region68: #{upsample_res_forward.1} parent=5 // pred_fallthru
        _
    $region6: #{upsample_res_forward.1} parent=1 // loop_footer
      %s20 = sadd.s32 1, %s16
    $region7: #{upsample_res_forward.1} parent=1 // loop_footer_branch
      %15 = sbr.rel target = $region3
    $region8: #{upsample_res_forward.1} parent=1 // loop_exit
      _
    %5885 = vsyncpa [#allocation3], 1
    %s5886 = scalar_lea.sflag [#allocation3], 1
    %5887 = vsyncpa %s5886, 1

</llo_original>
